<compile_context>
chip_gen: v7x
topology: tpu7x:2x2x1
jax: 0.10.0
libtpu: 0.0.40
codegen_flags: <defaults>
</compile_context>

<pallas_src>
import jax
import jax.numpy as jnp
from jax.experimental import pallas as pl
from jax.experimental.pallas import tpu as pltpu


# Canonical leaf index inside the (81, s, 128) layout.
#   P: box index perpendicular to the line   (h: box-row,  v: box-col)
#   p: the 3 parallel lines inside the box   (h: in-box row, v: in-box col)
#   Q: the 3 boxes along the line            (h: box-col,  v: box-row)
#   q: the 3 cells of the line inside a box  (h: in-box col, v: in-box row)
def _leaf(P, p, Q, q):
    return ((P * 3 + p) * 3 + Q) * 3 + q


def _make_kernel(s_blk: int, s_sub: int):
    """Kernel over one (81, s_blk, 128) block.  Compute is strip-mined into
    s_sub-sublane slices so vreg pressure stays ~16 regardless of s_blk."""
    n_sub = s_blk // s_sub

    def kernel(x_ref, o_ref):
        cdt = x_ref.dtype          # compute in the I/O dtype (max/min exact)
        odt = o_ref.dtype

        def strip(sl):
            for P in range(3):     # 3 independent box rows/cols, fully unrolled
                # pool_line: max over the 3 cells of each in-box line segment.
                lm = [[None] * 3 for _ in range(3)]
                for p in range(3):
                    for Q in range(3):
                        a = x_ref[_leaf(P, p, Q, 0), sl, :]
                        b = x_ref[_leaf(P, p, Q, 1), sl, :]
                        c = x_ref[_leaf(P, p, Q, 2), sl, :]
                        lm[p][Q] = jnp.maximum(jnp.maximum(a, b), c)

                # select_sum_opposite (depthwise conv, w=-1, b=2) + relu.
                # Keep the 3-way accumulation in f32 (exact for f32 I/O,
                # 1-ulp-class for bf16 I/O).
                opp = []
                for Q in range(3):
                    s = (lm[0][Q].astype(jnp.float32)
                         + lm[1][Q].astype(jnp.float32)
                         + lm[2][Q].astype(jnp.float32))
                    opp.append(jnp.maximum(2.0 - s, 0.0).astype(cdt))

                # upsample_opposite + NNAnd -> cleaned line mask in [0, 1].
                l2 = [[jnp.clip(jnp.minimum(lm[p][Q], opp[Q]), 0.0, 1.0)
                       for Q in range(3)] for p in range(3)]

                # pool_opposite: max over the 3 boxes along the line (+expand).
                ng = [jnp.maximum(jnp.maximum(l2[p][0], l2[p][1]), l2[p][2])
                      for p in range(3)]

                for p in range(3):
                    for Q in range(3):
                        # negate = NNAnd(ng, NNNot(l2)); both operands are in
                        # [0, 1] so its clamp is a provable no-op.
                        # keep = NNNot(negate).
                        keep = 1.0 - jnp.minimum(ng[p], 1.0 - l2[p][Q])
                        for q in range(3):
                            xq = x_ref[_leaf(P, p, Q, q), sl, :]
                            # NNAnd(mask, keep): keep <= 1, so only the lower
                            # clamp is needed.  Full-width unmasked store.
                            o_ref[_leaf(P, p, Q, q), sl, :] = jnp.maximum(
                                jnp.minimum(xq, keep), 0.0).astype(odt)

        if n_sub == 1:
            strip(slice(None))
        else:
            @pl.loop(0, n_sub)
            def _(j):
                start = pl.multiple_of(j * s_sub, s_sub)
                strip(pl.ds(start, s_sub))

    return kernel


# Forward/backward permutations of (n, c, A_box, A_in, B_box, B_in) -> canonical
# (P, p, Q, q, n, c).  'v' is just a different permutation of the SAME single
# relayout, so it costs no extra HBM passes compared to 'h'.
_PERM_FWD = {"h": (2, 3, 4, 5, 0, 1), "v": (4, 5, 2, 3, 0, 1)}
_PERM_BWD = {"h": (4, 5, 0, 1, 2, 3), "v": (4, 5, 2, 3, 0, 1)}


def sudoku_digits_in_one_line_at_box(mask: jax.Array, type: str = "h") -> jax.Array:
    """Pallas implementation of SudokuDigitsInOneLineAtBox.forward."""
    assert type in ("h", "v")
    n, c, h, w = mask.shape
    assert (c, h, w) == (9, 9, 9)

    # Keep narrow float dtypes resident (and computed) as-is; others -> f32.
    if mask.dtype in (jnp.dtype(jnp.float32), jnp.dtype(jnp.bfloat16)):
        io_dtype = mask.dtype
    else:
        io_dtype = jnp.dtype(jnp.float32)

    # Sublane packing unit / compute strip / per-block cap.  s_cap keeps the
    # in+out double-buffered footprint ~10.6 MiB -> fits default scoped VMEM
    # on v5e (16 MiB), v6e/v7x (32 MiB).
    if io_dtype == jnp.dtype(jnp.bfloat16):
        s_unit, s_sub, s_cap = 16, 16, 128
    else:
        s_unit, s_sub, s_cap = 8, 8, 64

    lanes = n * 9                              # batch*digit on the 128-lane axis
    sub = pl.cdiv(lanes, 128)                  # sublanes actually needed
    s_tot = ((sub + s_unit - 1) // s_unit) * s_unit   # pad only to packing unit
    lanes_pad = s_tot * 128

    # Block size: cap for VMEM, balance blocks, and prefer >=2 grid steps
    # (pipelining + v7x megacore) when the array is big enough.  The last
    # block may be partial — Pallas masks its writeback.
    if s_tot > s_cap:
        n_steps = pl.cdiv(s_tot, s_cap)
        s_blk = ((pl.cdiv(s_tot, n_steps) + s_unit - 1) // s_unit) * s_unit
    elif s_tot >= 2 * s_unit:
        s_blk = ((s_tot // 2) // s_unit) * s_unit
    else:
        s_blk = s_tot
    grid = (pl.cdiv(s_tot, s_blk),)

    # Relayout: (n,9,9,9) -> (n,9,A_box,A_in,B_box,B_in) -> canonical
    # (P,p,Q,q,n,9) -> lane-dense (81, s_tot, 128).  Padding lanes are zeros,
    # computed independently, then sliced off.
    x6 = mask.astype(io_dtype).reshape(n, 9, 3, 3, 3, 3)
    xc = jnp.transpose(x6, _PERM_FWD[type]).reshape(81, lanes)
    xc = jnp.pad(xc, ((0, 0), (0, lanes_pad - lanes)))
    xc = xc.reshape(81, s_tot, 128)

    elems = 81 * lanes_pad
    cost = pl.CostEstimate(
        flops=10 * elems,
        transcendentals=0,
        bytes_accessed=2 * elems * jnp.dtype(io_dtype).itemsize,
    )

    out = pl.pallas_call(
        _make_kernel(s_blk, s_sub),
        out_shape=jax.ShapeDtypeStruct((81, s_tot, 128), io_dtype),
        grid=grid,
        in_specs=[pl.BlockSpec((81, s_blk, 128), lambda i: (0, i, 0))],
        out_specs=pl.BlockSpec((81, s_blk, 128), lambda i: (0, i, 0)),
        compiler_params=pltpu.CompilerParams(
            dimension_semantics=("parallel",),
            allow_input_fusion=[True],
        ),
        cost_estimate=cost,
    )(xc)

    # Undo the relayout.
    out = out.reshape(81, lanes_pad)[:, :lanes].reshape(3, 3, 3, 3, n, 9)
    out = jnp.transpose(out, _PERM_BWD[type]).reshape(n, 9, 9, 9)
    return out


# -------- pure-JAX reference (mirrors the PyTorch module exactly) -----------
def _ref(mask, type):
    x = mask.astype(jnp.float32)
    if type == "v":
        x = jnp.transpose(x, (0, 1, 3, 2))
    n = x.shape[0]
    x6 = x.reshape(n, 9, 3, 3, 3, 3)                       # n, c, by, hi, bx, wi
    lm = x6.max(axis=5)                                    # pool_line
    opp = jnp.maximum(2.0 - lm.sum(axis=3), 0.0)           # conv(w=-1, b=2) + relu
    l2 = jnp.clip(jnp.minimum(lm, opp[:, :, :, None, :]), 0.0, 1.0)
    ng = l2.max(axis=4, keepdims=True)                     # pool_opposite + expand
    neg = jnp.clip(jnp.minimum(ng, 1.0 - l2), 0.0, 1.0)
    out = jnp.clip(jnp.minimum(x6, 1.0 - neg[..., None]), 0.0, 1.0)
    out = out.reshape(n, 9, 9, 9)
    if type == "v":
        out = jnp.transpose(out, (0, 1, 3, 2))
    return out


if __name__ == "__main__":
    key = jax.random.PRNGKey(0)
    # Sudoku candidate mask: batch=2, 9 digit channels, 9x9 board.  Values
    # sampled slightly outside [0, 1] to exercise the clamp paths too.
    mask = jax.random.uniform(key, (2, 9, 9, 9), dtype=jnp.float32,
                              minval=-0.1, maxval=1.1)

    # f32, small batch (single block, static strip).  Bit-identical to ref.
    for t in ("h", "v"):
        got = jax.block_until_ready(sudoku_digits_in_one_line_at_box(mask, type=t))
        want = jax.block_until_ready(_ref(mask, t))
        assert got.shape == (2, 9, 9, 9) and got.dtype == jnp.float32
        assert jnp.allclose(got, want, atol=1e-6), f"f32 mismatch for type={t}"

    # bf16 I/O path: 16-sublane packing, native bf16 min/max, f32 opposite sum.
    got = jax.block_until_ready(
        sudoku_digits_in_one_line_at_box(mask.astype(jnp.bfloat16), type="h"))
    want = _ref(mask.astype(jnp.bfloat16), "h")
    assert got.dtype == jnp.bfloat16
    assert jnp.allclose(got.astype(jnp.float32), want, atol=2e-2), "bf16 mismatch"

    # Larger batch: exercises the multi-step grid, the partial last block and
    # the in-kernel sublane strip loop (pl.loop + pl.ds).
    mask_big = jax.random.uniform(jax.random.PRNGKey(1), (1024, 9, 9, 9),
                                  dtype=jnp.float32, minval=-0.1, maxval=1.1)
    got = jax.block_until_ready(
        sudoku_digits_in_one_line_at_box(mask_big, type="h"))
    want = jax.block_until_ready(_ref(mask_big, "h"))
    assert jnp.allclose(got, want, atol=1e-6), "large-batch mismatch"

    print("KERNEL_OK")
</pallas_src>

<mosaic_0001>
module attributes {stable_mosaic.version = 11 : i64} {
  func.func @kernel(%arg0: i32, %arg1: memref<81x8x128xf32, #tpu.memory_space<vmem>>, %arg2: memref<81x8x128xf32, #tpu.memory_space<vmem>>) attributes {dimension_semantics = [#tpu.dimension_semantics<parallel>], iteration_bounds = array<i64: 1>, scalar_prefetch = 0 : i64, scratch_operands = 0 : i64, tpu.core_type = #tpu.core_type<tc>, window_params = [{transform_indices = @transform_0, window_bounds = array<i64: 81, 8, 128>}, {transform_indices = @transform_1, window_bounds = array<i64: 81, 8, 128>}]} {
    %c0 = arith.constant 0 : index
    %c0_0 = arith.constant 0 : index
    %c0_1 = arith.constant 0 : index
    %0 = vector.load %arg1[%c0, %c0_0, %c0_1] : memref<81x8x128xf32, #tpu.memory_space<vmem>>, vector<1x8x128xf32>
    %1 = vector.shape_cast %0 : vector<1x8x128xf32> to vector<8x128xf32>
    %c1 = arith.constant 1 : index
    %c0_2 = arith.constant 0 : index
    %c0_3 = arith.constant 0 : index
    %2 = vector.load %arg1[%c1, %c0_2, %c0_3] : memref<81x8x128xf32, #tpu.memory_space<vmem>>, vector<1x8x128xf32>
    %3 = vector.shape_cast %2 : vector<1x8x128xf32> to vector<8x128xf32>
    %c2 = arith.constant 2 : index
    %c0_4 = arith.constant 0 : index
    %c0_5 = arith.constant 0 : index
    %4 = vector.load %arg1[%c2, %c0_4, %c0_5] : memref<81x8x128xf32, #tpu.memory_space<vmem>>, vector<1x8x128xf32>
    %5 = vector.shape_cast %4 : vector<1x8x128xf32> to vector<8x128xf32>
    %6 = arith.maximumf %1, %3 : vector<8x128xf32>
    %7 = arith.maximumf %6, %5 : vector<8x128xf32>
    %c3 = arith.constant 3 : index
    %c0_6 = arith.constant 0 : index
    %c0_7 = arith.constant 0 : index
    %8 = vector.load %arg1[%c3, %c0_6, %c0_7] : memref<81x8x128xf32, #tpu.memory_space<vmem>>, vector<1x8x128xf32>
    %9 = vector.shape_cast %8 : vector<1x8x128xf32> to vector<8x128xf32>
    %c4 = arith.constant 4 : index
    %c0_8 = arith.constant 0 : index
    %c0_9 = arith.constant 0 : index
    %10 = vector.load %arg1[%c4, %c0_8, %c0_9] : memref<81x8x128xf32, #tpu.memory_space<vmem>>, vector<1x8x128xf32>
    %11 = vector.shape_cast %10 : vector<1x8x128xf32> to vector<8x128xf32>
    %c5 = arith.constant 5 : index
    %c0_10 = arith.constant 0 : index
    %c0_11 = arith.constant 0 : index
    %12 = vector.load %arg1[%c5, %c0_10, %c0_11] : memref<81x8x128xf32, #tpu.memory_space<vmem>>, vector<1x8x128xf32>
    %13 = vector.shape_cast %12 : vector<1x8x128xf32> to vector<8x128xf32>
    %14 = arith.maximumf %9, %11 : vector<8x128xf32>
    %15 = arith.maximumf %14, %13 : vector<8x128xf32>
    %c6 = arith.constant 6 : index
    %c0_12 = arith.constant 0 : index
    %c0_13 = arith.constant 0 : index
    %16 = vector.load %arg1[%c6, %c0_12, %c0_13] : memref<81x8x128xf32, #tpu.memory_space<vmem>>, vector<1x8x128xf32>
    %17 = vector.shape_cast %16 : vector<1x8x128xf32> to vector<8x128xf32>
    %c7 = arith.constant 7 : index
    %c0_14 = arith.constant 0 : index
    %c0_15 = arith.constant 0 : index
    %18 = vector.load %arg1[%c7, %c0_14, %c0_15] : memref<81x8x128xf32, #tpu.memory_space<vmem>>, vector<1x8x128xf32>
    %19 = vector.shape_cast %18 : vector<1x8x128xf32> to vector<8x128xf32>
    %c8 = arith.constant 8 : index
    %c0_16 = arith.constant 0 : index
    %c0_17 = arith.constant 0 : index
    %20 = vector.load %arg1[%c8, %c0_16, %c0_17] : memref<81x8x128xf32, #tpu.memory_space<vmem>>, vector<1x8x128xf32>
    %21 = vector.shape_cast %20 : vector<1x8x128xf32> to vector<8x128xf32>
    %22 = arith.maximumf %17, %19 : vector<8x128xf32>
    %23 = arith.maximumf %22, %21 : vector<8x128xf32>
    %c9 = arith.constant 9 : index
    %c0_18 = arith.constant 0 : index
    %c0_19 = arith.constant 0 : index
    %24 = vector.load %arg1[%c9, %c0_18, %c0_19] : memref<81x8x128xf32, #tpu.memory_space<vmem>>, vector<1x8x128xf32>
    %25 = vector.shape_cast %24 : vector<1x8x128xf32> to vector<8x128xf32>
    %c10 = arith.constant 10 : index
    %c0_20 = arith.constant 0 : index
    %c0_21 = arith.constant 0 : index
    %26 = vector.load %arg1[%c10, %c0_20, %c0_21] : memref<81x8x128xf32, #tpu.memory_space<vmem>>, vector<1x8x128xf32>
    %27 = vector.shape_cast %26 : vector<1x8x128xf32> to vector<8x128xf32>
    %c11 = arith.constant 11 : index
    %c0_22 = arith.constant 0 : index
    %c0_23 = arith.constant 0 : index
    %28 = vector.load %arg1[%c11, %c0_22, %c0_23] : memref<81x8x128xf32, #tpu.memory_space<vmem>>, vector<1x8x128xf32>
    %29 = vector.shape_cast %28 : vector<1x8x128xf32> to vector<8x128xf32>
    %30 = arith.maximumf %25, %27 : vector<8x128xf32>
    %31 = arith.maximumf %30, %29 : vector<8x128xf32>
    %c12 = arith.constant 12 : index
    %c0_24 = arith.constant 0 : index
    %c0_25 = arith.constant 0 : index
    %32 = vector.load %arg1[%c12, %c0_24, %c0_25] : memref<81x8x128xf32, #tpu.memory_space<vmem>>, vector<1x8x128xf32>
    %33 = vector.shape_cast %32 : vector<1x8x128xf32> to vector<8x128xf32>
    %c13 = arith.constant 13 : index
    %c0_26 = arith.constant 0 : index
    %c0_27 = arith.constant 0 : index
    %34 = vector.load %arg1[%c13, %c0_26, %c0_27] : memref<81x8x128xf32, #tpu.memory_space<vmem>>, vector<1x8x128xf32>
    %35 = vector.shape_cast %34 : vector<1x8x128xf32> to vector<8x128xf32>
    %c14 = arith.constant 14 : index
    %c0_28 = arith.constant 0 : index
    %c0_29 = arith.constant 0 : index
    %36 = vector.load %arg1[%c14, %c0_28, %c0_29] : memref<81x8x128xf32, #tpu.memory_space<vmem>>, vector<1x8x128xf32>
    %37 = vector.shape_cast %36 : vector<1x8x128xf32> to vector<8x128xf32>
    %38 = arith.maximumf %33, %35 : vector<8x128xf32>
    %39 = arith.maximumf %38, %37 : vector<8x128xf32>
    %c15 = arith.constant 15 : index
    %c0_30 = arith.constant 0 : index
    %c0_31 = arith.constant 0 : index
    %40 = vector.load %arg1[%c15, %c0_30, %c0_31] : memref<81x8x128xf32, #tpu.memory_space<vmem>>, vector<1x8x128xf32>
    %41 = vector.shape_cast %40 : vector<1x8x128xf32> to vector<8x128xf32>
    %c16 = arith.constant 16 : index
    %c0_32 = arith.constant 0 : index
    %c0_33 = arith.constant 0 : index
    %42 = vector.load %arg1[%c16, %c0_32, %c0_33] : memref<81x8x128xf32, #tpu.memory_space<vmem>>, vector<1x8x128xf32>
    %43 = vector.shape_cast %42 : vector<1x8x128xf32> to vector<8x128xf32>
    %c17 = arith.constant 17 : index
    %c0_34 = arith.constant 0 : index
    %c0_35 = arith.constant 0 : index
    %44 = vector.load %arg1[%c17, %c0_34, %c0_35] : memref<81x8x128xf32, #tpu.memory_space<vmem>>, vector<1x8x128xf32>
    %45 = vector.shape_cast %44 : vector<1x8x128xf32> to vector<8x128xf32>
    %46 = arith.maximumf %41, %43 : vector<8x128xf32>
    %47 = arith.maximumf %46, %45 : vector<8x128xf32>
    %c18 = arith.constant 18 : index
    %c0_36 = arith.constant 0 : index
    %c0_37 = arith.constant 0 : index
    %48 = vector.load %arg1[%c18, %c0_36, %c0_37] : memref<81x8x128xf32, #tpu.memory_space<vmem>>, vector<1x8x128xf32>
    %49 = vector.shape_cast %48 : vector<1x8x128xf32> to vector<8x128xf32>
    %c19 = arith.constant 19 : index
    %c0_38 = arith.constant 0 : index
    %c0_39 = arith.constant 0 : index
    %50 = vector.load %arg1[%c19, %c0_38, %c0_39] : memref<81x8x128xf32, #tpu.memory_space<vmem>>, vector<1x8x128xf32>
    %51 = vector.shape_cast %50 : vector<1x8x128xf32> to vector<8x128xf32>
    %c20 = arith.constant 20 : index
    %c0_40 = arith.constant 0 : index
    %c0_41 = arith.constant 0 : index
    %52 = vector.load %arg1[%c20, %c0_40, %c0_41] : memref<81x8x128xf32, #tpu.memory_space<vmem>>, vector<1x8x128xf32>
    %53 = vector.shape_cast %52 : vector<1x8x128xf32> to vector<8x128xf32>
    %54 = arith.maximumf %49, %51 : vector<8x128xf32>
    %55 = arith.maximumf %54, %53 : vector<8x128xf32>
    %c21 = arith.constant 21 : index
    %c0_42 = arith.constant 0 : index
    %c0_43 = arith.constant 0 : index
    %56 = vector.load %arg1[%c21, %c0_42, %c0_43] : memref<81x8x128xf32, #tpu.memory_space<vmem>>, vector<1x8x128xf32>
    %57 = vector.shape_cast %56 : vector<1x8x128xf32> to vector<8x128xf32>
    %c22 = arith.constant 22 : index
    %c0_44 = arith.constant 0 : index
    %c0_45 = arith.constant 0 : index
    %58 = vector.load %arg1[%c22, %c0_44, %c0_45] : memref<81x8x128xf32, #tpu.memory_space<vmem>>, vector<1x8x128xf32>
    %59 = vector.shape_cast %58 : vector<1x8x128xf32> to vector<8x128xf32>
    %c23 = arith.constant 23 : index
    %c0_46 = arith.constant 0 : index
    %c0_47 = arith.constant 0 : index
    %60 = vector.load %arg1[%c23, %c0_46, %c0_47] : memref<81x8x128xf32, #tpu.memory_space<vmem>>, vector<1x8x128xf32>
    %61 = vector.shape_cast %60 : vector<1x8x128xf32> to vector<8x128xf32>
    %62 = arith.maximumf %57, %59 : vector<8x128xf32>
    %63 = arith.maximumf %62, %61 : vector<8x128xf32>
    %c24 = arith.constant 24 : index
    %c0_48 = arith.constant 0 : index
    %c0_49 = arith.constant 0 : index
    %64 = vector.load %arg1[%c24, %c0_48, %c0_49] : memref<81x8x128xf32, #tpu.memory_space<vmem>>, vector<1x8x128xf32>
    %65 = vector.shape_cast %64 : vector<1x8x128xf32> to vector<8x128xf32>
    %c25 = arith.constant 25 : index
    %c0_50 = arith.constant 0 : index
    %c0_51 = arith.constant 0 : index
    %66 = vector.load %arg1[%c25, %c0_50, %c0_51] : memref<81x8x128xf32, #tpu.memory_space<vmem>>, vector<1x8x128xf32>
    %67 = vector.shape_cast %66 : vector<1x8x128xf32> to vector<8x128xf32>
    %c26 = arith.constant 26 : index
    %c0_52 = arith.constant 0 : index
    %c0_53 = arith.constant 0 : index
    %68 = vector.load %arg1[%c26, %c0_52, %c0_53] : memref<81x8x128xf32, #tpu.memory_space<vmem>>, vector<1x8x128xf32>
    %69 = vector.shape_cast %68 : vector<1x8x128xf32> to vector<8x128xf32>
    %70 = arith.maximumf %65, %67 : vector<8x128xf32>
    %71 = arith.maximumf %70, %69 : vector<8x128xf32>
    %72 = arith.addf %7, %31 : vector<8x128xf32>
    %73 = arith.addf %72, %55 : vector<8x128xf32>
    %cst = arith.constant 2.000000e+00 : f32
    %74 = vector.broadcast %cst : f32 to vector<8x128xf32>
    %75 = arith.subf %74, %73 : vector<8x128xf32>
    %cst_54 = arith.constant 0.000000e+00 : f32
    %76 = vector.broadcast %cst_54 : f32 to vector<8x128xf32>
    %77 = arith.maximumf %75, %76 : vector<8x128xf32>
    %78 = arith.addf %15, %39 : vector<8x128xf32>
    %79 = arith.addf %78, %63 : vector<8x128xf32>
    %cst_55 = arith.constant 2.000000e+00 : f32
    %80 = vector.broadcast %cst_55 : f32 to vector<8x128xf32>
    %81 = arith.subf %80, %79 : vector<8x128xf32>
    %cst_56 = arith.constant 0.000000e+00 : f32
    %82 = vector.broadcast %cst_56 : f32 to vector<8x128xf32>
    %83 = arith.maximumf %81, %82 : vector<8x128xf32>
    %84 = arith.addf %23, %47 : vector<8x128xf32>
    %85 = arith.addf %84, %71 : vector<8x128xf32>
    %cst_57 = arith.constant 2.000000e+00 : f32
    %86 = vector.broadcast %cst_57 : f32 to vector<8x128xf32>
    %87 = arith.subf %86, %85 : vector<8x128xf32>
    %cst_58 = arith.constant 0.000000e+00 : f32
    %88 = vector.broadcast %cst_58 : f32 to vector<8x128xf32>
    %89 = arith.maximumf %87, %88 : vector<8x128xf32>
    %90 = arith.minimumf %7, %77 : vector<8x128xf32>
    %cst_59 = arith.constant 0.000000e+00 : f32
    %cst_60 = arith.constant 1.000000e+00 : f32
    %91 = vector.broadcast %cst_59 : f32 to vector<8x128xf32>
    %92 = arith.maximumf %91, %90 : vector<8x128xf32>
    %93 = vector.broadcast %cst_60 : f32 to vector<8x128xf32>
    %94 = arith.minimumf %93, %92 : vector<8x128xf32>
    %95 = arith.minimumf %15, %83 : vector<8x128xf32>
    %cst_61 = arith.constant 0.000000e+00 : f32
    %cst_62 = arith.constant 1.000000e+00 : f32
    %96 = vector.broadcast %cst_61 : f32 to vector<8x128xf32>
    %97 = arith.maximumf %96, %95 : vector<8x128xf32>
    %98 = vector.broadcast %cst_62 : f32 to vector<8x128xf32>
    %99 = arith.minimumf %98, %97 : vector<8x128xf32>
    %100 = arith.minimumf %23, %89 : vector<8x128xf32>
    %cst_63 = arith.constant 0.000000e+00 : f32
    %cst_64 = arith.constant 1.000000e+00 : f32
    %101 = vector.broadcast %cst_63 : f32 to vector<8x128xf32>
    %102 = arith.maximumf %101, %100 : vector<8x128xf32>
    %103 = vector.broadcast %cst_64 : f32 to vector<8x128xf32>
    %104 = arith.minimumf %103, %102 : vector<8x128xf32>
    %105 = arith.minimumf %31, %77 : vector<8x128xf32>
    %cst_65 = arith.constant 0.000000e+00 : f32
    %cst_66 = arith.constant 1.000000e+00 : f32
    %106 = vector.broadcast %cst_65 : f32 to vector<8x128xf32>
    %107 = arith.maximumf %106, %105 : vector<8x128xf32>
    %108 = vector.broadcast %cst_66 : f32 to vector<8x128xf32>
    %109 = arith.minimumf %108, %107 : vector<8x128xf32>
    %110 = arith.minimumf %39, %83 : vector<8x128xf32>
    %cst_67 = arith.constant 0.000000e+00 : f32
    %cst_68 = arith.constant 1.000000e+00 : f32
    %111 = vector.broadcast %cst_67 : f32 to vector<8x128xf32>
    %112 = arith.maximumf %111, %110 : vector<8x128xf32>
    %113 = vector.broadcast %cst_68 : f32 to vector<8x128xf32>
    %114 = arith.minimumf %113, %112 : vector<8x128xf32>
    %115 = arith.minimumf %47, %89 : vector<8x128xf32>
    %cst_69 = arith.constant 0.000000e+00 : f32
    %cst_70 = arith.constant 1.000000e+00 : f32
    %116 = vector.broadcast %cst_69 : f32 to vector<8x128xf32>
    %117 = arith.maximumf %116, %115 : vector<8x128xf32>
    %118 = vector.broadcast %cst_70 : f32 to vector<8x128xf32>
    %119 = arith.minimumf %118, %117 : vector<8x128xf32>
    %120 = arith.minimumf %55, %77 : vector<8x128xf32>
    %cst_71 = arith.constant 0.000000e+00 : f32
    %cst_72 = arith.constant 1.000000e+00 : f32
    %121 = vector.broadcast %cst_71 : f32 to vector<8x128xf32>
    %122 = arith.maximumf %121, %120 : vector<8x128xf32>
    %123 = vector.broadcast %cst_72 : f32 to vector<8x128xf32>
    %124 = arith.minimumf %123, %122 : vector<8x128xf32>
    %125 = arith.minimumf %63, %83 : vector<8x128xf32>
    %cst_73 = arith.constant 0.000000e+00 : f32
    %cst_74 = arith.constant 1.000000e+00 : f32
    %126 = vector.broadcast %cst_73 : f32 to vector<8x128xf32>
    %127 = arith.maximumf %126, %125 : vector<8x128xf32>
    %128 = vector.broadcast %cst_74 : f32 to vector<8x128xf32>
    %129 = arith.minimumf %128, %127 : vector<8x128xf32>
    %130 = arith.minimumf %71, %89 : vector<8x128xf32>
    %cst_75 = arith.constant 0.000000e+00 : f32
    %cst_76 = arith.constant 1.000000e+00 : f32
    %131 = vector.broadcast %cst_75 : f32 to vector<8x128xf32>
    %132 = arith.maximumf %131, %130 : vector<8x128xf32>
    %133 = vector.broadcast %cst_76 : f32 to vector<8x128xf32>
    %134 = arith.minimumf %133, %132 : vector<8x128xf32>
    %135 = arith.maximumf %94, %99 : vector<8x128xf32>
    %136 = arith.maximumf %135, %104 : vector<8x128xf32>
    %137 = arith.maximumf %109, %114 : vector<8x128xf32>
    %138 = arith.maximumf %137, %119 : vector<8x128xf32>
    %139 = arith.maximumf %124, %129 : vector<8x128xf32>
    %140 = arith.maximumf %139, %134 : vector<8x128xf32>
    %cst_77 = arith.constant 1.000000e+00 : f32
    %141 = vector.broadcast %cst_77 : f32 to vector<8x128xf32>
    %142 = arith.subf %141, %94 : vector<8x128xf32>
    %143 = arith.minimumf %136, %142 : vector<8x128xf32>
    %cst_78 = arith.constant 1.000000e+00 : f32
    %144 = vector.broadcast %cst_78 : f32 to vector<8x128xf32>
    %145 = arith.subf %144, %143 : vector<8x128xf32>
    %c0_79 = arith.constant 0 : index
    %c0_80 = arith.constant 0 : index
    %c0_81 = arith.constant 0 : index
    %146 = vector.load %arg1[%c0_79, %c0_80, %c0_81] : memref<81x8x128xf32, #tpu.memory_space<vmem>>, vector<1x8x128xf32>
    %147 = vector.shape_cast %146 : vector<1x8x128xf32> to vector<8x128xf32>
    %148 = arith.minimumf %147, %145 : vector<8x128xf32>
    %cst_82 = arith.constant 0.000000e+00 : f32
    %149 = vector.broadcast %cst_82 : f32 to vector<8x128xf32>
    %150 = arith.maximumf %148, %149 : vector<8x128xf32>
    %c0_83 = arith.constant 0 : index
    %c0_84 = arith.constant 0 : index
    %c0_85 = arith.constant 0 : index
    %151 = vector.load %arg2[%c0_83, %c0_84, %c0_85] : memref<81x8x128xf32, #tpu.memory_space<vmem>>, vector<1x8x128xf32>
    %152 = vector.shape_cast %151 : vector<1x8x128xf32> to vector<8x128xf32>
    %153 = vector.shape_cast %150 : vector<8x128xf32> to vector<1x8x128xf32>
    tpu.vector_store %arg2[%c0_83, %c0_84, %c0_85], %153 {strides = array<i32>} : memref<81x8x128xf32, #tpu.memory_space<vmem>>, vector<1x8x128xf32>,
    %c1_86 = arith.constant 1 : index
    %c0_87 = arith.constant 0 : index
    %c0_88 = arith.constant 0 : index
    %154 = vector.load %arg1[%c1_86, %c0_87, %c0_88] : memref<81x8x128xf32, #tpu.memory_space<vmem>>, vector<1x8x128xf32>
    %155 = vector.shape_cast %154 : vector<1x8x128xf32> to vector<8x128xf32>
    %156 = arith.minimumf %155, %145 : vector<8x128xf32>
    %cst_89 = arith.constant 0.000000e+00 : f32
    %157 = vector.broadcast %cst_89 : f32 to vector<8x128xf32>
    %158 = arith.maximumf %156, %157 : vector<8x128xf32>
    %c1_90 = arith.constant 1 : index
    %c0_91 = arith.constant 0 : index
    %c0_92 = arith.constant 0 : index
    %159 = vector.load %arg2[%c1_90, %c0_91, %c0_92] : memref<81x8x128xf32, #tpu.memory_space<vmem>>, vector<1x8x128xf32>
    %160 = vector.shape_cast %159 : vector<1x8x128xf32> to vector<8x128xf32>
    %161 = vector.shape_cast %158 : vector<8x128xf32> to vector<1x8x128xf32>
    tpu.vector_store %arg2[%c1_90, %c0_91, %c0_92], %161 {strides = array<i32>} : memref<81x8x128xf32, #tpu.memory_space<vmem>>, vector<1x8x128xf32>,
    %c2_93 = arith.constant 2 : index
    %c0_94 = arith.constant 0 : index
    %c0_95 = arith.constant 0 : index
    %162 = vector.load %arg1[%c2_93, %c0_94, %c0_95] : memref<81x8x128xf32, #tpu.memory_space<vmem>>, vector<1x8x128xf32>
    %163 = vector.shape_cast %162 : vector<1x8x128xf32> to vector<8x128xf32>
    %164 = arith.minimumf %163, %145 : vector<8x128xf32>
    %cst_96 = arith.constant 0.000000e+00 : f32
    %165 = vector.broadcast %cst_96 : f32 to vector<8x128xf32>
    %166 = arith.maximumf %164, %165 : vector<8x128xf32>
    %c2_97 = arith.constant 2 : index
    %c0_98 = arith.constant 0 : index
    %c0_99 = arith.constant 0 : index
    %167 = vector.load %arg2[%c2_97, %c0_98, %c0_99] : memref<81x8x128xf32, #tpu.memory_space<vmem>>, vector<1x8x128xf32>
    %168 = vector.shape_cast %167 : vector<1x8x128xf32> to vector<8x128xf32>
    %169 = vector.shape_cast %166 : vector<8x128xf32> to vector<1x8x128xf32>
    tpu.vector_store %arg2[%c2_97, %c0_98, %c0_99], %169 {strides = array<i32>} : memref<81x8x128xf32, #tpu.memory_space<vmem>>, vector<1x8x128xf32>,
    %cst_100 = arith.constant 1.000000e+00 : f32
    %170 = vector.broadcast %cst_100 : f32 to vector<8x128xf32>
    %171 = arith.subf %170, %99 : vector<8x128xf32>
    %172 = arith.minimumf %136, %171 : vector<8x128xf32>
    %cst_101 = arith.constant 1.000000e+00 : f32
    %173 = vector.broadcast %cst_101 : f32 to vector<8x128xf32>
    %174 = arith.subf %173, %172 : vector<8x128xf32>
    %c3_102 = arith.constant 3 : index
    %c0_103 = arith.constant 0 : index
    %c0_104 = arith.constant 0 : index
    %175 = vector.load %arg1[%c3_102, %c0_103, %c0_104] : memref<81x8x128xf32, #tpu.memory_space<vmem>>, vector<1x8x128xf32>
    %176 = vector.shape_cast %175 : vector<1x8x128xf32> to vector<8x128xf32>
    %177 = arith.minimumf %176, %174 : vector<8x128xf32>
    %cst_105 = arith.constant 0.000000e+00 : f32
    %178 = vector.broadcast %cst_105 : f32 to vector<8x128xf32>
    %179 = arith.maximumf %177, %178 : vector<8x128xf32>
    %c3_106 = arith.constant 3 : index
    %c0_107 = arith.constant 0 : index
    %c0_108 = arith.constant 0 : index
    %180 = vector.load %arg2[%c3_106, %c0_107, %c0_108] : memref<81x8x128xf32, #tpu.memory_space<vmem>>, vector<1x8x128xf32>
    %181 = vector.shape_cast %180 : vector<1x8x128xf32> to vector<8x128xf32>
    %182 = vector.shape_cast %179 : vector<8x128xf32> to vector<1x8x128xf32>
    tpu.vector_store %arg2[%c3_106, %c0_107, %c0_108], %182 {strides = array<i32>} : memref<81x8x128xf32, #tpu.memory_space<vmem>>, vector<1x8x128xf32>,
    %c4_109 = arith.constant 4 : index
    %c0_110 = arith.constant 0 : index
    %c0_111 = arith.constant 0 : index
    %183 = vector.load %arg1[%c4_109, %c0_110, %c0_111] : memref<81x8x128xf32, #tpu.memory_space<vmem>>, vector<1x8x128xf32>
    %184 = vector.shape_cast %183 : vector<1x8x128xf32> to vector<8x128xf32>
    %185 = arith.minimumf %184, %174 : vector<8x128xf32>
    %cst_112 = arith.constant 0.000000e+00 : f32
    %186 = vector.broadcast %cst_112 : f32 to vector<8x128xf32>
    %187 = arith.maximumf %185, %186 : vector<8x128xf32>
    %c4_113 = arith.constant 4 : index
    %c0_114 = arith.constant 0 : index
    %c0_115 = arith.constant 0 : index
    %188 = vector.load %arg2[%c4_113, %c0_114, %c0_115] : memref<81x8x128xf32, #tpu.memory_space<vmem>>, vector<1x8x128xf32>
    %189 = vector.shape_cast %188 : vector<1x8x128xf32> to vector<8x128xf32>
    %190 = vector.shape_cast %187 : vector<8x128xf32> to vector<1x8x128xf32>
    tpu.vector_store %arg2[%c4_113, %c0_114, %c0_115], %190 {strides = array<i32>} : memref<81x8x128xf32, #tpu.memory_space<vmem>>, vector<1x8x128xf32>,
    %c5_116 = arith.constant 5 : index
    %c0_117 = arith.constant 0 : index
    %c0_118 = arith.constant 0 : index
    %191 = vector.load %arg1[%c5_116, %c0_117, %c0_118] : memref<81x8x128xf32, #tpu.memory_space<vmem>>, vector<1x8x128xf32>
    %192 = vector.shape_cast %191 : vector<1x8x128xf32> to vector<8x128xf32>
    %193 = arith.minimumf %192, %174 : vector<8x128xf32>
    %cst_119 = arith.constant 0.000000e+00 : f32
    %194 = vector.broadcast %cst_119 : f32 to vector<8x128xf32>
    %195 = arith.maximumf %193, %194 : vector<8x128xf32>
    %c5_120 = arith.constant 5 : index
    %c0_121 = arith.constant 0 : index
    %c0_122 = arith.constant 0 : index
    %196 = vector.load %arg2[%c5_120, %c0_121, %c0_122] : memref<81x8x128xf32, #tpu.memory_space<vmem>>, vector<1x8x128xf32>
    %197 = vector.shape_cast %196 : vector<1x8x128xf32> to vector<8x128xf32>
    %198 = vector.shape_cast %195 : vector<8x128xf32> to vector<1x8x128xf32>
    tpu.vector_store %arg2[%c5_120, %c0_121, %c0_122], %198 {strides = array<i32>} : memref<81x8x128xf32, #tpu.memory_space<vmem>>, vector<1x8x128xf32>,
    %cst_123 = arith.constant 1.000000e+00 : f32
    %199 = vector.broadcast %cst_123 : f32 to vector<8x128xf32>
    %200 = arith.subf %199, %104 : vector<8x128xf32>
    %201 = arith.minimumf %136, %200 : vector<8x128xf32>
    %cst_124 = arith.constant 1.000000e+00 : f32
    %202 = vector.broadcast %cst_124 : f32 to vector<8x128xf32>
    %203 = arith.subf %202, %201 : vector<8x128xf32>
    %c6_125 = arith.constant 6 : index
    %c0_126 = arith.constant 0 : index
    %c0_127 = arith.constant 0 : index
    %204 = vector.load %arg1[%c6_125, %c0_126, %c0_127] : memref<81x8x128xf32, #tpu.memory_space<vmem>>, vector<1x8x128xf32>
    %205 = vector.shape_cast %204 : vector<1x8x128xf32> to vector<8x128xf32>
    %206 = arith.minimumf %205, %203 : vector<8x128xf32>
    %cst_128 = arith.constant 0.000000e+00 : f32
    %207 = vector.broadcast %cst_128 : f32 to vector<8x128xf32>
    %208 = arith.maximumf %206, %207 : vector<8x128xf32>
    %c6_129 = arith.constant 6 : index
    %c0_130 = arith.constant 0 : index
    %c0_131 = arith.constant 0 : index
    %209 = vector.load %arg2[%c6_129, %c0_130, %c0_131] : memref<81x8x128xf32, #tpu.memory_space<vmem>>, vector<1x8x128xf32>
    %210 = vector.shape_cast %209 : vector<1x8x128xf32> to vector<8x128xf32>
    %211 = vector.shape_cast %208 : vector<8x128xf32> to vector<1x8x128xf32>
    tpu.vector_store %arg2[%c6_129, %c0_130, %c0_131], %211 {strides = array<i32>} : memref<81x8x128xf32, #tpu.memory_space<vmem>>, vector<1x8x128xf32>,
    %c7_132 = arith.constant 7 : index
    %c0_133 = arith.constant 0 : index
    %c0_134 = arith.constant 0 : index
    %212 = vector.load %arg1[%c7_132, %c0_133, %c0_134] : memref<81x8x128xf32, #tpu.memory_space<vmem>>, vector<1x8x128xf32>
    %213 = vector.shape_cast %212 : vector<1x8x128xf32> to vector<8x128xf32>
    %214 = arith.minimumf %213, %203 : vector<8x128xf32>
    %cst_135 = arith.constant 0.000000e+00 : f32
    %215 = vector.broadcast %cst_135 : f32 to vector<8x128xf32>
    %216 = arith.maximumf %214, %215 : vector<8x128xf32>
    %c7_136 = arith.constant 7 : index
    %c0_137 = arith.constant 0 : index
    %c0_138 = arith.constant 0 : index
    %217 = vector.load %arg2[%c7_136, %c0_137, %c0_138] : memref<81x8x128xf32, #tpu.memory_space<vmem>>, vector<1x8x128xf32>
    %218 = vector.shape_cast %217 : vector<1x8x128xf32> to vector<8x128xf32>
    %219 = vector.shape_cast %216 : vector<8x128xf32> to vector<1x8x128xf32>
    tpu.vector_store %arg2[%c7_136, %c0_137, %c0_138], %219 {strides = array<i32>} : memref<81x8x128xf32, #tpu.memory_space<vmem>>, vector<1x8x128xf32>,
    %c8_139 = arith.constant 8 : index
    %c0_140 = arith.constant 0 : index
    %c0_141 = arith.constant 0 : index
    %220 = vector.load %arg1[%c8_139, %c0_140, %c0_141] : memref<81x8x128xf32, #tpu.memory_space<vmem>>, vector<1x8x128xf32>
    %221 = vector.shape_cast %220 : vector<1x8x128xf32> to vector<8x128xf32>
    %222 = arith.minimumf %221, %203 : vector<8x128xf32>
    %cst_142 = arith.constant 0.000000e+00 : f32
    %223 = vector.broadcast %cst_142 : f32 to vector<8x128xf32>
    %224 = arith.maximumf %222, %223 : vector<8x128xf32>
    %c8_143 = arith.constant 8 : index
    %c0_144 = arith.constant 0 : index
    %c0_145 = arith.constant 0 : index
    %225 = vector.load %arg2[%c8_143, %c0_144, %c0_145] : memref<81x8x128xf32, #tpu.memory_space<vmem>>, vector<1x8x128xf32>
    %226 = vector.shape_cast %225 : vector<1x8x128xf32> to vector<8x128xf32>
    %227 = vector.shape_cast %224 : vector<8x128xf32> to vector<1x8x128xf32>
    tpu.vector_store %arg2[%c8_143, %c0_144, %c0_145], %227 {strides = array<i32>} : memref<81x8x128xf32, #tpu.memory_space<vmem>>, vector<1x8x128xf32>,
    %cst_146 = arith.constant 1.000000e+00 : f32
    %228 = vector.broadcast %cst_146 : f32 to vector<8x128xf32>
    %229 = arith.subf %228, %109 : vector<8x128xf32>
    %230 = arith.minimumf %138, %229 : vector<8x128xf32>
    %cst_147 = arith.constant 1.000000e+00 : f32
    %231 = vector.broadcast %cst_147 : f32 to vector<8x128xf32>
    %232 = arith.subf %231, %230 : vector<8x128xf32>
    %c9_148 = arith.constant 9 : index
    %c0_149 = arith.constant 0 : index
    %c0_150 = arith.constant 0 : index
    %233 = vector.load %arg1[%c9_148, %c0_149, %c0_150] : memref<81x8x128xf32, #tpu.memory_space<vmem>>, vector<1x8x128xf32>
    %234 = vector.shape_cast %233 : vector<1x8x128xf32> to vector<8x128xf32>
    %235 = arith.minimumf %234, %232 : vector<8x128xf32>
    %cst_151 = arith.constant 0.000000e+00 : f32
    %236 = vector.broadcast %cst_151 : f32 to vector<8x128xf32>
    %237 = arith.maximumf %235, %236 : vector<8x128xf32>
    %c9_152 = arith.constant 9 : index
    %c0_153 = arith.constant 0 : index
    %c0_154 = arith.constant 0 : index
    %238 = vector.load %arg2[%c9_152, %c0_153, %c0_154] : memref<81x8x128xf32, #tpu.memory_space<vmem>>, vector<1x8x128xf32>
    %239 = vector.shape_cast %238 : vector<1x8x128xf32> to vector<8x128xf32>
    %240 = vector.shape_cast %237 : vector<8x128xf32> to vector<1x8x128xf32>
    tpu.vector_store %arg2[%c9_152, %c0_153, %c0_154], %240 {strides = array<i32>} : memref<81x8x128xf32, #tpu.memory_space<vmem>>, vector<1x8x128xf32>,
    %c10_155 = arith.constant 10 : index
    %c0_156 = arith.constant 0 : index
    %c0_157 = arith.constant 0 : index
    %241 = vector.load %arg1[%c10_155, %c0_156, %c0_157] : memref<81x8x128xf32, #tpu.memory_space<vmem>>, vector<1x8x128xf32>
    %242 = vector.shape_cast %241 : vector<1x8x128xf32> to vector<8x128xf32>
    %243 = arith.minimumf %242, %232 : vector<8x128xf32>
    %cst_158 = arith.constant 0.000000e+00 : f32
    %244 = vector.broadcast %cst_158 : f32 to vector<8x128xf32>
    %245 = arith.maximumf %243, %244 : vector<8x128xf32>
    %c10_159 = arith.constant 10 : index
    %c0_160 = arith.constant 0 : index
    %c0_161 = arith.constant 0 : index
    %246 = vector.load %arg2[%c10_159, %c0_160, %c0_161] : memref<81x8x128xf32, #tpu.memory_space<vmem>>, vector<1x8x128xf32>
    %247 = vector.shape_cast %246 : vector<1x8x128xf32> to vector<8x128xf32>
    %248 = vector.shape_cast %245 : vector<8x128xf32> to vector<1x8x128xf32>
    tpu.vector_store %arg2[%c10_159, %c0_160, %c0_161], %248 {strides = array<i32>} : memref<81x8x128xf32, #tpu.memory_space<vmem>>, vector<1x8x128xf32>,
    %c11_162 = arith.constant 11 : index
    %c0_163 = arith.constant 0 : index
    %c0_164 = arith.constant 0 : index
    %249 = vector.load %arg1[%c11_162, %c0_163, %c0_164] : memref<81x8x128xf32, #tpu.memory_space<vmem>>, vector<1x8x128xf32>
    %250 = vector.shape_cast %249 : vector<1x8x128xf32> to vector<8x128xf32>
    %251 = arith.minimumf %250, %232 : vector<8x128xf32>
    %cst_165 = arith.constant 0.000000e+00 : f32
    %252 = vector.broadcast %cst_165 : f32 to vector<8x128xf32>
    %253 = arith.maximumf %251, %252 : vector<8x128xf32>
    %c11_166 = arith.constant 11 : index
    %c0_167 = arith.constant 0 : index
    %c0_168 = arith.constant 0 : index
    %254 = vector.load %arg2[%c11_166, %c0_167, %c0_168] : memref<81x8x128xf32, #tpu.memory_space<vmem>>, vector<1x8x128xf32>
    %255 = vector.shape_cast %254 : vector<1x8x128xf32> to vector<8x128xf32>
    %256 = vector.shape_cast %253 : vector<8x128xf32> to vector<1x8x128xf32>
    tpu.vector_store %arg2[%c11_166, %c0_167, %c0_168], %256 {strides = array<i32>} : memref<81x8x128xf32, #tpu.memory_space<vmem>>, vector<1x8x128xf32>,
    %cst_169 = arith.constant 1.000000e+00 : f32
    %257 = vector.broadcast %cst_169 : f32 to vector<8x128xf32>
    %258 = arith.subf %257, %114 : vector<8x128xf32>
    %259 = arith.minimumf %138, %258 : vector<8x128xf32>
    %cst_170 = arith.constant 1.000000e+00 : f32
    %260 = vector.broadcast %cst_170 : f32 to vector<8x128xf32>
    %261 = arith.subf %260, %259 : vector<8x128xf32>
    %c12_171 = arith.constant 12 : index
    %c0_172 = arith.constant 0 : index
    %c0_173 = arith.constant 0 : index
    %262 = vector.load %arg1[%c12_171, %c0_172, %c0_173] : memref<81x8x128xf32, #tpu.memory_space<vmem>>, vector<1x8x128xf32>
    %263 = vector.shape_cast %262 : vector<1x8x128xf32> to vector<8x128xf32>
    %264 = arith.minimumf %263, %261 : vector<8x128xf32>
    %cst_174 = arith.constant 0.000000e+00 : f32
    %265 = vector.broadcast %cst_174 : f32 to vector<8x128xf32>
    %266 = arith.maximumf %264, %265 : vector<8x128xf32>
    %c12_175 = arith.constant 12 : index
    %c0_176 = arith.constant 0 : index
    %c0_177 = arith.constant 0 : index
    %267 = vector.load %arg2[%c12_175, %c0_176, %c0_177] : memref<81x8x128xf32, #tpu.memory_space<vmem>>, vector<1x8x128xf32>
    %268 = vector.shape_cast %267 : vector<1x8x128xf32> to vector<8x128xf32>
    %269 = vector.shape_cast %266 : vector<8x128xf32> to vector<1x8x128xf32>
    tpu.vector_store %arg2[%c12_175, %c0_176, %c0_177], %269 {strides = array<i32>} : memref<81x8x128xf32, #tpu.memory_space<vmem>>, vector<1x8x128xf32>,
    %c13_178 = arith.constant 13 : index
    %c0_179 = arith.constant 0 : index
    %c0_180 = arith.constant 0 : index
    %270 = vector.load %arg1[%c13_178, %c0_179, %c0_180] : memref<81x8x128xf32, #tpu.memory_space<vmem>>, vector<1x8x128xf32>
    %271 = vector.shape_cast %270 : vector<1x8x128xf32> to vector<8x128xf32>
    %272 = arith.minimumf %271, %261 : vector<8x128xf32>
    %cst_181 = arith.constant 0.000000e+00 : f32
    %273 = vector.broadcast %cst_181 : f32 to vector<8x128xf32>
    %274 = arith.maximumf %272, %273 : vector<8x128xf32>
    %c13_182 = arith.constant 13 : index
    %c0_183 = arith.constant 0 : index
    %c0_184 = arith.constant 0 : index
    %275 = vector.load %arg2[%c13_182, %c0_183, %c0_184] : memref<81x8x128xf32, #tpu.memory_space<vmem>>, vector<1x8x128xf32>
    %276 = vector.shape_cast %275 : vector<1x8x128xf32> to vector<8x128xf32>
    %277 = vector.shape_cast %274 : vector<8x128xf32> to vector<1x8x128xf32>
    tpu.vector_store %arg2[%c13_182, %c0_183, %c0_184], %277 {strides = array<i32>} : memref<81x8x128xf32, #tpu.memory_space<vmem>>, vector<1x8x128xf32>,
    %c14_185 = arith.constant 14 : index
    %c0_186 = arith.constant 0 : index
    %c0_187 = arith.constant 0 : index
    %278 = vector.load %arg1[%c14_185, %c0_186, %c0_187] : memref<81x8x128xf32, #tpu.memory_space<vmem>>, vector<1x8x128xf32>
    %279 = vector.shape_cast %278 : vector<1x8x128xf32> to vector<8x128xf32>
    %280 = arith.minimumf %279, %261 : vector<8x128xf32>
    %cst_188 = arith.constant 0.000000e+00 : f32
    %281 = vector.broadcast %cst_188 : f32 to vector<8x128xf32>
    %282 = arith.maximumf %280, %281 : vector<8x128xf32>
    %c14_189 = arith.constant 14 : index
    %c0_190 = arith.constant 0 : index
    %c0_191 = arith.constant 0 : index
    %283 = vector.load %arg2[%c14_189, %c0_190, %c0_191] : memref<81x8x128xf32, #tpu.memory_space<vmem>>, vector<1x8x128xf32>
    %284 = vector.shape_cast %283 : vector<1x8x128xf32> to vector<8x128xf32>
    %285 = vector.shape_cast %282 : vector<8x128xf32> to vector<1x8x128xf32>
    tpu.vector_store %arg2[%c14_189, %c0_190, %c0_191], %285 {strides = array<i32>} : memref<81x8x128xf32, #tpu.memory_space<vmem>>, vector<1x8x128xf32>,
    %cst_192 = arith.constant 1.000000e+00 : f32
    %286 = vector.broadcast %cst_192 : f32 to vector<8x128xf32>
    %287 = arith.subf %286, %119 : vector<8x128xf32>
    %288 = arith.minimumf %138, %287 : vector<8x128xf32>
    %cst_193 = arith.constant 1.000000e+00 : f32
    %289 = vector.broadcast %cst_193 : f32 to vector<8x128xf32>
    %290 = arith.subf %289, %288 : vector<8x128xf32>
    %c15_194 = arith.constant 15 : index
    %c0_195 = arith.constant 0 : index
    %c0_196 = arith.constant 0 : index
    %291 = vector.load %arg1[%c15_194, %c0_195, %c0_196] : memref<81x8x128xf32, #tpu.memory_space<vmem>>, vector<1x8x128xf32>
    %292 = vector.shape_cast %291 : vector<1x8x128xf32> to vector<8x128xf32>
    %293 = arith.minimumf %292, %290 : vector<8x128xf32>
    %cst_197 = arith.constant 0.000000e+00 : f32
    %294 = vector.broadcast %cst_197 : f32 to vector<8x128xf32>
    %295 = arith.maximumf %293, %294 : vector<8x128xf32>
    %c15_198 = arith.constant 15 : index
    %c0_199 = arith.constant 0 : index
    %c0_200 = arith.constant 0 : index
    %296 = vector.load %arg2[%c15_198, %c0_199, %c0_200] : memref<81x8x128xf32, #tpu.memory_space<vmem>>, vector<1x8x128xf32>
    %297 = vector.shape_cast %296 : vector<1x8x128xf32> to vector<8x128xf32>
    %298 = vector.shape_cast %295 : vector<8x128xf32> to vector<1x8x128xf32>
    tpu.vector_store %arg2[%c15_198, %c0_199, %c0_200], %298 {strides = array<i32>} : memref<81x8x128xf32, #tpu.memory_space<vmem>>, vector<1x8x128xf32>,
    %c16_201 = arith.constant 16 : index
    %c0_202 = arith.constant 0 : index
    %c0_203 = arith.constant 0 : index
    %299 = vector.load %arg1[%c16_201, %c0_202, %c0_203] : memref<81x8x128xf32, #tpu.memory_space<vmem>>, vector<1x8x128xf32>
    %300 = vector.shape_cast %299 : vector<1x8x128xf32> to vector<8x128xf32>
    %301 = arith.minimumf %300, %290 : vector<8x128xf32>
    %cst_204 = arith.constant 0.000000e+00 : f32
    %302 = vector.broadcast %cst_204 : f32 to vector<8x128xf32>
    %303 = arith.maximumf %301, %302 : vector<8x128xf32>
    %c16_205 = arith.constant 16 : index
    %c0_206 = arith.constant 0 : index
    %c0_207 = arith.constant 0 : index
    %304 = vector.load %arg2[%c16_205, %c0_206, %c0_207] : memref<81x8x128xf32, #tpu.memory_space<vmem>>, vector<1x8x128xf32>
    %305 = vector.shape_cast %304 : vector<1x8x128xf32> to vector<8x128xf32>
    %306 = vector.shape_cast %303 : vector<8x128xf32> to vector<1x8x128xf32>
    tpu.vector_store %arg2[%c16_205, %c0_206, %c0_207], %306 {strides = array<i32>} : memref<81x8x128xf32, #tpu.memory_space<vmem>>, vector<1x8x128xf32>,
    %c17_208 = arith.constant 17 : index
    %c0_209 = arith.constant 0 : index
    %c0_210 = arith.constant 0 : index
    %307 = vector.load %arg1[%c17_208, %c0_209, %c0_210] : memref<81x8x128xf32, #tpu.memory_space<vmem>>, vector<1x8x128xf32>
    %308 = vector.shape_cast %307 : vector<1x8x128xf32> to vector<8x128xf32>
    %309 = arith.minimumf %308, %290 : vector<8x128xf32>
    %cst_211 = arith.constant 0.000000e+00 : f32
    %310 = vector.broadcast %cst_211 : f32 to vector<8x128xf32>
    %311 = arith.maximumf %309, %310 : vector<8x128xf32>
    %c17_212 = arith.constant 17 : index
    %c0_213 = arith.constant 0 : index
    %c0_214 = arith.constant 0 : index
    %312 = vector.load %arg2[%c17_212, %c0_213, %c0_214] : memref<81x8x128xf32, #tpu.memory_space<vmem>>, vector<1x8x128xf32>
    %313 = vector.shape_cast %312 : vector<1x8x128xf32> to vector<8x128xf32>
    %314 = vector.shape_cast %311 : vector<8x128xf32> to vector<1x8x128xf32>
    tpu.vector_store %arg2[%c17_212, %c0_213, %c0_214], %314 {strides = array<i32>} : memref<81x8x128xf32, #tpu.memory_space<vmem>>, vector<1x8x128xf32>,
    %cst_215 = arith.constant 1.000000e+00 : f32
    %315 = vector.broadcast %cst_215 : f32 to vector<8x128xf32>
    %316 = arith.subf %315, %124 : vector<8x128xf32>
    %317 = arith.minimumf %140, %316 : vector<8x128xf32>
    %cst_216 = arith.constant 1.000000e+00 : f32
    %318 = vector.broadcast %cst_216 : f32 to vector<8x128xf32>
    %319 = arith.subf %318, %317 : vector<8x128xf32>
    %c18_217 = arith.constant 18 : index
    %c0_218 = arith.constant 0 : index
    %c0_219 = arith.constant 0 : index
    %320 = vector.load %arg1[%c18_217, %c0_218, %c0_219] : memref<81x8x128xf32, #tpu.memory_space<vmem>>, vector<1x8x128xf32>
    %321 = vector.shape_cast %320 : vector<1x8x128xf32> to vector<8x128xf32>
    %322 = arith.minimumf %321, %319 : vector<8x128xf32>
    %cst_220 = arith.constant 0.000000e+00 : f32
    %323 = vector.broadcast %cst_220 : f32 to vector<8x128xf32>
    %324 = arith.maximumf %322, %323 : vector<8x128xf32>
    %c18_221 = arith.constant 18 : index
    %c0_222 = arith.constant 0 : index
    %c0_223 = arith.constant 0 : index
    %325 = vector.load %arg2[%c18_221, %c0_222, %c0_223] : memref<81x8x128xf32, #tpu.memory_space<vmem>>, vector<1x8x128xf32>
    %326 = vector.shape_cast %325 : vector<1x8x128xf32> to vector<8x128xf32>
    %327 = vector.shape_cast %324 : vector<8x128xf32> to vector<1x8x128xf32>
    tpu.vector_store %arg2[%c18_221, %c0_222, %c0_223], %327 {strides = array<i32>} : memref<81x8x128xf32, #tpu.memory_space<vmem>>, vector<1x8x128xf32>,
    %c19_224 = arith.constant 19 : index
    %c0_225 = arith.constant 0 : index
    %c0_226 = arith.constant 0 : index
    %328 = vector.load %arg1[%c19_224, %c0_225, %c0_226] : memref<81x8x128xf32, #tpu.memory_space<vmem>>, vector<1x8x128xf32>
    %329 = vector.shape_cast %328 : vector<1x8x128xf32> to vector<8x128xf32>
    %330 = arith.minimumf %329, %319 : vector<8x128xf32>
    %cst_227 = arith.constant 0.000000e+00 : f32
    %331 = vector.broadcast %cst_227 : f32 to vector<8x128xf32>
    %332 = arith.maximumf %330, %331 : vector<8x128xf32>
    %c19_228 = arith.constant 19 : index
    %c0_229 = arith.constant 0 : index
    %c0_230 = arith.constant 0 : index
    %333 = vector.load %arg2[%c19_228, %c0_229, %c0_230] : memref<81x8x128xf32, #tpu.memory_space<vmem>>, vector<1x8x128xf32>
    %334 = vector.shape_cast %333 : vector<1x8x128xf32> to vector<8x128xf32>
    %335 = vector.shape_cast %332 : vector<8x128xf32> to vector<1x8x128xf32>
    tpu.vector_store %arg2[%c19_228, %c0_229, %c0_230], %335 {strides = array<i32>} : memref<81x8x128xf32, #tpu.memory_space<vmem>>, vector<1x8x128xf32>,
    %c20_231 = arith.constant 20 : index
    %c0_232 = arith.constant 0 : index
    %c0_233 = arith.constant 0 : index
    %336 = vector.load %arg1[%c20_231, %c0_232, %c0_233] : memref<81x8x128xf32, #tpu.memory_space<vmem>>, vector<1x8x128xf32>
    %337 = vector.shape_cast %336 : vector<1x8x128xf32> to vector<8x128xf32>
    %338 = arith.minimumf %337, %319 : vector<8x128xf32>
    %cst_234 = arith.constant 0.000000e+00 : f32
    %339 = vector.broadcast %cst_234 : f32 to vector<8x128xf32>
    %340 = arith.maximumf %338, %339 : vector<8x128xf32>
    %c20_235 = arith.constant 20 : index
    %c0_236 = arith.constant 0 : index
    %c0_237 = arith.constant 0 : index
    %341 = vector.load %arg2[%c20_235, %c0_236, %c0_237] : memref<81x8x128xf32, #tpu.memory_space<vmem>>, vector<1x8x128xf32>
    %342 = vector.shape_cast %341 : vector<1x8x128xf32> to vector<8x128xf32>
    %343 = vector.shape_cast %340 : vector<8x128xf32> to vector<1x8x128xf32>
    tpu.vector_store %arg2[%c20_235, %c0_236, %c0_237], %343 {strides = array<i32>} : memref<81x8x128xf32, #tpu.memory_space<vmem>>, vector<1x8x128xf32>,
    %cst_238 = arith.constant 1.000000e+00 : f32
    %344 = vector.broadcast %cst_238 : f32 to vector<8x128xf32>
    %345 = arith.subf %344, %129 : vector<8x128xf32>
    %346 = arith.minimumf %140, %345 : vector<8x128xf32>
    %cst_239 = arith.constant 1.000000e+00 : f32
    %347 = vector.broadcast %cst_239 : f32 to vector<8x128xf32>
    %348 = arith.subf %347, %346 : vector<8x128xf32>
    %c21_240 = arith.constant 21 : index
    %c0_241 = arith.constant 0 : index
    %c0_242 = arith.constant 0 : index
    %349 = vector.load %arg1[%c21_240, %c0_241, %c0_242] : memref<81x8x128xf32, #tpu.memory_space<vmem>>, vector<1x8x128xf32>
    %350 = vector.shape_cast %349 : vector<1x8x128xf32> to vector<8x128xf32>
    %351 = arith.minimumf %350, %348 : vector<8x128xf32>
    %cst_243 = arith.constant 0.000000e+00 : f32
    %352 = vector.broadcast %cst_243 : f32 to vector<8x128xf32>
    %353 = arith.maximumf %351, %352 : vector<8x128xf32>
    %c21_244 = arith.constant 21 : index
    %c0_245 = arith.constant 0 : index
    %c0_246 = arith.constant 0 : index
    %354 = vector.load %arg2[%c21_244, %c0_245, %c0_246] : memref<81x8x128xf32, #tpu.memory_space<vmem>>, vector<1x8x128xf32>
    %355 = vector.shape_cast %354 : vector<1x8x128xf32> to vector<8x128xf32>
    %356 = vector.shape_cast %353 : vector<8x128xf32> to vector<1x8x128xf32>
    tpu.vector_store %arg2[%c21_244, %c0_245, %c0_246], %356 {strides = array<i32>} : memref<81x8x128xf32, #tpu.memory_space<vmem>>, vector<1x8x128xf32>,
    %c22_247 = arith.constant 22 : index
    %c0_248 = arith.constant 0 : index
    %c0_249 = arith.constant 0 : index
    %357 = vector.load %arg1[%c22_247, %c0_248, %c0_249] : memref<81x8x128xf32, #tpu.memory_space<vmem>>, vector<1x8x128xf32>
    %358 = vector.shape_cast %357 : vector<1x8x128xf32> to vector<8x128xf32>
    %359 = arith.minimumf %358, %348 : vector<8x128xf32>
    %cst_250 = arith.constant 0.000000e+00 : f32
    %360 = vector.broadcast %cst_250 : f32 to vector<8x128xf32>
    %361 = arith.maximumf %359, %360 : vector<8x128xf32>
    %c22_251 = arith.constant 22 : index
    %c0_252 = arith.constant 0 : index
    %c0_253 = arith.constant 0 : index
    %362 = vector.load %arg2[%c22_251, %c0_252, %c0_253] : memref<81x8x128xf32, #tpu.memory_space<vmem>>, vector<1x8x128xf32>
    %363 = vector.shape_cast %362 : vector<1x8x128xf32> to vector<8x128xf32>
    %364 = vector.shape_cast %361 : vector<8x128xf32> to vector<1x8x128xf32>
    tpu.vector_store %arg2[%c22_251, %c0_252, %c0_253], %364 {strides = array<i32>} : memref<81x8x128xf32, #tpu.memory_space<vmem>>, vector<1x8x128xf32>,
    %c23_254 = arith.constant 23 : index
    %c0_255 = arith.constant 0 : index
    %c0_256 = arith.constant 0 : index
    %365 = vector.load %arg1[%c23_254, %c0_255, %c0_256] : memref<81x8x128xf32, #tpu.memory_space<vmem>>, vector<1x8x128xf32>
    %366 = vector.shape_cast %365 : vector<1x8x128xf32> to vector<8x128xf32>
    %367 = arith.minimumf %366, %348 : vector<8x128xf32>
    %cst_257 = arith.constant 0.000000e+00 : f32
    %368 = vector.broadcast %cst_257 : f32 to vector<8x128xf32>
    %369 = arith.maximumf %367, %368 : vector<8x128xf32>
    %c23_258 = arith.constant 23 : index
    %c0_259 = arith.constant 0 : index
    %c0_260 = arith.constant 0 : index
    %370 = vector.load %arg2[%c23_258, %c0_259, %c0_260] : memref<81x8x128xf32, #tpu.memory_space<vmem>>, vector<1x8x128xf32>
    %371 = vector.shape_cast %370 : vector<1x8x128xf32> to vector<8x128xf32>
    %372 = vector.shape_cast %369 : vector<8x128xf32> to vector<1x8x128xf32>
    tpu.vector_store %arg2[%c23_258, %c0_259, %c0_260], %372 {strides = array<i32>} : memref<81x8x128xf32, #tpu.memory_space<vmem>>, vector<1x8x128xf32>,
    %cst_261 = arith.constant 1.000000e+00 : f32
    %373 = vector.broadcast %cst_261 : f32 to vector<8x128xf32>
    %374 = arith.subf %373, %134 : vector<8x128xf32>
    %375 = arith.minimumf %140, %374 : vector<8x128xf32>
    %cst_262 = arith.constant 1.000000e+00 : f32
    %376 = vector.broadcast %cst_262 : f32 to vector<8x128xf32>
    %377 = arith.subf %376, %375 : vector<8x128xf32>
    %c24_263 = arith.constant 24 : index
    %c0_264 = arith.constant 0 : index
    %c0_265 = arith.constant 0 : index
    %378 = vector.load %arg1[%c24_263, %c0_264, %c0_265] : memref<81x8x128xf32, #tpu.memory_space<vmem>>, vector<1x8x128xf32>
    %379 = vector.shape_cast %378 : vector<1x8x128xf32> to vector<8x128xf32>
    %380 = arith.minimumf %379, %377 : vector<8x128xf32>
    %cst_266 = arith.constant 0.000000e+00 : f32
    %381 = vector.broadcast %cst_266 : f32 to vector<8x128xf32>
    %382 = arith.maximumf %380, %381 : vector<8x128xf32>
    %c24_267 = arith.constant 24 : index
    %c0_268 = arith.constant 0 : index
    %c0_269 = arith.constant 0 : index
    %383 = vector.load %arg2[%c24_267, %c0_268, %c0_269] : memref<81x8x128xf32, #tpu.memory_space<vmem>>, vector<1x8x128xf32>
    %384 = vector.shape_cast %383 : vector<1x8x128xf32> to vector<8x128xf32>
    %385 = vector.shape_cast %382 : vector<8x128xf32> to vector<1x8x128xf32>
    tpu.vector_store %arg2[%c24_267, %c0_268, %c0_269], %385 {strides = array<i32>} : memref<81x8x128xf32, #tpu.memory_space<vmem>>, vector<1x8x128xf32>,
    %c25_270 = arith.constant 25 : index
    %c0_271 = arith.constant 0 : index
    %c0_272 = arith.constant 0 : index
    %386 = vector.load %arg1[%c25_270, %c0_271, %c0_272] : memref<81x8x128xf32, #tpu.memory_space<vmem>>, vector<1x8x128xf32>
    %387 = vector.shape_cast %386 : vector<1x8x128xf32> to vector<8x128xf32>
    %388 = arith.minimumf %387, %377 : vector<8x128xf32>
    %cst_273 = arith.constant 0.000000e+00 : f32
    %389 = vector.broadcast %cst_273 : f32 to vector<8x128xf32>
    %390 = arith.maximumf %388, %389 : vector<8x128xf32>
    %c25_274 = arith.constant 25 : index
    %c0_275 = arith.constant 0 : index
    %c0_276 = arith.constant 0 : index
    %391 = vector.load %arg2[%c25_274, %c0_275, %c0_276] : memref<81x8x128xf32, #tpu.memory_space<vmem>>, vector<1x8x128xf32>
    %392 = vector.shape_cast %391 : vector<1x8x128xf32> to vector<8x128xf32>
    %393 = vector.shape_cast %390 : vector<8x128xf32> to vector<1x8x128xf32>
    tpu.vector_store %arg2[%c25_274, %c0_275, %c0_276], %393 {strides = array<i32>} : memref<81x8x128xf32, #tpu.memory_space<vmem>>, vector<1x8x128xf32>,
    %c26_277 = arith.constant 26 : index
    %c0_278 = arith.constant 0 : index
    %c0_279 = arith.constant 0 : index
    %394 = vector.load %arg1[%c26_277, %c0_278, %c0_279] : memref<81x8x128xf32, #tpu.memory_space<vmem>>, vector<1x8x128xf32>
    %395 = vector.shape_cast %394 : vector<1x8x128xf32> to vector<8x128xf32>
    %396 = arith.minimumf %395, %377 : vector<8x128xf32>
    %cst_280 = arith.constant 0.000000e+00 : f32
    %397 = vector.broadcast %cst_280 : f32 to vector<8x128xf32>
    %398 = arith.maximumf %396, %397 : vector<8x128xf32>
    %c26_281 = arith.constant 26 : index
    %c0_282 = arith.constant 0 : index
    %c0_283 = arith.constant 0 : index
    %399 = vector.load %arg2[%c26_281, %c0_282, %c0_283] : memref<81x8x128xf32, #tpu.memory_space<vmem>>, vector<1x8x128xf32>
    %400 = vector.shape_cast %399 : vector<1x8x128xf32> to vector<8x128xf32>
    %401 = vector.shape_cast %398 : vector<8x128xf32> to vector<1x8x128xf32>
    tpu.vector_store %arg2[%c26_281, %c0_282, %c0_283], %401 {strides = array<i32>} : memref<81x8x128xf32, #tpu.memory_space<vmem>>, vector<1x8x128xf32>,
    %c27 = arith.constant 27 : index
    %c0_284 = arith.constant 0 : index
    %c0_285 = arith.constant 0 : index
    %402 = vector.load %arg1[%c27, %c0_284, %c0_285] : memref<81x8x128xf32, #tpu.memory_space<vmem>>, vector<1x8x128xf32>
    %403 = vector.shape_cast %402 : vector<1x8x128xf32> to vector<8x128xf32>
    %c28 = arith.constant 28 : index
    %c0_286 = arith.constant 0 : index
    %c0_287 = arith.constant 0 : index
    %404 = vector.load %arg1[%c28, %c0_286, %c0_287] : memref<81x8x128xf32, #tpu.memory_space<vmem>>, vector<1x8x128xf32>
    %405 = vector.shape_cast %404 : vector<1x8x128xf32> to vector<8x128xf32>
    %c29 = arith.constant 29 : index
    %c0_288 = arith.constant 0 : index
    %c0_289 = arith.constant 0 : index
    %406 = vector.load %arg1[%c29, %c0_288, %c0_289] : memref<81x8x128xf32, #tpu.memory_space<vmem>>, vector<1x8x128xf32>
    %407 = vector.shape_cast %406 : vector<1x8x128xf32> to vector<8x128xf32>
    %408 = arith.maximumf %403, %405 : vector<8x128xf32>
    %409 = arith.maximumf %408, %407 : vector<8x128xf32>
    %c30 = arith.constant 30 : index
    %c0_290 = arith.constant 0 : index
    %c0_291 = arith.constant 0 : index
    %410 = vector.load %arg1[%c30, %c0_290, %c0_291] : memref<81x8x128xf32, #tpu.memory_space<vmem>>, vector<1x8x128xf32>
    %411 = vector.shape_cast %410 : vector<1x8x128xf32> to vector<8x128xf32>
    %c31 = arith.constant 31 : index
    %c0_292 = arith.constant 0 : index
    %c0_293 = arith.constant 0 : index
    %412 = vector.load %arg1[%c31, %c0_292, %c0_293] : memref<81x8x128xf32, #tpu.memory_space<vmem>>, vector<1x8x128xf32>
    %413 = vector.shape_cast %412 : vector<1x8x128xf32> to vector<8x128xf32>
    %c32 = arith.constant 32 : index
    %c0_294 = arith.constant 0 : index
    %c0_295 = arith.constant 0 : index
    %414 = vector.load %arg1[%c32, %c0_294, %c0_295] : memref<81x8x128xf32, #tpu.memory_space<vmem>>, vector<1x8x128xf32>
    %415 = vector.shape_cast %414 : vector<1x8x128xf32> to vector<8x128xf32>
    %416 = arith.maximumf %411, %413 : vector<8x128xf32>
    %417 = arith.maximumf %416, %415 : vector<8x128xf32>
    %c33 = arith.constant 33 : index
    %c0_296 = arith.constant 0 : index
    %c0_297 = arith.constant 0 : index
    %418 = vector.load %arg1[%c33, %c0_296, %c0_297] : memref<81x8x128xf32, #tpu.memory_space<vmem>>, vector<1x8x128xf32>
    %419 = vector.shape_cast %418 : vector<1x8x128xf32> to vector<8x128xf32>
    %c34 = arith.constant 34 : index
    %c0_298 = arith.constant 0 : index
    %c0_299 = arith.constant 0 : index
    %420 = vector.load %arg1[%c34, %c0_298, %c0_299] : memref<81x8x128xf32, #tpu.memory_space<vmem>>, vector<1x8x128xf32>
    %421 = vector.shape_cast %420 : vector<1x8x128xf32> to vector<8x128xf32>
    %c35 = arith.constant 35 : index
    %c0_300 = arith.constant 0 : index
    %c0_301 = arith.constant 0 : index
    %422 = vector.load %arg1[%c35, %c0_300, %c0_301] : memref<81x8x128xf32, #tpu.memory_space<vmem>>, vector<1x8x128xf32>
    %423 = vector.shape_cast %422 : vector<1x8x128xf32> to vector<8x128xf32>
    %424 = arith.maximumf %419, %421 : vector<8x128xf32>
    %425 = arith.maximumf %424, %423 : vector<8x128xf32>
    %c36 = arith.constant 36 : index
    %c0_302 = arith.constant 0 : index
    %c0_303 = arith.constant 0 : index
    %426 = vector.load %arg1[%c36, %c0_302, %c0_303] : memref<81x8x128xf32, #tpu.memory_space<vmem>>, vector<1x8x128xf32>
    %427 = vector.shape_cast %426 : vector<1x8x128xf32> to vector<8x128xf32>
    %c37 = arith.constant 37 : index
    %c0_304 = arith.constant 0 : index
    %c0_305 = arith.constant 0 : index
    %428 = vector.load %arg1[%c37, %c0_304, %c0_305] : memref<81x8x128xf32, #tpu.memory_space<vmem>>, vector<1x8x128xf32>
    %429 = vector.shape_cast %428 : vector<1x8x128xf32> to vector<8x128xf32>
    %c38 = arith.constant 38 : index
    %c0_306 = arith.constant 0 : index
    %c0_307 = arith.constant 0 : index
    %430 = vector.load %arg1[%c38, %c0_306, %c0_307] : memref<81x8x128xf32, #tpu.memory_space<vmem>>, vector<1x8x128xf32>
    %431 = vector.shape_cast %430 : vector<1x8x128xf32> to vector<8x128xf32>
    %432 = arith.maximumf %427, %429 : vector<8x128xf32>
    %433 = arith.maximumf %432, %431 : vector<8x128xf32>
    %c39 = arith.constant 39 : index
    %c0_308 = arith.constant 0 : index
    %c0_309 = arith.constant 0 : index
    %434 = vector.load %arg1[%c39, %c0_308, %c0_309] : memref<81x8x128xf32, #tpu.memory_space<vmem>>, vector<1x8x128xf32>
    %435 = vector.shape_cast %434 : vector<1x8x128xf32> to vector<8x128xf32>
    %c40 = arith.constant 40 : index
    %c0_310 = arith.constant 0 : index
    %c0_311 = arith.constant 0 : index
    %436 = vector.load %arg1[%c40, %c0_310, %c0_311] : memref<81x8x128xf32, #tpu.memory_space<vmem>>, vector<1x8x128xf32>
    %437 = vector.shape_cast %436 : vector<1x8x128xf32> to vector<8x128xf32>
    %c41 = arith.constant 41 : index
    %c0_312 = arith.constant 0 : index
    %c0_313 = arith.constant 0 : index
    %438 = vector.load %arg1[%c41, %c0_312, %c0_313] : memref<81x8x128xf32, #tpu.memory_space<vmem>>, vector<1x8x128xf32>
    %439 = vector.shape_cast %438 : vector<1x8x128xf32> to vector<8x128xf32>
    %440 = arith.maximumf %435, %437 : vector<8x128xf32>
    %441 = arith.maximumf %440, %439 : vector<8x128xf32>
    %c42 = arith.constant 42 : index
    %c0_314 = arith.constant 0 : index
    %c0_315 = arith.constant 0 : index
    %442 = vector.load %arg1[%c42, %c0_314, %c0_315] : memref<81x8x128xf32, #tpu.memory_space<vmem>>, vector<1x8x128xf32>
    %443 = vector.shape_cast %442 : vector<1x8x128xf32> to vector<8x128xf32>
    %c43 = arith.constant 43 : index
    %c0_316 = arith.constant 0 : index
    %c0_317 = arith.constant 0 : index
    %444 = vector.load %arg1[%c43, %c0_316, %c0_317] : memref<81x8x128xf32, #tpu.memory_space<vmem>>, vector<1x8x128xf32>
    %445 = vector.shape_cast %444 : vector<1x8x128xf32> to vector<8x128xf32>
    %c44 = arith.constant 44 : index
    %c0_318 = arith.constant 0 : index
    %c0_319 = arith.constant 0 : index
    %446 = vector.load %arg1[%c44, %c0_318, %c0_319] : memref<81x8x128xf32, #tpu.memory_space<vmem>>, vector<1x8x128xf32>
    %447 = vector.shape_cast %446 : vector<1x8x128xf32> to vector<8x128xf32>
    %448 = arith.maximumf %443, %445 : vector<8x128xf32>
    %449 = arith.maximumf %448, %447 : vector<8x128xf32>
    %c45 = arith.constant 45 : index
    %c0_320 = arith.constant 0 : index
    %c0_321 = arith.constant 0 : index
    %450 = vector.load %arg1[%c45, %c0_320, %c0_321] : memref<81x8x128xf32, #tpu.memory_space<vmem>>, vector<1x8x128xf32>
    %451 = vector.shape_cast %450 : vector<1x8x128xf32> to vector<8x128xf32>
    %c46 = arith.constant 46 : index
    %c0_322 = arith.constant 0 : index
    %c0_323 = arith.constant 0 : index
    %452 = vector.load %arg1[%c46, %c0_322, %c0_323] : memref<81x8x128xf32, #tpu.memory_space<vmem>>, vector<1x8x128xf32>
    %453 = vector.shape_cast %452 : vector<1x8x128xf32> to vector<8x128xf32>
    %c47 = arith.constant 47 : index
    %c0_324 = arith.constant 0 : index
    %c0_325 = arith.constant 0 : index
    %454 = vector.load %arg1[%c47, %c0_324, %c0_325] : memref<81x8x128xf32, #tpu.memory_space<vmem>>, vector<1x8x128xf32>
    %455 = vector.shape_cast %454 : vector<1x8x128xf32> to vector<8x128xf32>
    %456 = arith.maximumf %451, %453 : vector<8x128xf32>
    %457 = arith.maximumf %456, %455 : vector<8x128xf32>
    %c48 = arith.constant 48 : index
    %c0_326 = arith.constant 0 : index
    %c0_327 = arith.constant 0 : index
    %458 = vector.load %arg1[%c48, %c0_326, %c0_327] : memref<81x8x128xf32, #tpu.memory_space<vmem>>, vector<1x8x128xf32>
    %459 = vector.shape_cast %458 : vector<1x8x128xf32> to vector<8x128xf32>
    %c49 = arith.constant 49 : index
    %c0_328 = arith.constant 0 : index
    %c0_329 = arith.constant 0 : index
    %460 = vector.load %arg1[%c49, %c0_328, %c0_329] : memref<81x8x128xf32, #tpu.memory_space<vmem>>, vector<1x8x128xf32>
    %461 = vector.shape_cast %460 : vector<1x8x128xf32> to vector<8x128xf32>
    %c50 = arith.constant 50 : index
    %c0_330 = arith.constant 0 : index
    %c0_331 = arith.constant 0 : index
    %462 = vector.load %arg1[%c50, %c0_330, %c0_331] : memref<81x8x128xf32, #tpu.memory_space<vmem>>, vector<1x8x128xf32>
    %463 = vector.shape_cast %462 : vector<1x8x128xf32> to vector<8x128xf32>
    %464 = arith.maximumf %459, %461 : vector<8x128xf32>
    %465 = arith.maximumf %464, %463 : vector<8x128xf32>
    %c51 = arith.constant 51 : index
    %c0_332 = arith.constant 0 : index
    %c0_333 = arith.constant 0 : index
    %466 = vector.load %arg1[%c51, %c0_332, %c0_333] : memref<81x8x128xf32, #tpu.memory_space<vmem>>, vector<1x8x128xf32>
    %467 = vector.shape_cast %466 : vector<1x8x128xf32> to vector<8x128xf32>
    %c52 = arith.constant 52 : index
    %c0_334 = arith.constant 0 : index
    %c0_335 = arith.constant 0 : index
    %468 = vector.load %arg1[%c52, %c0_334, %c0_335] : memref<81x8x128xf32, #tpu.memory_space<vmem>>, vector<1x8x128xf32>
    %469 = vector.shape_cast %468 : vector<1x8x128xf32> to vector<8x128xf32>
    %c53 = arith.constant 53 : index
    %c0_336 = arith.constant 0 : index
    %c0_337 = arith.constant 0 : index
    %470 = vector.load %arg1[%c53, %c0_336, %c0_337] : memref<81x8x128xf32, #tpu.memory_space<vmem>>, vector<1x8x128xf32>
    %471 = vector.shape_cast %470 : vector<1x8x128xf32> to vector<8x128xf32>
    %472 = arith.maximumf %467, %469 : vector<8x128xf32>
    %473 = arith.maximumf %472, %471 : vector<8x128xf32>
    %474 = arith.addf %409, %433 : vector<8x128xf32>
    %475 = arith.addf %474, %457 : vector<8x128xf32>
    %cst_338 = arith.constant 2.000000e+00 : f32
    %476 = vector.broadcast %cst_338 : f32 to vector<8x128xf32>
    %477 = arith.subf %476, %475 : vector<8x128xf32>
    %cst_339 = arith.constant 0.000000e+00 : f32
    %478 = vector.broadcast %cst_339 : f32 to vector<8x128xf32>
    %479 = arith.maximumf %477, %478 : vector<8x128xf32>
    %480 = arith.addf %417, %441 : vector<8x128xf32>
    %481 = arith.addf %480, %465 : vector<8x128xf32>
    %cst_340 = arith.constant 2.000000e+00 : f32
    %482 = vector.broadcast %cst_340 : f32 to vector<8x128xf32>
    %483 = arith.subf %482, %481 : vector<8x128xf32>
    %cst_341 = arith.constant 0.000000e+00 : f32
    %484 = vector.broadcast %cst_341 : f32 to vector<8x128xf32>
    %485 = arith.maximumf %483, %484 : vector<8x128xf32>
    %486 = arith.addf %425, %449 : vector<8x128xf32>
    %487 = arith.addf %486, %473 : vector<8x128xf32>
    %cst_342 = arith.constant 2.000000e+00 : f32
    %488 = vector.broadcast %cst_342 : f32 to vector<8x128xf32>
    %489 = arith.subf %488, %487 : vector<8x128xf32>
    %cst_343 = arith.constant 0.000000e+00 : f32
    %490 = vector.broadcast %cst_343 : f32 to vector<8x128xf32>
    %491 = arith.maximumf %489, %490 : vector<8x128xf32>
    %492 = arith.minimumf %409, %479 : vector<8x128xf32>
    %cst_344 = arith.constant 0.000000e+00 : f32
    %cst_345 = arith.constant 1.000000e+00 : f32
    %493 = vector.broadcast %cst_344 : f32 to vector<8x128xf32>
    %494 = arith.maximumf %493, %492 : vector<8x128xf32>
    %495 = vector.broadcast %cst_345 : f32 to vector<8x128xf32>
    %496 = arith.minimumf %495, %494 : vector<8x128xf32>
    %497 = arith.minimumf %417, %485 : vector<8x128xf32>
    %cst_346 = arith.constant 0.000000e+00 : f32
    %cst_347 = arith.constant 1.000000e+00 : f32
    %498 = vector.broadcast %cst_346 : f32 to vector<8x128xf32>
    %499 = arith.maximumf %498, %497 : vector<8x128xf32>
    %500 = vector.broadcast %cst_347 : f32 to vector<8x128xf32>
    %501 = arith.minimumf %500, %499 : vector<8x128xf32>
    %502 = arith.minimumf %425, %491 : vector<8x128xf32>
    %cst_348 = arith.constant 0.000000e+00 : f32
    %cst_349 = arith.constant 1.000000e+00 : f32
    %503 = vector.broadcast %cst_348 : f32 to vector<8x128xf32>
    %504 = arith.maximumf %503, %502 : vector<8x128xf32>
    %505 = vector.broadcast %cst_349 : f32 to vector<8x128xf32>
    %506 = arith.minimumf %505, %504 : vector<8x128xf32>
    %507 = arith.minimumf %433, %479 : vector<8x128xf32>
    %cst_350 = arith.constant 0.000000e+00 : f32
    %cst_351 = arith.constant 1.000000e+00 : f32
    %508 = vector.broadcast %cst_350 : f32 to vector<8x128xf32>
    %509 = arith.maximumf %508, %507 : vector<8x128xf32>
    %510 = vector.broadcast %cst_351 : f32 to vector<8x128xf32>
    %511 = arith.minimumf %510, %509 : vector<8x128xf32>
    %512 = arith.minimumf %441, %485 : vector<8x128xf32>
    %cst_352 = arith.constant 0.000000e+00 : f32
    %cst_353 = arith.constant 1.000000e+00 : f32
    %513 = vector.broadcast %cst_352 : f32 to vector<8x128xf32>
    %514 = arith.maximumf %513, %512 : vector<8x128xf32>
    %515 = vector.broadcast %cst_353 : f32 to vector<8x128xf32>
    %516 = arith.minimumf %515, %514 : vector<8x128xf32>
    %517 = arith.minimumf %449, %491 : vector<8x128xf32>
    %cst_354 = arith.constant 0.000000e+00 : f32
    %cst_355 = arith.constant 1.000000e+00 : f32
    %518 = vector.broadcast %cst_354 : f32 to vector<8x128xf32>
    %519 = arith.maximumf %518, %517 : vector<8x128xf32>
    %520 = vector.broadcast %cst_355 : f32 to vector<8x128xf32>
    %521 = arith.minimumf %520, %519 : vector<8x128xf32>
    %522 = arith.minimumf %457, %479 : vector<8x128xf32>
    %cst_356 = arith.constant 0.000000e+00 : f32
    %cst_357 = arith.constant 1.000000e+00 : f32
    %523 = vector.broadcast %cst_356 : f32 to vector<8x128xf32>
    %524 = arith.maximumf %523, %522 : vector<8x128xf32>
    %525 = vector.broadcast %cst_357 : f32 to vector<8x128xf32>
    %526 = arith.minimumf %525, %524 : vector<8x128xf32>
    %527 = arith.minimumf %465, %485 : vector<8x128xf32>
    %cst_358 = arith.constant 0.000000e+00 : f32
    %cst_359 = arith.constant 1.000000e+00 : f32
    %528 = vector.broadcast %cst_358 : f32 to vector<8x128xf32>
    %529 = arith.maximumf %528, %527 : vector<8x128xf32>
    %530 = vector.broadcast %cst_359 : f32 to vector<8x128xf32>
    %531 = arith.minimumf %530, %529 : vector<8x128xf32>
    %532 = arith.minimumf %473, %491 : vector<8x128xf32>
    %cst_360 = arith.constant 0.000000e+00 : f32
    %cst_361 = arith.constant 1.000000e+00 : f32
    %533 = vector.broadcast %cst_360 : f32 to vector<8x128xf32>
    %534 = arith.maximumf %533, %532 : vector<8x128xf32>
    %535 = vector.broadcast %cst_361 : f32 to vector<8x128xf32>
    %536 = arith.minimumf %535, %534 : vector<8x128xf32>
    %537 = arith.maximumf %496, %501 : vector<8x128xf32>
    %538 = arith.maximumf %537, %506 : vector<8x128xf32>
    %539 = arith.maximumf %511, %516 : vector<8x128xf32>
    %540 = arith.maximumf %539, %521 : vector<8x128xf32>
    %541 = arith.maximumf %526, %531 : vector<8x128xf32>
    %542 = arith.maximumf %541, %536 : vector<8x128xf32>
    %cst_362 = arith.constant 1.000000e+00 : f32
    %543 = vector.broadcast %cst_362 : f32 to vector<8x128xf32>
    %544 = arith.subf %543, %496 : vector<8x128xf32>
    %545 = arith.minimumf %538, %544 : vector<8x128xf32>
    %cst_363 = arith.constant 1.000000e+00 : f32
    %546 = vector.broadcast %cst_363 : f32 to vector<8x128xf32>
    %547 = arith.subf %546, %545 : vector<8x128xf32>
    %c27_364 = arith.constant 27 : index
    %c0_365 = arith.constant 0 : index
    %c0_366 = arith.constant 0 : index
    %548 = vector.load %arg1[%c27_364, %c0_365, %c0_366] : memref<81x8x128xf32, #tpu.memory_space<vmem>>, vector<1x8x128xf32>
    %549 = vector.shape_cast %548 : vector<1x8x128xf32> to vector<8x128xf32>
    %550 = arith.minimumf %549, %547 : vector<8x128xf32>
    %cst_367 = arith.constant 0.000000e+00 : f32
    %551 = vector.broadcast %cst_367 : f32 to vector<8x128xf32>
    %552 = arith.maximumf %550, %551 : vector<8x128xf32>
    %c27_368 = arith.constant 27 : index
    %c0_369 = arith.constant 0 : index
    %c0_370 = arith.constant 0 : index
    %553 = vector.load %arg2[%c27_368, %c0_369, %c0_370] : memref<81x8x128xf32, #tpu.memory_space<vmem>>, vector<1x8x128xf32>
    %554 = vector.shape_cast %553 : vector<1x8x128xf32> to vector<8x128xf32>
    %555 = vector.shape_cast %552 : vector<8x128xf32> to vector<1x8x128xf32>
    tpu.vector_store %arg2[%c27_368, %c0_369, %c0_370], %555 {strides = array<i32>} : memref<81x8x128xf32, #tpu.memory_space<vmem>>, vector<1x8x128xf32>,
    %c28_371 = arith.constant 28 : index
    %c0_372 = arith.constant 0 : index
    %c0_373 = arith.constant 0 : index
    %556 = vector.load %arg1[%c28_371, %c0_372, %c0_373] : memref<81x8x128xf32, #tpu.memory_space<vmem>>, vector<1x8x128xf32>
    %557 = vector.shape_cast %556 : vector<1x8x128xf32> to vector<8x128xf32>
    %558 = arith.minimumf %557, %547 : vector<8x128xf32>
    %cst_374 = arith.constant 0.000000e+00 : f32
    %559 = vector.broadcast %cst_374 : f32 to vector<8x128xf32>
    %560 = arith.maximumf %558, %559 : vector<8x128xf32>
    %c28_375 = arith.constant 28 : index
    %c0_376 = arith.constant 0 : index
    %c0_377 = arith.constant 0 : index
    %561 = vector.load %arg2[%c28_375, %c0_376, %c0_377] : memref<81x8x128xf32, #tpu.memory_space<vmem>>, vector<1x8x128xf32>
    %562 = vector.shape_cast %561 : vector<1x8x128xf32> to vector<8x128xf32>
    %563 = vector.shape_cast %560 : vector<8x128xf32> to vector<1x8x128xf32>
    tpu.vector_store %arg2[%c28_375, %c0_376, %c0_377], %563 {strides = array<i32>} : memref<81x8x128xf32, #tpu.memory_space<vmem>>, vector<1x8x128xf32>,
    %c29_378 = arith.constant 29 : index
    %c0_379 = arith.constant 0 : index
    %c0_380 = arith.constant 0 : index
    %564 = vector.load %arg1[%c29_378, %c0_379, %c0_380] : memref<81x8x128xf32, #tpu.memory_space<vmem>>, vector<1x8x128xf32>
    %565 = vector.shape_cast %564 : vector<1x8x128xf32> to vector<8x128xf32>
    %566 = arith.minimumf %565, %547 : vector<8x128xf32>
    %cst_381 = arith.constant 0.000000e+00 : f32
    %567 = vector.broadcast %cst_381 : f32 to vector<8x128xf32>
    %568 = arith.maximumf %566, %567 : vector<8x128xf32>
    %c29_382 = arith.constant 29 : index
    %c0_383 = arith.constant 0 : index
    %c0_384 = arith.constant 0 : index
    %569 = vector.load %arg2[%c29_382, %c0_383, %c0_384] : memref<81x8x128xf32, #tpu.memory_space<vmem>>, vector<1x8x128xf32>
    %570 = vector.shape_cast %569 : vector<1x8x128xf32> to vector<8x128xf32>
    %571 = vector.shape_cast %568 : vector<8x128xf32> to vector<1x8x128xf32>
    tpu.vector_store %arg2[%c29_382, %c0_383, %c0_384], %571 {strides = array<i32>} : memref<81x8x128xf32, #tpu.memory_space<vmem>>, vector<1x8x128xf32>,
    %cst_385 = arith.constant 1.000000e+00 : f32
    %572 = vector.broadcast %cst_385 : f32 to vector<8x128xf32>
    %573 = arith.subf %572, %501 : vector<8x128xf32>
    %574 = arith.minimumf %538, %573 : vector<8x128xf32>
    %cst_386 = arith.constant 1.000000e+00 : f32
    %575 = vector.broadcast %cst_386 : f32 to vector<8x128xf32>
    %576 = arith.subf %575, %574 : vector<8x128xf32>
    %c30_387 = arith.constant 30 : index
    %c0_388 = arith.constant 0 : index
    %c0_389 = arith.constant 0 : index
    %577 = vector.load %arg1[%c30_387, %c0_388, %c0_389] : memref<81x8x128xf32, #tpu.memory_space<vmem>>, vector<1x8x128xf32>
    %578 = vector.shape_cast %577 : vector<1x8x128xf32> to vector<8x128xf32>
    %579 = arith.minimumf %578, %576 : vector<8x128xf32>
    %cst_390 = arith.constant 0.000000e+00 : f32
    %580 = vector.broadcast %cst_390 : f32 to vector<8x128xf32>
    %581 = arith.maximumf %579, %580 : vector<8x128xf32>
    %c30_391 = arith.constant 30 : index
    %c0_392 = arith.constant 0 : index
    %c0_393 = arith.constant 0 : index
    %582 = vector.load %arg2[%c30_391, %c0_392, %c0_393] : memref<81x8x128xf32, #tpu.memory_space<vmem>>, vector<1x8x128xf32>
    %583 = vector.shape_cast %582 : vector<1x8x128xf32> to vector<8x128xf32>
    %584 = vector.shape_cast %581 : vector<8x128xf32> to vector<1x8x128xf32>
    tpu.vector_store %arg2[%c30_391, %c0_392, %c0_393], %584 {strides = array<i32>} : memref<81x8x128xf32, #tpu.memory_space<vmem>>, vector<1x8x128xf32>,
    %c31_394 = arith.constant 31 : index
    %c0_395 = arith.constant 0 : index
    %c0_396 = arith.constant 0 : index
    %585 = vector.load %arg1[%c31_394, %c0_395, %c0_396] : memref<81x8x128xf32, #tpu.memory_space<vmem>>, vector<1x8x128xf32>
    %586 = vector.shape_cast %585 : vector<1x8x128xf32> to vector<8x128xf32>
    %587 = arith.minimumf %586, %576 : vector<8x128xf32>
    %cst_397 = arith.constant 0.000000e+00 : f32
    %588 = vector.broadcast %cst_397 : f32 to vector<8x128xf32>
    %589 = arith.maximumf %587, %588 : vector<8x128xf32>
    %c31_398 = arith.constant 31 : index
    %c0_399 = arith.constant 0 : index
    %c0_400 = arith.constant 0 : index
    %590 = vector.load %arg2[%c31_398, %c0_399, %c0_400] : memref<81x8x128xf32, #tpu.memory_space<vmem>>, vector<1x8x128xf32>
    %591 = vector.shape_cast %590 : vector<1x8x128xf32> to vector<8x128xf32>
    %592 = vector.shape_cast %589 : vector<8x128xf32> to vector<1x8x128xf32>
    tpu.vector_store %arg2[%c31_398, %c0_399, %c0_400], %592 {strides = array<i32>} : memref<81x8x128xf32, #tpu.memory_space<vmem>>, vector<1x8x128xf32>,
    %c32_401 = arith.constant 32 : index
    %c0_402 = arith.constant 0 : index
    %c0_403 = arith.constant 0 : index
    %593 = vector.load %arg1[%c32_401, %c0_402, %c0_403] : memref<81x8x128xf32, #tpu.memory_space<vmem>>, vector<1x8x128xf32>
    %594 = vector.shape_cast %593 : vector<1x8x128xf32> to vector<8x128xf32>
    %595 = arith.minimumf %594, %576 : vector<8x128xf32>
    %cst_404 = arith.constant 0.000000e+00 : f32
    %596 = vector.broadcast %cst_404 : f32 to vector<8x128xf32>
    %597 = arith.maximumf %595, %596 : vector<8x128xf32>
    %c32_405 = arith.constant 32 : index
    %c0_406 = arith.constant 0 : index
    %c0_407 = arith.constant 0 : index
    %598 = vector.load %arg2[%c32_405, %c0_406, %c0_407] : memref<81x8x128xf32, #tpu.memory_space<vmem>>, vector<1x8x128xf32>
    %599 = vector.shape_cast %598 : vector<1x8x128xf32> to vector<8x128xf32>
    %600 = vector.shape_cast %597 : vector<8x128xf32> to vector<1x8x128xf32>
    tpu.vector_store %arg2[%c32_405, %c0_406, %c0_407], %600 {strides = array<i32>} : memref<81x8x128xf32, #tpu.memory_space<vmem>>, vector<1x8x128xf32>,
    %cst_408 = arith.constant 1.000000e+00 : f32
    %601 = vector.broadcast %cst_408 : f32 to vector<8x128xf32>
    %602 = arith.subf %601, %506 : vector<8x128xf32>
    %603 = arith.minimumf %538, %602 : vector<8x128xf32>
    %cst_409 = arith.constant 1.000000e+00 : f32
    %604 = vector.broadcast %cst_409 : f32 to vector<8x128xf32>
    %605 = arith.subf %604, %603 : vector<8x128xf32>
    %c33_410 = arith.constant 33 : index
    %c0_411 = arith.constant 0 : index
    %c0_412 = arith.constant 0 : index
    %606 = vector.load %arg1[%c33_410, %c0_411, %c0_412] : memref<81x8x128xf32, #tpu.memory_space<vmem>>, vector<1x8x128xf32>
    %607 = vector.shape_cast %606 : vector<1x8x128xf32> to vector<8x128xf32>
    %608 = arith.minimumf %607, %605 : vector<8x128xf32>
    %cst_413 = arith.constant 0.000000e+00 : f32
    %609 = vector.broadcast %cst_413 : f32 to vector<8x128xf32>
    %610 = arith.maximumf %608, %609 : vector<8x128xf32>
    %c33_414 = arith.constant 33 : index
    %c0_415 = arith.constant 0 : index
    %c0_416 = arith.constant 0 : index
    %611 = vector.load %arg2[%c33_414, %c0_415, %c0_416] : memref<81x8x128xf32, #tpu.memory_space<vmem>>, vector<1x8x128xf32>
    %612 = vector.shape_cast %611 : vector<1x8x128xf32> to vector<8x128xf32>
    %613 = vector.shape_cast %610 : vector<8x128xf32> to vector<1x8x128xf32>
    tpu.vector_store %arg2[%c33_414, %c0_415, %c0_416], %613 {strides = array<i32>} : memref<81x8x128xf32, #tpu.memory_space<vmem>>, vector<1x8x128xf32>,
    %c34_417 = arith.constant 34 : index
    %c0_418 = arith.constant 0 : index
    %c0_419 = arith.constant 0 : index
    %614 = vector.load %arg1[%c34_417, %c0_418, %c0_419] : memref<81x8x128xf32, #tpu.memory_space<vmem>>, vector<1x8x128xf32>
    %615 = vector.shape_cast %614 : vector<1x8x128xf32> to vector<8x128xf32>
    %616 = arith.minimumf %615, %605 : vector<8x128xf32>
    %cst_420 = arith.constant 0.000000e+00 : f32
    %617 = vector.broadcast %cst_420 : f32 to vector<8x128xf32>
    %618 = arith.maximumf %616, %617 : vector<8x128xf32>
    %c34_421 = arith.constant 34 : index
    %c0_422 = arith.constant 0 : index
    %c0_423 = arith.constant 0 : index
    %619 = vector.load %arg2[%c34_421, %c0_422, %c0_423] : memref<81x8x128xf32, #tpu.memory_space<vmem>>, vector<1x8x128xf32>
    %620 = vector.shape_cast %619 : vector<1x8x128xf32> to vector<8x128xf32>
    %621 = vector.shape_cast %618 : vector<8x128xf32> to vector<1x8x128xf32>
    tpu.vector_store %arg2[%c34_421, %c0_422, %c0_423], %621 {strides = array<i32>} : memref<81x8x128xf32, #tpu.memory_space<vmem>>, vector<1x8x128xf32>,
    %c35_424 = arith.constant 35 : index
    %c0_425 = arith.constant 0 : index
    %c0_426 = arith.constant 0 : index
    %622 = vector.load %arg1[%c35_424, %c0_425, %c0_426] : memref<81x8x128xf32, #tpu.memory_space<vmem>>, vector<1x8x128xf32>
    %623 = vector.shape_cast %622 : vector<1x8x128xf32> to vector<8x128xf32>
    %624 = arith.minimumf %623, %605 : vector<8x128xf32>
    %cst_427 = arith.constant 0.000000e+00 : f32
    %625 = vector.broadcast %cst_427 : f32 to vector<8x128xf32>
    %626 = arith.maximumf %624, %625 : vector<8x128xf32>
    %c35_428 = arith.constant 35 : index
    %c0_429 = arith.constant 0 : index
    %c0_430 = arith.constant 0 : index
    %627 = vector.load %arg2[%c35_428, %c0_429, %c0_430] : memref<81x8x128xf32, #tpu.memory_space<vmem>>, vector<1x8x128xf32>
    %628 = vector.shape_cast %627 : vector<1x8x128xf32> to vector<8x128xf32>
    %629 = vector.shape_cast %626 : vector<8x128xf32> to vector<1x8x128xf32>
    tpu.vector_store %arg2[%c35_428, %c0_429, %c0_430], %629 {strides = array<i32>} : memref<81x8x128xf32, #tpu.memory_space<vmem>>, vector<1x8x128xf32>,
    %cst_431 = arith.constant 1.000000e+00 : f32
    %630 = vector.broadcast %cst_431 : f32 to vector<8x128xf32>
    %631 = arith.subf %630, %511 : vector<8x128xf32>
    %632 = arith.minimumf %540, %631 : vector<8x128xf32>
    %cst_432 = arith.constant 1.000000e+00 : f32
    %633 = vector.broadcast %cst_432 : f32 to vector<8x128xf32>
    %634 = arith.subf %633, %632 : vector<8x128xf32>
    %c36_433 = arith.constant 36 : index
    %c0_434 = arith.constant 0 : index
    %c0_435 = arith.constant 0 : index
    %635 = vector.load %arg1[%c36_433, %c0_434, %c0_435] : memref<81x8x128xf32, #tpu.memory_space<vmem>>, vector<1x8x128xf32>
    %636 = vector.shape_cast %635 : vector<1x8x128xf32> to vector<8x128xf32>
    %637 = arith.minimumf %636, %634 : vector<8x128xf32>
    %cst_436 = arith.constant 0.000000e+00 : f32
    %638 = vector.broadcast %cst_436 : f32 to vector<8x128xf32>
    %639 = arith.maximumf %637, %638 : vector<8x128xf32>
    %c36_437 = arith.constant 36 : index
    %c0_438 = arith.constant 0 : index
    %c0_439 = arith.constant 0 : index
    %640 = vector.load %arg2[%c36_437, %c0_438, %c0_439] : memref<81x8x128xf32, #tpu.memory_space<vmem>>, vector<1x8x128xf32>
    %641 = vector.shape_cast %640 : vector<1x8x128xf32> to vector<8x128xf32>
    %642 = vector.shape_cast %639 : vector<8x128xf32> to vector<1x8x128xf32>
    tpu.vector_store %arg2[%c36_437, %c0_438, %c0_439], %642 {strides = array<i32>} : memref<81x8x128xf32, #tpu.memory_space<vmem>>, vector<1x8x128xf32>,
    %c37_440 = arith.constant 37 : index
    %c0_441 = arith.constant 0 : index
    %c0_442 = arith.constant 0 : index
    %643 = vector.load %arg1[%c37_440, %c0_441, %c0_442] : memref<81x8x128xf32, #tpu.memory_space<vmem>>, vector<1x8x128xf32>
    %644 = vector.shape_cast %643 : vector<1x8x128xf32> to vector<8x128xf32>
    %645 = arith.minimumf %644, %634 : vector<8x128xf32>
    %cst_443 = arith.constant 0.000000e+00 : f32
    %646 = vector.broadcast %cst_443 : f32 to vector<8x128xf32>
    %647 = arith.maximumf %645, %646 : vector<8x128xf32>
    %c37_444 = arith.constant 37 : index
    %c0_445 = arith.constant 0 : index
    %c0_446 = arith.constant 0 : index
    %648 = vector.load %arg2[%c37_444, %c0_445, %c0_446] : memref<81x8x128xf32, #tpu.memory_space<vmem>>, vector<1x8x128xf32>
    %649 = vector.shape_cast %648 : vector<1x8x128xf32> to vector<8x128xf32>
    %650 = vector.shape_cast %647 : vector<8x128xf32> to vector<1x8x128xf32>
    tpu.vector_store %arg2[%c37_444, %c0_445, %c0_446], %650 {strides = array<i32>} : memref<81x8x128xf32, #tpu.memory_space<vmem>>, vector<1x8x128xf32>,
    %c38_447 = arith.constant 38 : index
    %c0_448 = arith.constant 0 : index
    %c0_449 = arith.constant 0 : index
    %651 = vector.load %arg1[%c38_447, %c0_448, %c0_449] : memref<81x8x128xf32, #tpu.memory_space<vmem>>, vector<1x8x128xf32>
    %652 = vector.shape_cast %651 : vector<1x8x128xf32> to vector<8x128xf32>
    %653 = arith.minimumf %652, %634 : vector<8x128xf32>
    %cst_450 = arith.constant 0.000000e+00 : f32
    %654 = vector.broadcast %cst_450 : f32 to vector<8x128xf32>
    %655 = arith.maximumf %653, %654 : vector<8x128xf32>
    %c38_451 = arith.constant 38 : index
    %c0_452 = arith.constant 0 : index
    %c0_453 = arith.constant 0 : index
    %656 = vector.load %arg2[%c38_451, %c0_452, %c0_453] : memref<81x8x128xf32, #tpu.memory_space<vmem>>, vector<1x8x128xf32>
    %657 = vector.shape_cast %656 : vector<1x8x128xf32> to vector<8x128xf32>
    %658 = vector.shape_cast %655 : vector<8x128xf32> to vector<1x8x128xf32>
    tpu.vector_store %arg2[%c38_451, %c0_452, %c0_453], %658 {strides = array<i32>} : memref<81x8x128xf32, #tpu.memory_space<vmem>>, vector<1x8x128xf32>,
    %cst_454 = arith.constant 1.000000e+00 : f32
    %659 = vector.broadcast %cst_454 : f32 to vector<8x128xf32>
    %660 = arith.subf %659, %516 : vector<8x128xf32>
    %661 = arith.minimumf %540, %660 : vector<8x128xf32>
    %cst_455 = arith.constant 1.000000e+00 : f32
    %662 = vector.broadcast %cst_455 : f32 to vector<8x128xf32>
    %663 = arith.subf %662, %661 : vector<8x128xf32>
    %c39_456 = arith.constant 39 : index
    %c0_457 = arith.constant 0 : index
    %c0_458 = arith.constant 0 : index
    %664 = vector.load %arg1[%c39_456, %c0_457, %c0_458] : memref<81x8x128xf32, #tpu.memory_space<vmem>>, vector<1x8x128xf32>
    %665 = vector.shape_cast %664 : vector<1x8x128xf32> to vector<8x128xf32>
    %666 = arith.minimumf %665, %663 : vector<8x128xf32>
    %cst_459 = arith.constant 0.000000e+00 : f32
    %667 = vector.broadcast %cst_459 : f32 to vector<8x128xf32>
    %668 = arith.maximumf %666, %667 : vector<8x128xf32>
    %c39_460 = arith.constant 39 : index
    %c0_461 = arith.constant 0 : index
    %c0_462 = arith.constant 0 : index
    %669 = vector.load %arg2[%c39_460, %c0_461, %c0_462] : memref<81x8x128xf32, #tpu.memory_space<vmem>>, vector<1x8x128xf32>
    %670 = vector.shape_cast %669 : vector<1x8x128xf32> to vector<8x128xf32>
    %671 = vector.shape_cast %668 : vector<8x128xf32> to vector<1x8x128xf32>
    tpu.vector_store %arg2[%c39_460, %c0_461, %c0_462], %671 {strides = array<i32>} : memref<81x8x128xf32, #tpu.memory_space<vmem>>, vector<1x8x128xf32>,
    %c40_463 = arith.constant 40 : index
    %c0_464 = arith.constant 0 : index
    %c0_465 = arith.constant 0 : index
    %672 = vector.load %arg1[%c40_463, %c0_464, %c0_465] : memref<81x8x128xf32, #tpu.memory_space<vmem>>, vector<1x8x128xf32>
    %673 = vector.shape_cast %672 : vector<1x8x128xf32> to vector<8x128xf32>
    %674 = arith.minimumf %673, %663 : vector<8x128xf32>
    %cst_466 = arith.constant 0.000000e+00 : f32
    %675 = vector.broadcast %cst_466 : f32 to vector<8x128xf32>
    %676 = arith.maximumf %674, %675 : vector<8x128xf32>
    %c40_467 = arith.constant 40 : index
    %c0_468 = arith.constant 0 : index
    %c0_469 = arith.constant 0 : index
    %677 = vector.load %arg2[%c40_467, %c0_468, %c0_469] : memref<81x8x128xf32, #tpu.memory_space<vmem>>, vector<1x8x128xf32>
    %678 = vector.shape_cast %677 : vector<1x8x128xf32> to vector<8x128xf32>
    %679 = vector.shape_cast %676 : vector<8x128xf32> to vector<1x8x128xf32>
    tpu.vector_store %arg2[%c40_467, %c0_468, %c0_469], %679 {strides = array<i32>} : memref<81x8x128xf32, #tpu.memory_space<vmem>>, vector<1x8x128xf32>,
    %c41_470 = arith.constant 41 : index
    %c0_471 = arith.constant 0 : index
    %c0_472 = arith.constant 0 : index
    %680 = vector.load %arg1[%c41_470, %c0_471, %c0_472] : memref<81x8x128xf32, #tpu.memory_space<vmem>>, vector<1x8x128xf32>
    %681 = vector.shape_cast %680 : vector<1x8x128xf32> to vector<8x128xf32>
    %682 = arith.minimumf %681, %663 : vector<8x128xf32>
    %cst_473 = arith.constant 0.000000e+00 : f32
    %683 = vector.broadcast %cst_473 : f32 to vector<8x128xf32>
    %684 = arith.maximumf %682, %683 : vector<8x128xf32>
    %c41_474 = arith.constant 41 : index
    %c0_475 = arith.constant 0 : index
    %c0_476 = arith.constant 0 : index
    %685 = vector.load %arg2[%c41_474, %c0_475, %c0_476] : memref<81x8x128xf32, #tpu.memory_space<vmem>>, vector<1x8x128xf32>
    %686 = vector.shape_cast %685 : vector<1x8x128xf32> to vector<8x128xf32>
    %687 = vector.shape_cast %684 : vector<8x128xf32> to vector<1x8x128xf32>
    tpu.vector_store %arg2[%c41_474, %c0_475, %c0_476], %687 {strides = array<i32>} : memref<81x8x128xf32, #tpu.memory_space<vmem>>, vector<1x8x128xf32>,
    %cst_477 = arith.constant 1.000000e+00 : f32
    %688 = vector.broadcast %cst_477 : f32 to vector<8x128xf32>
    %689 = arith.subf %688, %521 : vector<8x128xf32>
    %690 = arith.minimumf %540, %689 : vector<8x128xf32>
    %cst_478 = arith.constant 1.000000e+00 : f32
    %691 = vector.broadcast %cst_478 : f32 to vector<8x128xf32>
    %692 = arith.subf %691, %690 : vector<8x128xf32>
    %c42_479 = arith.constant 42 : index
    %c0_480 = arith.constant 0 : index
    %c0_481 = arith.constant 0 : index
    %693 = vector.load %arg1[%c42_479, %c0_480, %c0_481] : memref<81x8x128xf32, #tpu.memory_space<vmem>>, vector<1x8x128xf32>
    %694 = vector.shape_cast %693 : vector<1x8x128xf32> to vector<8x128xf32>
    %695 = arith.minimumf %694, %692 : vector<8x128xf32>
    %cst_482 = arith.constant 0.000000e+00 : f32
    %696 = vector.broadcast %cst_482 : f32 to vector<8x128xf32>
    %697 = arith.maximumf %695, %696 : vector<8x128xf32>
    %c42_483 = arith.constant 42 : index
    %c0_484 = arith.constant 0 : index
    %c0_485 = arith.constant 0 : index
    %698 = vector.load %arg2[%c42_483, %c0_484, %c0_485] : memref<81x8x128xf32, #tpu.memory_space<vmem>>, vector<1x8x128xf32>
    %699 = vector.shape_cast %698 : vector<1x8x128xf32> to vector<8x128xf32>
    %700 = vector.shape_cast %697 : vector<8x128xf32> to vector<1x8x128xf32>
    tpu.vector_store %arg2[%c42_483, %c0_484, %c0_485], %700 {strides = array<i32>} : memref<81x8x128xf32, #tpu.memory_space<vmem>>, vector<1x8x128xf32>,
    %c43_486 = arith.constant 43 : index
    %c0_487 = arith.constant 0 : index
    %c0_488 = arith.constant 0 : index
    %701 = vector.load %arg1[%c43_486, %c0_487, %c0_488] : memref<81x8x128xf32, #tpu.memory_space<vmem>>, vector<1x8x128xf32>
    %702 = vector.shape_cast %701 : vector<1x8x128xf32> to vector<8x128xf32>
    %703 = arith.minimumf %702, %692 : vector<8x128xf32>
    %cst_489 = arith.constant 0.000000e+00 : f32
    %704 = vector.broadcast %cst_489 : f32 to vector<8x128xf32>
    %705 = arith.maximumf %703, %704 : vector<8x128xf32>
    %c43_490 = arith.constant 43 : index
    %c0_491 = arith.constant 0 : index
    %c0_492 = arith.constant 0 : index
    %706 = vector.load %arg2[%c43_490, %c0_491, %c0_492] : memref<81x8x128xf32, #tpu.memory_space<vmem>>, vector<1x8x128xf32>
    %707 = vector.shape_cast %706 : vector<1x8x128xf32> to vector<8x128xf32>
    %708 = vector.shape_cast %705 : vector<8x128xf32> to vector<1x8x128xf32>
    tpu.vector_store %arg2[%c43_490, %c0_491, %c0_492], %708 {strides = array<i32>} : memref<81x8x128xf32, #tpu.memory_space<vmem>>, vector<1x8x128xf32>,
    %c44_493 = arith.constant 44 : index
    %c0_494 = arith.constant 0 : index
    %c0_495 = arith.constant 0 : index
    %709 = vector.load %arg1[%c44_493, %c0_494, %c0_495] : memref<81x8x128xf32, #tpu.memory_space<vmem>>, vector<1x8x128xf32>
    %710 = vector.shape_cast %709 : vector<1x8x128xf32> to vector<8x128xf32>
    %711 = arith.minimumf %710, %692 : vector<8x128xf32>
    %cst_496 = arith.constant 0.000000e+00 : f32
    %712 = vector.broadcast %cst_496 : f32 to vector<8x128xf32>
    %713 = arith.maximumf %711, %712 : vector<8x128xf32>
    %c44_497 = arith.constant 44 : index
    %c0_498 = arith.constant 0 : index
    %c0_499 = arith.constant 0 : index
    %714 = vector.load %arg2[%c44_497, %c0_498, %c0_499] : memref<81x8x128xf32, #tpu.memory_space<vmem>>, vector<1x8x128xf32>
    %715 = vector.shape_cast %714 : vector<1x8x128xf32> to vector<8x128xf32>
    %716 = vector.shape_cast %713 : vector<8x128xf32> to vector<1x8x128xf32>
    tpu.vector_store %arg2[%c44_497, %c0_498, %c0_499], %716 {strides = array<i32>} : memref<81x8x128xf32, #tpu.memory_space<vmem>>, vector<1x8x128xf32>,
    %cst_500 = arith.constant 1.000000e+00 : f32
    %717 = vector.broadcast %cst_500 : f32 to vector<8x128xf32>
    %718 = arith.subf %717, %526 : vector<8x128xf32>
    %719 = arith.minimumf %542, %718 : vector<8x128xf32>
    %cst_501 = arith.constant 1.000000e+00 : f32
    %720 = vector.broadcast %cst_501 : f32 to vector<8x128xf32>
    %721 = arith.subf %720, %719 : vector<8x128xf32>
    %c45_502 = arith.constant 45 : index
    %c0_503 = arith.constant 0 : index
    %c0_504 = arith.constant 0 : index
    %722 = vector.load %arg1[%c45_502, %c0_503, %c0_504] : memref<81x8x128xf32, #tpu.memory_space<vmem>>, vector<1x8x128xf32>
    %723 = vector.shape_cast %722 : vector<1x8x128xf32> to vector<8x128xf32>
    %724 = arith.minimumf %723, %721 : vector<8x128xf32>
    %cst_505 = arith.constant 0.000000e+00 : f32
    %725 = vector.broadcast %cst_505 : f32 to vector<8x128xf32>
    %726 = arith.maximumf %724, %725 : vector<8x128xf32>
    %c45_506 = arith.constant 45 : index
    %c0_507 = arith.constant 0 : index
    %c0_508 = arith.constant 0 : index
    %727 = vector.load %arg2[%c45_506, %c0_507, %c0_508] : memref<81x8x128xf32, #tpu.memory_space<vmem>>, vector<1x8x128xf32>
    %728 = vector.shape_cast %727 : vector<1x8x128xf32> to vector<8x128xf32>
    %729 = vector.shape_cast %726 : vector<8x128xf32> to vector<1x8x128xf32>
    tpu.vector_store %arg2[%c45_506, %c0_507, %c0_508], %729 {strides = array<i32>} : memref<81x8x128xf32, #tpu.memory_space<vmem>>, vector<1x8x128xf32>,
    %c46_509 = arith.constant 46 : index
    %c0_510 = arith.constant 0 : index
    %c0_511 = arith.constant 0 : index
    %730 = vector.load %arg1[%c46_509, %c0_510, %c0_511] : memref<81x8x128xf32, #tpu.memory_space<vmem>>, vector<1x8x128xf32>
    %731 = vector.shape_cast %730 : vector<1x8x128xf32> to vector<8x128xf32>
    %732 = arith.minimumf %731, %721 : vector<8x128xf32>
    %cst_512 = arith.constant 0.000000e+00 : f32
    %733 = vector.broadcast %cst_512 : f32 to vector<8x128xf32>
    %734 = arith.maximumf %732, %733 : vector<8x128xf32>
    %c46_513 = arith.constant 46 : index
    %c0_514 = arith.constant 0 : index
    %c0_515 = arith.constant 0 : index
    %735 = vector.load %arg2[%c46_513, %c0_514, %c0_515] : memref<81x8x128xf32, #tpu.memory_space<vmem>>, vector<1x8x128xf32>
    %736 = vector.shape_cast %735 : vector<1x8x128xf32> to vector<8x128xf32>
    %737 = vector.shape_cast %734 : vector<8x128xf32> to vector<1x8x128xf32>
    tpu.vector_store %arg2[%c46_513, %c0_514, %c0_515], %737 {strides = array<i32>} : memref<81x8x128xf32, #tpu.memory_space<vmem>>, vector<1x8x128xf32>,
    %c47_516 = arith.constant 47 : index
    %c0_517 = arith.constant 0 : index
    %c0_518 = arith.constant 0 : index
    %738 = vector.load %arg1[%c47_516, %c0_517, %c0_518] : memref<81x8x128xf32, #tpu.memory_space<vmem>>, vector<1x8x128xf32>
    %739 = vector.shape_cast %738 : vector<1x8x128xf32> to vector<8x128xf32>
    %740 = arith.minimumf %739, %721 : vector<8x128xf32>
    %cst_519 = arith.constant 0.000000e+00 : f32
    %741 = vector.broadcast %cst_519 : f32 to vector<8x128xf32>
    %742 = arith.maximumf %740, %741 : vector<8x128xf32>
    %c47_520 = arith.constant 47 : index
    %c0_521 = arith.constant 0 : index
    %c0_522 = arith.constant 0 : index
    %743 = vector.load %arg2[%c47_520, %c0_521, %c0_522] : memref<81x8x128xf32, #tpu.memory_space<vmem>>, vector<1x8x128xf32>
    %744 = vector.shape_cast %743 : vector<1x8x128xf32> to vector<8x128xf32>
    %745 = vector.shape_cast %742 : vector<8x128xf32> to vector<1x8x128xf32>
    tpu.vector_store %arg2[%c47_520, %c0_521, %c0_522], %745 {strides = array<i32>} : memref<81x8x128xf32, #tpu.memory_space<vmem>>, vector<1x8x128xf32>,
    %cst_523 = arith.constant 1.000000e+00 : f32
    %746 = vector.broadcast %cst_523 : f32 to vector<8x128xf32>
    %747 = arith.subf %746, %531 : vector<8x128xf32>
    %748 = arith.minimumf %542, %747 : vector<8x128xf32>
    %cst_524 = arith.constant 1.000000e+00 : f32
    %749 = vector.broadcast %cst_524 : f32 to vector<8x128xf32>
    %750 = arith.subf %749, %748 : vector<8x128xf32>
    %c48_525 = arith.constant 48 : index
    %c0_526 = arith.constant 0 : index
    %c0_527 = arith.constant 0 : index
    %751 = vector.load %arg1[%c48_525, %c0_526, %c0_527] : memref<81x8x128xf32, #tpu.memory_space<vmem>>, vector<1x8x128xf32>
    %752 = vector.shape_cast %751 : vector<1x8x128xf32> to vector<8x128xf32>
    %753 = arith.minimumf %752, %750 : vector<8x128xf32>
    %cst_528 = arith.constant 0.000000e+00 : f32
    %754 = vector.broadcast %cst_528 : f32 to vector<8x128xf32>
    %755 = arith.maximumf %753, %754 : vector<8x128xf32>
    %c48_529 = arith.constant 48 : index
    %c0_530 = arith.constant 0 : index
    %c0_531 = arith.constant 0 : index
    %756 = vector.load %arg2[%c48_529, %c0_530, %c0_531] : memref<81x8x128xf32, #tpu.memory_space<vmem>>, vector<1x8x128xf32>
    %757 = vector.shape_cast %756 : vector<1x8x128xf32> to vector<8x128xf32>
    %758 = vector.shape_cast %755 : vector<8x128xf32> to vector<1x8x128xf32>
    tpu.vector_store %arg2[%c48_529, %c0_530, %c0_531], %758 {strides = array<i32>} : memref<81x8x128xf32, #tpu.memory_space<vmem>>, vector<1x8x128xf32>,
    %c49_532 = arith.constant 49 : index
    %c0_533 = arith.constant 0 : index
    %c0_534 = arith.constant 0 : index
    %759 = vector.load %arg1[%c49_532, %c0_533, %c0_534] : memref<81x8x128xf32, #tpu.memory_space<vmem>>, vector<1x8x128xf32>
    %760 = vector.shape_cast %759 : vector<1x8x128xf32> to vector<8x128xf32>
    %761 = arith.minimumf %760, %750 : vector<8x128xf32>
    %cst_535 = arith.constant 0.000000e+00 : f32
    %762 = vector.broadcast %cst_535 : f32 to vector<8x128xf32>
    %763 = arith.maximumf %761, %762 : vector<8x128xf32>
    %c49_536 = arith.constant 49 : index
    %c0_537 = arith.constant 0 : index
    %c0_538 = arith.constant 0 : index
    %764 = vector.load %arg2[%c49_536, %c0_537, %c0_538] : memref<81x8x128xf32, #tpu.memory_space<vmem>>, vector<1x8x128xf32>
    %765 = vector.shape_cast %764 : vector<1x8x128xf32> to vector<8x128xf32>
    %766 = vector.shape_cast %763 : vector<8x128xf32> to vector<1x8x128xf32>
    tpu.vector_store %arg2[%c49_536, %c0_537, %c0_538], %766 {strides = array<i32>} : memref<81x8x128xf32, #tpu.memory_space<vmem>>, vector<1x8x128xf32>,
    %c50_539 = arith.constant 50 : index
    %c0_540 = arith.constant 0 : index
    %c0_541 = arith.constant 0 : index
    %767 = vector.load %arg1[%c50_539, %c0_540, %c0_541] : memref<81x8x128xf32, #tpu.memory_space<vmem>>, vector<1x8x128xf32>
    %768 = vector.shape_cast %767 : vector<1x8x128xf32> to vector<8x128xf32>
    %769 = arith.minimumf %768, %750 : vector<8x128xf32>
    %cst_542 = arith.constant 0.000000e+00 : f32
    %770 = vector.broadcast %cst_542 : f32 to vector<8x128xf32>
    %771 = arith.maximumf %769, %770 : vector<8x128xf32>
    %c50_543 = arith.constant 50 : index
    %c0_544 = arith.constant 0 : index
    %c0_545 = arith.constant 0 : index
    %772 = vector.load %arg2[%c50_543, %c0_544, %c0_545] : memref<81x8x128xf32, #tpu.memory_space<vmem>>, vector<1x8x128xf32>
    %773 = vector.shape_cast %772 : vector<1x8x128xf32> to vector<8x128xf32>
    %774 = vector.shape_cast %771 : vector<8x128xf32> to vector<1x8x128xf32>
    tpu.vector_store %arg2[%c50_543, %c0_544, %c0_545], %774 {strides = array<i32>} : memref<81x8x128xf32, #tpu.memory_space<vmem>>, vector<1x8x128xf32>,
    %cst_546 = arith.constant 1.000000e+00 : f32
    %775 = vector.broadcast %cst_546 : f32 to vector<8x128xf32>
    %776 = arith.subf %775, %536 : vector<8x128xf32>
    %777 = arith.minimumf %542, %776 : vector<8x128xf32>
    %cst_547 = arith.constant 1.000000e+00 : f32
    %778 = vector.broadcast %cst_547 : f32 to vector<8x128xf32>
    %779 = arith.subf %778, %777 : vector<8x128xf32>
    %c51_548 = arith.constant 51 : index
    %c0_549 = arith.constant 0 : index
    %c0_550 = arith.constant 0 : index
    %780 = vector.load %arg1[%c51_548, %c0_549, %c0_550] : memref<81x8x128xf32, #tpu.memory_space<vmem>>, vector<1x8x128xf32>
    %781 = vector.shape_cast %780 : vector<1x8x128xf32> to vector<8x128xf32>
    %782 = arith.minimumf %781, %779 : vector<8x128xf32>
    %cst_551 = arith.constant 0.000000e+00 : f32
    %783 = vector.broadcast %cst_551 : f32 to vector<8x128xf32>
    %784 = arith.maximumf %782, %783 : vector<8x128xf32>
    %c51_552 = arith.constant 51 : index
    %c0_553 = arith.constant 0 : index
    %c0_554 = arith.constant 0 : index
    %785 = vector.load %arg2[%c51_552, %c0_553, %c0_554] : memref<81x8x128xf32, #tpu.memory_space<vmem>>, vector<1x8x128xf32>
    %786 = vector.shape_cast %785 : vector<1x8x128xf32> to vector<8x128xf32>
    %787 = vector.shape_cast %784 : vector<8x128xf32> to vector<1x8x128xf32>
    tpu.vector_store %arg2[%c51_552, %c0_553, %c0_554], %787 {strides = array<i32>} : memref<81x8x128xf32, #tpu.memory_space<vmem>>, vector<1x8x128xf32>,
    %c52_555 = arith.constant 52 : index
    %c0_556 = arith.constant 0 : index
    %c0_557 = arith.constant 0 : index
    %788 = vector.load %arg1[%c52_555, %c0_556, %c0_557] : memref<81x8x128xf32, #tpu.memory_space<vmem>>, vector<1x8x128xf32>
    %789 = vector.shape_cast %788 : vector<1x8x128xf32> to vector<8x128xf32>
    %790 = arith.minimumf %789, %779 : vector<8x128xf32>
    %cst_558 = arith.constant 0.000000e+00 : f32
    %791 = vector.broadcast %cst_558 : f32 to vector<8x128xf32>
    %792 = arith.maximumf %790, %791 : vector<8x128xf32>
    %c52_559 = arith.constant 52 : index
    %c0_560 = arith.constant 0 : index
    %c0_561 = arith.constant 0 : index
    %793 = vector.load %arg2[%c52_559, %c0_560, %c0_561] : memref<81x8x128xf32, #tpu.memory_space<vmem>>, vector<1x8x128xf32>
    %794 = vector.shape_cast %793 : vector<1x8x128xf32> to vector<8x128xf32>
    %795 = vector.shape_cast %792 : vector<8x128xf32> to vector<1x8x128xf32>
    tpu.vector_store %arg2[%c52_559, %c0_560, %c0_561], %795 {strides = array<i32>} : memref<81x8x128xf32, #tpu.memory_space<vmem>>, vector<1x8x128xf32>,
    %c53_562 = arith.constant 53 : index
    %c0_563 = arith.constant 0 : index
    %c0_564 = arith.constant 0 : index
    %796 = vector.load %arg1[%c53_562, %c0_563, %c0_564] : memref<81x8x128xf32, #tpu.memory_space<vmem>>, vector<1x8x128xf32>
    %797 = vector.shape_cast %796 : vector<1x8x128xf32> to vector<8x128xf32>
    %798 = arith.minimumf %797, %779 : vector<8x128xf32>
    %cst_565 = arith.constant 0.000000e+00 : f32
    %799 = vector.broadcast %cst_565 : f32 to vector<8x128xf32>
    %800 = arith.maximumf %798, %799 : vector<8x128xf32>
    %c53_566 = arith.constant 53 : index
    %c0_567 = arith.constant 0 : index
    %c0_568 = arith.constant 0 : index
    %801 = vector.load %arg2[%c53_566, %c0_567, %c0_568] : memref<81x8x128xf32, #tpu.memory_space<vmem>>, vector<1x8x128xf32>
    %802 = vector.shape_cast %801 : vector<1x8x128xf32> to vector<8x128xf32>
    %803 = vector.shape_cast %800 : vector<8x128xf32> to vector<1x8x128xf32>
    tpu.vector_store %arg2[%c53_566, %c0_567, %c0_568], %803 {strides = array<i32>} : memref<81x8x128xf32, #tpu.memory_space<vmem>>, vector<1x8x128xf32>,
    %c54 = arith.constant 54 : index
    %c0_569 = arith.constant 0 : index
    %c0_570 = arith.constant 0 : index
    %804 = vector.load %arg1[%c54, %c0_569, %c0_570] : memref<81x8x128xf32, #tpu.memory_space<vmem>>, vector<1x8x128xf32>
    %805 = vector.shape_cast %804 : vector<1x8x128xf32> to vector<8x128xf32>
    %c55 = arith.constant 55 : index
    %c0_571 = arith.constant 0 : index
    %c0_572 = arith.constant 0 : index
    %806 = vector.load %arg1[%c55, %c0_571, %c0_572] : memref<81x8x128xf32, #tpu.memory_space<vmem>>, vector<1x8x128xf32>
    %807 = vector.shape_cast %806 : vector<1x8x128xf32> to vector<8x128xf32>
    %c56 = arith.constant 56 : index
    %c0_573 = arith.constant 0 : index
    %c0_574 = arith.constant 0 : index
    %808 = vector.load %arg1[%c56, %c0_573, %c0_574] : memref<81x8x128xf32, #tpu.memory_space<vmem>>, vector<1x8x128xf32>
    %809 = vector.shape_cast %808 : vector<1x8x128xf32> to vector<8x128xf32>
    %810 = arith.maximumf %805, %807 : vector<8x128xf32>
    %811 = arith.maximumf %810, %809 : vector<8x128xf32>
    %c57 = arith.constant 57 : index
    %c0_575 = arith.constant 0 : index
    %c0_576 = arith.constant 0 : index
    %812 = vector.load %arg1[%c57, %c0_575, %c0_576] : memref<81x8x128xf32, #tpu.memory_space<vmem>>, vector<1x8x128xf32>
    %813 = vector.shape_cast %812 : vector<1x8x128xf32> to vector<8x128xf32>
    %c58 = arith.constant 58 : index
    %c0_577 = arith.constant 0 : index
    %c0_578 = arith.constant 0 : index
    %814 = vector.load %arg1[%c58, %c0_577, %c0_578] : memref<81x8x128xf32, #tpu.memory_space<vmem>>, vector<1x8x128xf32>
    %815 = vector.shape_cast %814 : vector<1x8x128xf32> to vector<8x128xf32>
    %c59 = arith.constant 59 : index
    %c0_579 = arith.constant 0 : index
    %c0_580 = arith.constant 0 : index
    %816 = vector.load %arg1[%c59, %c0_579, %c0_580] : memref<81x8x128xf32, #tpu.memory_space<vmem>>, vector<1x8x128xf32>
    %817 = vector.shape_cast %816 : vector<1x8x128xf32> to vector<8x128xf32>
    %818 = arith.maximumf %813, %815 : vector<8x128xf32>
    %819 = arith.maximumf %818, %817 : vector<8x128xf32>
    %c60 = arith.constant 60 : index
    %c0_581 = arith.constant 0 : index
    %c0_582 = arith.constant 0 : index
    %820 = vector.load %arg1[%c60, %c0_581, %c0_582] : memref<81x8x128xf32, #tpu.memory_space<vmem>>, vector<1x8x128xf32>
    %821 = vector.shape_cast %820 : vector<1x8x128xf32> to vector<8x128xf32>
    %c61 = arith.constant 61 : index
    %c0_583 = arith.constant 0 : index
    %c0_584 = arith.constant 0 : index
    %822 = vector.load %arg1[%c61, %c0_583, %c0_584] : memref<81x8x128xf32, #tpu.memory_space<vmem>>, vector<1x8x128xf32>
    %823 = vector.shape_cast %822 : vector<1x8x128xf32> to vector<8x128xf32>
    %c62 = arith.constant 62 : index
    %c0_585 = arith.constant 0 : index
    %c0_586 = arith.constant 0 : index
    %824 = vector.load %arg1[%c62, %c0_585, %c0_586] : memref<81x8x128xf32, #tpu.memory_space<vmem>>, vector<1x8x128xf32>
    %825 = vector.shape_cast %824 : vector<1x8x128xf32> to vector<8x128xf32>
    %826 = arith.maximumf %821, %823 : vector<8x128xf32>
    %827 = arith.maximumf %826, %825 : vector<8x128xf32>
    %c63 = arith.constant 63 : index
    %c0_587 = arith.constant 0 : index
    %c0_588 = arith.constant 0 : index
    %828 = vector.load %arg1[%c63, %c0_587, %c0_588] : memref<81x8x128xf32, #tpu.memory_space<vmem>>, vector<1x8x128xf32>
    %829 = vector.shape_cast %828 : vector<1x8x128xf32> to vector<8x128xf32>
    %c64 = arith.constant 64 : index
    %c0_589 = arith.constant 0 : index
    %c0_590 = arith.constant 0 : index
    %830 = vector.load %arg1[%c64, %c0_589, %c0_590] : memref<81x8x128xf32, #tpu.memory_space<vmem>>, vector<1x8x128xf32>
    %831 = vector.shape_cast %830 : vector<1x8x128xf32> to vector<8x128xf32>
    %c65 = arith.constant 65 : index
    %c0_591 = arith.constant 0 : index
    %c0_592 = arith.constant 0 : index
    %832 = vector.load %arg1[%c65, %c0_591, %c0_592] : memref<81x8x128xf32, #tpu.memory_space<vmem>>, vector<1x8x128xf32>
    %833 = vector.shape_cast %832 : vector<1x8x128xf32> to vector<8x128xf32>
    %834 = arith.maximumf %829, %831 : vector<8x128xf32>
    %835 = arith.maximumf %834, %833 : vector<8x128xf32>
    %c66 = arith.constant 66 : index
    %c0_593 = arith.constant 0 : index
    %c0_594 = arith.constant 0 : index
    %836 = vector.load %arg1[%c66, %c0_593, %c0_594] : memref<81x8x128xf32, #tpu.memory_space<vmem>>, vector<1x8x128xf32>
    %837 = vector.shape_cast %836 : vector<1x8x128xf32> to vector<8x128xf32>
    %c67 = arith.constant 67 : index
    %c0_595 = arith.constant 0 : index
    %c0_596 = arith.constant 0 : index
    %838 = vector.load %arg1[%c67, %c0_595, %c0_596] : memref<81x8x128xf32, #tpu.memory_space<vmem>>, vector<1x8x128xf32>
    %839 = vector.shape_cast %838 : vector<1x8x128xf32> to vector<8x128xf32>
    %c68 = arith.constant 68 : index
    %c0_597 = arith.constant 0 : index
    %c0_598 = arith.constant 0 : index
    %840 = vector.load %arg1[%c68, %c0_597, %c0_598] : memref<81x8x128xf32, #tpu.memory_space<vmem>>, vector<1x8x128xf32>
    %841 = vector.shape_cast %840 : vector<1x8x128xf32> to vector<8x128xf32>
    %842 = arith.maximumf %837, %839 : vector<8x128xf32>
    %843 = arith.maximumf %842, %841 : vector<8x128xf32>
    %c69 = arith.constant 69 : index
    %c0_599 = arith.constant 0 : index
    %c0_600 = arith.constant 0 : index
    %844 = vector.load %arg1[%c69, %c0_599, %c0_600] : memref<81x8x128xf32, #tpu.memory_space<vmem>>, vector<1x8x128xf32>
    %845 = vector.shape_cast %844 : vector<1x8x128xf32> to vector<8x128xf32>
    %c70 = arith.constant 70 : index
    %c0_601 = arith.constant 0 : index
    %c0_602 = arith.constant 0 : index
    %846 = vector.load %arg1[%c70, %c0_601, %c0_602] : memref<81x8x128xf32, #tpu.memory_space<vmem>>, vector<1x8x128xf32>
    %847 = vector.shape_cast %846 : vector<1x8x128xf32> to vector<8x128xf32>
    %c71 = arith.constant 71 : index
    %c0_603 = arith.constant 0 : index
    %c0_604 = arith.constant 0 : index
    %848 = vector.load %arg1[%c71, %c0_603, %c0_604] : memref<81x8x128xf32, #tpu.memory_space<vmem>>, vector<1x8x128xf32>
    %849 = vector.shape_cast %848 : vector<1x8x128xf32> to vector<8x128xf32>
    %850 = arith.maximumf %845, %847 : vector<8x128xf32>
    %851 = arith.maximumf %850, %849 : vector<8x128xf32>
    %c72 = arith.constant 72 : index
    %c0_605 = arith.constant 0 : index
    %c0_606 = arith.constant 0 : index
    %852 = vector.load %arg1[%c72, %c0_605, %c0_606] : memref<81x8x128xf32, #tpu.memory_space<vmem>>, vector<1x8x128xf32>
    %853 = vector.shape_cast %852 : vector<1x8x128xf32> to vector<8x128xf32>
    %c73 = arith.constant 73 : index
    %c0_607 = arith.constant 0 : index
    %c0_608 = arith.constant 0 : index
    %854 = vector.load %arg1[%c73, %c0_607, %c0_608] : memref<81x8x128xf32, #tpu.memory_space<vmem>>, vector<1x8x128xf32>
    %855 = vector.shape_cast %854 : vector<1x8x128xf32> to vector<8x128xf32>
    %c74 = arith.constant 74 : index
    %c0_609 = arith.constant 0 : index
    %c0_610 = arith.constant 0 : index
    %856 = vector.load %arg1[%c74, %c0_609, %c0_610] : memref<81x8x128xf32, #tpu.memory_space<vmem>>, vector<1x8x128xf32>
    %857 = vector.shape_cast %856 : vector<1x8x128xf32> to vector<8x128xf32>
    %858 = arith.maximumf %853, %855 : vector<8x128xf32>
    %859 = arith.maximumf %858, %857 : vector<8x128xf32>
    %c75 = arith.constant 75 : index
    %c0_611 = arith.constant 0 : index
    %c0_612 = arith.constant 0 : index
    %860 = vector.load %arg1[%c75, %c0_611, %c0_612] : memref<81x8x128xf32, #tpu.memory_space<vmem>>, vector<1x8x128xf32>
    %861 = vector.shape_cast %860 : vector<1x8x128xf32> to vector<8x128xf32>
    %c76 = arith.constant 76 : index
    %c0_613 = arith.constant 0 : index
    %c0_614 = arith.constant 0 : index
    %862 = vector.load %arg1[%c76, %c0_613, %c0_614] : memref<81x8x128xf32, #tpu.memory_space<vmem>>, vector<1x8x128xf32>
    %863 = vector.shape_cast %862 : vector<1x8x128xf32> to vector<8x128xf32>
    %c77 = arith.constant 77 : index
    %c0_615 = arith.constant 0 : index
    %c0_616 = arith.constant 0 : index
    %864 = vector.load %arg1[%c77, %c0_615, %c0_616] : memref<81x8x128xf32, #tpu.memory_space<vmem>>, vector<1x8x128xf32>
    %865 = vector.shape_cast %864 : vector<1x8x128xf32> to vector<8x128xf32>
    %866 = arith.maximumf %861, %863 : vector<8x128xf32>
    %867 = arith.maximumf %866, %865 : vector<8x128xf32>
    %c78 = arith.constant 78 : index
    %c0_617 = arith.constant 0 : index
    %c0_618 = arith.constant 0 : index
    %868 = vector.load %arg1[%c78, %c0_617, %c0_618] : memref<81x8x128xf32, #tpu.memory_space<vmem>>, vector<1x8x128xf32>
    %869 = vector.shape_cast %868 : vector<1x8x128xf32> to vector<8x128xf32>
    %c79 = arith.constant 79 : index
    %c0_619 = arith.constant 0 : index
    %c0_620 = arith.constant 0 : index
    %870 = vector.load %arg1[%c79, %c0_619, %c0_620] : memref<81x8x128xf32, #tpu.memory_space<vmem>>, vector<1x8x128xf32>
    %871 = vector.shape_cast %870 : vector<1x8x128xf32> to vector<8x128xf32>
    %c80 = arith.constant 80 : index
    %c0_621 = arith.constant 0 : index
    %c0_622 = arith.constant 0 : index
    %872 = vector.load %arg1[%c80, %c0_621, %c0_622] : memref<81x8x128xf32, #tpu.memory_space<vmem>>, vector<1x8x128xf32>
    %873 = vector.shape_cast %872 : vector<1x8x128xf32> to vector<8x128xf32>
    %874 = arith.maximumf %869, %871 : vector<8x128xf32>
    %875 = arith.maximumf %874, %873 : vector<8x128xf32>
    %876 = arith.addf %811, %835 : vector<8x128xf32>
    %877 = arith.addf %876, %859 : vector<8x128xf32>
    %cst_623 = arith.constant 2.000000e+00 : f32
    %878 = vector.broadcast %cst_623 : f32 to vector<8x128xf32>
    %879 = arith.subf %878, %877 : vector<8x128xf32>
    %cst_624 = arith.constant 0.000000e+00 : f32
    %880 = vector.broadcast %cst_624 : f32 to vector<8x128xf32>
    %881 = arith.maximumf %879, %880 : vector<8x128xf32>
    %882 = arith.addf %819, %843 : vector<8x128xf32>
    %883 = arith.addf %882, %867 : vector<8x128xf32>
    %cst_625 = arith.constant 2.000000e+00 : f32
    %884 = vector.broadcast %cst_625 : f32 to vector<8x128xf32>
    %885 = arith.subf %884, %883 : vector<8x128xf32>
    %cst_626 = arith.constant 0.000000e+00 : f32
    %886 = vector.broadcast %cst_626 : f32 to vector<8x128xf32>
    %887 = arith.maximumf %885, %886 : vector<8x128xf32>
    %888 = arith.addf %827, %851 : vector<8x128xf32>
    %889 = arith.addf %888, %875 : vector<8x128xf32>
    %cst_627 = arith.constant 2.000000e+00 : f32
    %890 = vector.broadcast %cst_627 : f32 to vector<8x128xf32>
    %891 = arith.subf %890, %889 : vector<8x128xf32>
    %cst_628 = arith.constant 0.000000e+00 : f32
    %892 = vector.broadcast %cst_628 : f32 to vector<8x128xf32>
    %893 = arith.maximumf %891, %892 : vector<8x128xf32>
    %894 = arith.minimumf %811, %881 : vector<8x128xf32>
    %cst_629 = arith.constant 0.000000e+00 : f32
    %cst_630 = arith.constant 1.000000e+00 : f32
    %895 = vector.broadcast %cst_629 : f32 to vector<8x128xf32>
    %896 = arith.maximumf %895, %894 : vector<8x128xf32>
    %897 = vector.broadcast %cst_630 : f32 to vector<8x128xf32>
    %898 = arith.minimumf %897, %896 : vector<8x128xf32>
    %899 = arith.minimumf %819, %887 : vector<8x128xf32>
    %cst_631 = arith.constant 0.000000e+00 : f32
    %cst_632 = arith.constant 1.000000e+00 : f32
    %900 = vector.broadcast %cst_631 : f32 to vector<8x128xf32>
    %901 = arith.maximumf %900, %899 : vector<8x128xf32>
    %902 = vector.broadcast %cst_632 : f32 to vector<8x128xf32>
    %903 = arith.minimumf %902, %901 : vector<8x128xf32>
    %904 = arith.minimumf %827, %893 : vector<8x128xf32>
    %cst_633 = arith.constant 0.000000e+00 : f32
    %cst_634 = arith.constant 1.000000e+00 : f32
    %905 = vector.broadcast %cst_633 : f32 to vector<8x128xf32>
    %906 = arith.maximumf %905, %904 : vector<8x128xf32>
    %907 = vector.broadcast %cst_634 : f32 to vector<8x128xf32>
    %908 = arith.minimumf %907, %906 : vector<8x128xf32>
    %909 = arith.minimumf %835, %881 : vector<8x128xf32>
    %cst_635 = arith.constant 0.000000e+00 : f32
    %cst_636 = arith.constant 1.000000e+00 : f32
    %910 = vector.broadcast %cst_635 : f32 to vector<8x128xf32>
    %911 = arith.maximumf %910, %909 : vector<8x128xf32>
    %912 = vector.broadcast %cst_636 : f32 to vector<8x128xf32>
    %913 = arith.minimumf %912, %911 : vector<8x128xf32>
    %914 = arith.minimumf %843, %887 : vector<8x128xf32>
    %cst_637 = arith.constant 0.000000e+00 : f32
    %cst_638 = arith.constant 1.000000e+00 : f32
    %915 = vector.broadcast %cst_637 : f32 to vector<8x128xf32>
    %916 = arith.maximumf %915, %914 : vector<8x128xf32>
    %917 = vector.broadcast %cst_638 : f32 to vector<8x128xf32>
    %918 = arith.minimumf %917, %916 : vector<8x128xf32>
    %919 = arith.minimumf %851, %893 : vector<8x128xf32>
    %cst_639 = arith.constant 0.000000e+00 : f32
    %cst_640 = arith.constant 1.000000e+00 : f32
    %920 = vector.broadcast %cst_639 : f32 to vector<8x128xf32>
    %921 = arith.maximumf %920, %919 : vector<8x128xf32>
    %922 = vector.broadcast %cst_640 : f32 to vector<8x128xf32>
    %923 = arith.minimumf %922, %921 : vector<8x128xf32>
    %924 = arith.minimumf %859, %881 : vector<8x128xf32>
    %cst_641 = arith.constant 0.000000e+00 : f32
    %cst_642 = arith.constant 1.000000e+00 : f32
    %925 = vector.broadcast %cst_641 : f32 to vector<8x128xf32>
    %926 = arith.maximumf %925, %924 : vector<8x128xf32>
    %927 = vector.broadcast %cst_642 : f32 to vector<8x128xf32>
    %928 = arith.minimumf %927, %926 : vector<8x128xf32>
    %929 = arith.minimumf %867, %887 : vector<8x128xf32>
    %cst_643 = arith.constant 0.000000e+00 : f32
    %cst_644 = arith.constant 1.000000e+00 : f32
    %930 = vector.broadcast %cst_643 : f32 to vector<8x128xf32>
    %931 = arith.maximumf %930, %929 : vector<8x128xf32>
    %932 = vector.broadcast %cst_644 : f32 to vector<8x128xf32>
    %933 = arith.minimumf %932, %931 : vector<8x128xf32>
    %934 = arith.minimumf %875, %893 : vector<8x128xf32>
    %cst_645 = arith.constant 0.000000e+00 : f32
    %cst_646 = arith.constant 1.000000e+00 : f32
    %935 = vector.broadcast %cst_645 : f32 to vector<8x128xf32>
    %936 = arith.maximumf %935, %934 : vector<8x128xf32>
    %937 = vector.broadcast %cst_646 : f32 to vector<8x128xf32>
    %938 = arith.minimumf %937, %936 : vector<8x128xf32>
    %939 = arith.maximumf %898, %903 : vector<8x128xf32>
    %940 = arith.maximumf %939, %908 : vector<8x128xf32>
    %941 = arith.maximumf %913, %918 : vector<8x128xf32>
    %942 = arith.maximumf %941, %923 : vector<8x128xf32>
    %943 = arith.maximumf %928, %933 : vector<8x128xf32>
    %944 = arith.maximumf %943, %938 : vector<8x128xf32>
    %cst_647 = arith.constant 1.000000e+00 : f32
    %945 = vector.broadcast %cst_647 : f32 to vector<8x128xf32>
    %946 = arith.subf %945, %898 : vector<8x128xf32>
    %947 = arith.minimumf %940, %946 : vector<8x128xf32>
    %cst_648 = arith.constant 1.000000e+00 : f32
    %948 = vector.broadcast %cst_648 : f32 to vector<8x128xf32>
    %949 = arith.subf %948, %947 : vector<8x128xf32>
    %c54_649 = arith.constant 54 : index
    %c0_650 = arith.constant 0 : index
    %c0_651 = arith.constant 0 : index
    %950 = vector.load %arg1[%c54_649, %c0_650, %c0_651] : memref<81x8x128xf32, #tpu.memory_space<vmem>>, vector<1x8x128xf32>
    %951 = vector.shape_cast %950 : vector<1x8x128xf32> to vector<8x128xf32>
    %952 = arith.minimumf %951, %949 : vector<8x128xf32>
    %cst_652 = arith.constant 0.000000e+00 : f32
    %953 = vector.broadcast %cst_652 : f32 to vector<8x128xf32>
    %954 = arith.maximumf %952, %953 : vector<8x128xf32>
    %c54_653 = arith.constant 54 : index
    %c0_654 = arith.constant 0 : index
    %c0_655 = arith.constant 0 : index
    %955 = vector.load %arg2[%c54_653, %c0_654, %c0_655] : memref<81x8x128xf32, #tpu.memory_space<vmem>>, vector<1x8x128xf32>
    %956 = vector.shape_cast %955 : vector<1x8x128xf32> to vector<8x128xf32>
    %957 = vector.shape_cast %954 : vector<8x128xf32> to vector<1x8x128xf32>
    tpu.vector_store %arg2[%c54_653, %c0_654, %c0_655], %957 {strides = array<i32>} : memref<81x8x128xf32, #tpu.memory_space<vmem>>, vector<1x8x128xf32>,
    %c55_656 = arith.constant 55 : index
    %c0_657 = arith.constant 0 : index
    %c0_658 = arith.constant 0 : index
    %958 = vector.load %arg1[%c55_656, %c0_657, %c0_658] : memref<81x8x128xf32, #tpu.memory_space<vmem>>, vector<1x8x128xf32>
    %959 = vector.shape_cast %958 : vector<1x8x128xf32> to vector<8x128xf32>
    %960 = arith.minimumf %959, %949 : vector<8x128xf32>
    %cst_659 = arith.constant 0.000000e+00 : f32
    %961 = vector.broadcast %cst_659 : f32 to vector<8x128xf32>
    %962 = arith.maximumf %960, %961 : vector<8x128xf32>
    %c55_660 = arith.constant 55 : index
    %c0_661 = arith.constant 0 : index
    %c0_662 = arith.constant 0 : index
    %963 = vector.load %arg2[%c55_660, %c0_661, %c0_662] : memref<81x8x128xf32, #tpu.memory_space<vmem>>, vector<1x8x128xf32>
    %964 = vector.shape_cast %963 : vector<1x8x128xf32> to vector<8x128xf32>
    %965 = vector.shape_cast %962 : vector<8x128xf32> to vector<1x8x128xf32>
    tpu.vector_store %arg2[%c55_660, %c0_661, %c0_662], %965 {strides = array<i32>} : memref<81x8x128xf32, #tpu.memory_space<vmem>>, vector<1x8x128xf32>,
    %c56_663 = arith.constant 56 : index
    %c0_664 = arith.constant 0 : index
    %c0_665 = arith.constant 0 : index
    %966 = vector.load %arg1[%c56_663, %c0_664, %c0_665] : memref<81x8x128xf32, #tpu.memory_space<vmem>>, vector<1x8x128xf32>
    %967 = vector.shape_cast %966 : vector<1x8x128xf32> to vector<8x128xf32>
    %968 = arith.minimumf %967, %949 : vector<8x128xf32>
    %cst_666 = arith.constant 0.000000e+00 : f32
    %969 = vector.broadcast %cst_666 : f32 to vector<8x128xf32>
    %970 = arith.maximumf %968, %969 : vector<8x128xf32>
    %c56_667 = arith.constant 56 : index
    %c0_668 = arith.constant 0 : index
    %c0_669 = arith.constant 0 : index
    %971 = vector.load %arg2[%c56_667, %c0_668, %c0_669] : memref<81x8x128xf32, #tpu.memory_space<vmem>>, vector<1x8x128xf32>
    %972 = vector.shape_cast %971 : vector<1x8x128xf32> to vector<8x128xf32>
    %973 = vector.shape_cast %970 : vector<8x128xf32> to vector<1x8x128xf32>
    tpu.vector_store %arg2[%c56_667, %c0_668, %c0_669], %973 {strides = array<i32>} : memref<81x8x128xf32, #tpu.memory_space<vmem>>, vector<1x8x128xf32>,
    %cst_670 = arith.constant 1.000000e+00 : f32
    %974 = vector.broadcast %cst_670 : f32 to vector<8x128xf32>
    %975 = arith.subf %974, %903 : vector<8x128xf32>
    %976 = arith.minimumf %940, %975 : vector<8x128xf32>
    %cst_671 = arith.constant 1.000000e+00 : f32
    %977 = vector.broadcast %cst_671 : f32 to vector<8x128xf32>
    %978 = arith.subf %977, %976 : vector<8x128xf32>
    %c57_672 = arith.constant 57 : index
    %c0_673 = arith.constant 0 : index
    %c0_674 = arith.constant 0 : index
    %979 = vector.load %arg1[%c57_672, %c0_673, %c0_674] : memref<81x8x128xf32, #tpu.memory_space<vmem>>, vector<1x8x128xf32>
    %980 = vector.shape_cast %979 : vector<1x8x128xf32> to vector<8x128xf32>
    %981 = arith.minimumf %980, %978 : vector<8x128xf32>
    %cst_675 = arith.constant 0.000000e+00 : f32
    %982 = vector.broadcast %cst_675 : f32 to vector<8x128xf32>
    %983 = arith.maximumf %981, %982 : vector<8x128xf32>
    %c57_676 = arith.constant 57 : index
    %c0_677 = arith.constant 0 : index
    %c0_678 = arith.constant 0 : index
    %984 = vector.load %arg2[%c57_676, %c0_677, %c0_678] : memref<81x8x128xf32, #tpu.memory_space<vmem>>, vector<1x8x128xf32>
    %985 = vector.shape_cast %984 : vector<1x8x128xf32> to vector<8x128xf32>
    %986 = vector.shape_cast %983 : vector<8x128xf32> to vector<1x8x128xf32>
    tpu.vector_store %arg2[%c57_676, %c0_677, %c0_678], %986 {strides = array<i32>} : memref<81x8x128xf32, #tpu.memory_space<vmem>>, vector<1x8x128xf32>,
    %c58_679 = arith.constant 58 : index
    %c0_680 = arith.constant 0 : index
    %c0_681 = arith.constant 0 : index
    %987 = vector.load %arg1[%c58_679, %c0_680, %c0_681] : memref<81x8x128xf32, #tpu.memory_space<vmem>>, vector<1x8x128xf32>
    %988 = vector.shape_cast %987 : vector<1x8x128xf32> to vector<8x128xf32>
    %989 = arith.minimumf %988, %978 : vector<8x128xf32>
    %cst_682 = arith.constant 0.000000e+00 : f32
    %990 = vector.broadcast %cst_682 : f32 to vector<8x128xf32>
    %991 = arith.maximumf %989, %990 : vector<8x128xf32>
    %c58_683 = arith.constant 58 : index
    %c0_684 = arith.constant 0 : index
    %c0_685 = arith.constant 0 : index
    %992 = vector.load %arg2[%c58_683, %c0_684, %c0_685] : memref<81x8x128xf32, #tpu.memory_space<vmem>>, vector<1x8x128xf32>
    %993 = vector.shape_cast %992 : vector<1x8x128xf32> to vector<8x128xf32>
    %994 = vector.shape_cast %991 : vector<8x128xf32> to vector<1x8x128xf32>
    tpu.vector_store %arg2[%c58_683, %c0_684, %c0_685], %994 {strides = array<i32>} : memref<81x8x128xf32, #tpu.memory_space<vmem>>, vector<1x8x128xf32>,
    %c59_686 = arith.constant 59 : index
    %c0_687 = arith.constant 0 : index
    %c0_688 = arith.constant 0 : index
    %995 = vector.load %arg1[%c59_686, %c0_687, %c0_688] : memref<81x8x128xf32, #tpu.memory_space<vmem>>, vector<1x8x128xf32>
    %996 = vector.shape_cast %995 : vector<1x8x128xf32> to vector<8x128xf32>
    %997 = arith.minimumf %996, %978 : vector<8x128xf32>
    %cst_689 = arith.constant 0.000000e+00 : f32
    %998 = vector.broadcast %cst_689 : f32 to vector<8x128xf32>
    %999 = arith.maximumf %997, %998 : vector<8x128xf32>
    %c59_690 = arith.constant 59 : index
    %c0_691 = arith.constant 0 : index
    %c0_692 = arith.constant 0 : index
    %1000 = vector.load %arg2[%c59_690, %c0_691, %c0_692] : memref<81x8x128xf32, #tpu.memory_space<vmem>>, vector<1x8x128xf32>
    %1001 = vector.shape_cast %1000 : vector<1x8x128xf32> to vector<8x128xf32>
    %1002 = vector.shape_cast %999 : vector<8x128xf32> to vector<1x8x128xf32>
    tpu.vector_store %arg2[%c59_690, %c0_691, %c0_692], %1002 {strides = array<i32>} : memref<81x8x128xf32, #tpu.memory_space<vmem>>, vector<1x8x128xf32>,
    %cst_693 = arith.constant 1.000000e+00 : f32
    %1003 = vector.broadcast %cst_693 : f32 to vector<8x128xf32>
    %1004 = arith.subf %1003, %908 : vector<8x128xf32>
    %1005 = arith.minimumf %940, %1004 : vector<8x128xf32>
    %cst_694 = arith.constant 1.000000e+00 : f32
    %1006 = vector.broadcast %cst_694 : f32 to vector<8x128xf32>
    %1007 = arith.subf %1006, %1005 : vector<8x128xf32>
    %c60_695 = arith.constant 60 : index
    %c0_696 = arith.constant 0 : index
    %c0_697 = arith.constant 0 : index
    %1008 = vector.load %arg1[%c60_695, %c0_696, %c0_697] : memref<81x8x128xf32, #tpu.memory_space<vmem>>, vector<1x8x128xf32>
    %1009 = vector.shape_cast %1008 : vector<1x8x128xf32> to vector<8x128xf32>
    %1010 = arith.minimumf %1009, %1007 : vector<8x128xf32>
    %cst_698 = arith.constant 0.000000e+00 : f32
    %1011 = vector.broadcast %cst_698 : f32 to vector<8x128xf32>
    %1012 = arith.maximumf %1010, %1011 : vector<8x128xf32>
    %c60_699 = arith.constant 60 : index
    %c0_700 = arith.constant 0 : index
    %c0_701 = arith.constant 0 : index
    %1013 = vector.load %arg2[%c60_699, %c0_700, %c0_701] : memref<81x8x128xf32, #tpu.memory_space<vmem>>, vector<1x8x128xf32>
    %1014 = vector.shape_cast %1013 : vector<1x8x128xf32> to vector<8x128xf32>
    %1015 = vector.shape_cast %1012 : vector<8x128xf32> to vector<1x8x128xf32>
    tpu.vector_store %arg2[%c60_699, %c0_700, %c0_701], %1015 {strides = array<i32>} : memref<81x8x128xf32, #tpu.memory_space<vmem>>, vector<1x8x128xf32>,
    %c61_702 = arith.constant 61 : index
    %c0_703 = arith.constant 0 : index
    %c0_704 = arith.constant 0 : index
    %1016 = vector.load %arg1[%c61_702, %c0_703, %c0_704] : memref<81x8x128xf32, #tpu.memory_space<vmem>>, vector<1x8x128xf32>
    %1017 = vector.shape_cast %1016 : vector<1x8x128xf32> to vector<8x128xf32>
    %1018 = arith.minimumf %1017, %1007 : vector<8x128xf32>
    %cst_705 = arith.constant 0.000000e+00 : f32
    %1019 = vector.broadcast %cst_705 : f32 to vector<8x128xf32>
    %1020 = arith.maximumf %1018, %1019 : vector<8x128xf32>
    %c61_706 = arith.constant 61 : index
    %c0_707 = arith.constant 0 : index
    %c0_708 = arith.constant 0 : index
    %1021 = vector.load %arg2[%c61_706, %c0_707, %c0_708] : memref<81x8x128xf32, #tpu.memory_space<vmem>>, vector<1x8x128xf32>
    %1022 = vector.shape_cast %1021 : vector<1x8x128xf32> to vector<8x128xf32>
    %1023 = vector.shape_cast %1020 : vector<8x128xf32> to vector<1x8x128xf32>
    tpu.vector_store %arg2[%c61_706, %c0_707, %c0_708], %1023 {strides = array<i32>} : memref<81x8x128xf32, #tpu.memory_space<vmem>>, vector<1x8x128xf32>,
    %c62_709 = arith.constant 62 : index
    %c0_710 = arith.constant 0 : index
    %c0_711 = arith.constant 0 : index
    %1024 = vector.load %arg1[%c62_709, %c0_710, %c0_711] : memref<81x8x128xf32, #tpu.memory_space<vmem>>, vector<1x8x128xf32>
    %1025 = vector.shape_cast %1024 : vector<1x8x128xf32> to vector<8x128xf32>
    %1026 = arith.minimumf %1025, %1007 : vector<8x128xf32>
    %cst_712 = arith.constant 0.000000e+00 : f32
    %1027 = vector.broadcast %cst_712 : f32 to vector<8x128xf32>
    %1028 = arith.maximumf %1026, %1027 : vector<8x128xf32>
    %c62_713 = arith.constant 62 : index
    %c0_714 = arith.constant 0 : index
    %c0_715 = arith.constant 0 : index
    %1029 = vector.load %arg2[%c62_713, %c0_714, %c0_715] : memref<81x8x128xf32, #tpu.memory_space<vmem>>, vector<1x8x128xf32>
    %1030 = vector.shape_cast %1029 : vector<1x8x128xf32> to vector<8x128xf32>
    %1031 = vector.shape_cast %1028 : vector<8x128xf32> to vector<1x8x128xf32>
    tpu.vector_store %arg2[%c62_713, %c0_714, %c0_715], %1031 {strides = array<i32>} : memref<81x8x128xf32, #tpu.memory_space<vmem>>, vector<1x8x128xf32>,
    %cst_716 = arith.constant 1.000000e+00 : f32
    %1032 = vector.broadcast %cst_716 : f32 to vector<8x128xf32>
    %1033 = arith.subf %1032, %913 : vector<8x128xf32>
    %1034 = arith.minimumf %942, %1033 : vector<8x128xf32>
    %cst_717 = arith.constant 1.000000e+00 : f32
    %1035 = vector.broadcast %cst_717 : f32 to vector<8x128xf32>
    %1036 = arith.subf %1035, %1034 : vector<8x128xf32>
    %c63_718 = arith.constant 63 : index
    %c0_719 = arith.constant 0 : index
    %c0_720 = arith.constant 0 : index
    %1037 = vector.load %arg1[%c63_718, %c0_719, %c0_720] : memref<81x8x128xf32, #tpu.memory_space<vmem>>, vector<1x8x128xf32>
    %1038 = vector.shape_cast %1037 : vector<1x8x128xf32> to vector<8x128xf32>
    %1039 = arith.minimumf %1038, %1036 : vector<8x128xf32>
    %cst_721 = arith.constant 0.000000e+00 : f32
    %1040 = vector.broadcast %cst_721 : f32 to vector<8x128xf32>
    %1041 = arith.maximumf %1039, %1040 : vector<8x128xf32>
    %c63_722 = arith.constant 63 : index
    %c0_723 = arith.constant 0 : index
    %c0_724 = arith.constant 0 : index
    %1042 = vector.load %arg2[%c63_722, %c0_723, %c0_724] : memref<81x8x128xf32, #tpu.memory_space<vmem>>, vector<1x8x128xf32>
    %1043 = vector.shape_cast %1042 : vector<1x8x128xf32> to vector<8x128xf32>
    %1044 = vector.shape_cast %1041 : vector<8x128xf32> to vector<1x8x128xf32>
    tpu.vector_store %arg2[%c63_722, %c0_723, %c0_724], %1044 {strides = array<i32>} : memref<81x8x128xf32, #tpu.memory_space<vmem>>, vector<1x8x128xf32>,
    %c64_725 = arith.constant 64 : index
    %c0_726 = arith.constant 0 : index
    %c0_727 = arith.constant 0 : index
    %1045 = vector.load %arg1[%c64_725, %c0_726, %c0_727] : memref<81x8x128xf32, #tpu.memory_space<vmem>>, vector<1x8x128xf32>
    %1046 = vector.shape_cast %1045 : vector<1x8x128xf32> to vector<8x128xf32>
    %1047 = arith.minimumf %1046, %1036 : vector<8x128xf32>
    %cst_728 = arith.constant 0.000000e+00 : f32
    %1048 = vector.broadcast %cst_728 : f32 to vector<8x128xf32>
    %1049 = arith.maximumf %1047, %1048 : vector<8x128xf32>
    %c64_729 = arith.constant 64 : index
    %c0_730 = arith.constant 0 : index
    %c0_731 = arith.constant 0 : index
    %1050 = vector.load %arg2[%c64_729, %c0_730, %c0_731] : memref<81x8x128xf32, #tpu.memory_space<vmem>>, vector<1x8x128xf32>
    %1051 = vector.shape_cast %1050 : vector<1x8x128xf32> to vector<8x128xf32>
    %1052 = vector.shape_cast %1049 : vector<8x128xf32> to vector<1x8x128xf32>
    tpu.vector_store %arg2[%c64_729, %c0_730, %c0_731], %1052 {strides = array<i32>} : memref<81x8x128xf32, #tpu.memory_space<vmem>>, vector<1x8x128xf32>,
    %c65_732 = arith.constant 65 : index
    %c0_733 = arith.constant 0 : index
    %c0_734 = arith.constant 0 : index
    %1053 = vector.load %arg1[%c65_732, %c0_733, %c0_734] : memref<81x8x128xf32, #tpu.memory_space<vmem>>, vector<1x8x128xf32>
    %1054 = vector.shape_cast %1053 : vector<1x8x128xf32> to vector<8x128xf32>
    %1055 = arith.minimumf %1054, %1036 : vector<8x128xf32>
    %cst_735 = arith.constant 0.000000e+00 : f32
    %1056 = vector.broadcast %cst_735 : f32 to vector<8x128xf32>
    %1057 = arith.maximumf %1055, %1056 : vector<8x128xf32>
    %c65_736 = arith.constant 65 : index
    %c0_737 = arith.constant 0 : index
    %c0_738 = arith.constant 0 : index
    %1058 = vector.load %arg2[%c65_736, %c0_737, %c0_738] : memref<81x8x128xf32, #tpu.memory_space<vmem>>, vector<1x8x128xf32>
    %1059 = vector.shape_cast %1058 : vector<1x8x128xf32> to vector<8x128xf32>
    %1060 = vector.shape_cast %1057 : vector<8x128xf32> to vector<1x8x128xf32>
    tpu.vector_store %arg2[%c65_736, %c0_737, %c0_738], %1060 {strides = array<i32>} : memref<81x8x128xf32, #tpu.memory_space<vmem>>, vector<1x8x128xf32>,
    %cst_739 = arith.constant 1.000000e+00 : f32
    %1061 = vector.broadcast %cst_739 : f32 to vector<8x128xf32>
    %1062 = arith.subf %1061, %918 : vector<8x128xf32>
    %1063 = arith.minimumf %942, %1062 : vector<8x128xf32>
    %cst_740 = arith.constant 1.000000e+00 : f32
    %1064 = vector.broadcast %cst_740 : f32 to vector<8x128xf32>
    %1065 = arith.subf %1064, %1063 : vector<8x128xf32>
    %c66_741 = arith.constant 66 : index
    %c0_742 = arith.constant 0 : index
    %c0_743 = arith.constant 0 : index
    %1066 = vector.load %arg1[%c66_741, %c0_742, %c0_743] : memref<81x8x128xf32, #tpu.memory_space<vmem>>, vector<1x8x128xf32>
    %1067 = vector.shape_cast %1066 : vector<1x8x128xf32> to vector<8x128xf32>
    %1068 = arith.minimumf %1067, %1065 : vector<8x128xf32>
    %cst_744 = arith.constant 0.000000e+00 : f32
    %1069 = vector.broadcast %cst_744 : f32 to vector<8x128xf32>
    %1070 = arith.maximumf %1068, %1069 : vector<8x128xf32>
    %c66_745 = arith.constant 66 : index
    %c0_746 = arith.constant 0 : index
    %c0_747 = arith.constant 0 : index
    %1071 = vector.load %arg2[%c66_745, %c0_746, %c0_747] : memref<81x8x128xf32, #tpu.memory_space<vmem>>, vector<1x8x128xf32>
    %1072 = vector.shape_cast %1071 : vector<1x8x128xf32> to vector<8x128xf32>
    %1073 = vector.shape_cast %1070 : vector<8x128xf32> to vector<1x8x128xf32>
    tpu.vector_store %arg2[%c66_745, %c0_746, %c0_747], %1073 {strides = array<i32>} : memref<81x8x128xf32, #tpu.memory_space<vmem>>, vector<1x8x128xf32>,
    %c67_748 = arith.constant 67 : index
    %c0_749 = arith.constant 0 : index
    %c0_750 = arith.constant 0 : index
    %1074 = vector.load %arg1[%c67_748, %c0_749, %c0_750] : memref<81x8x128xf32, #tpu.memory_space<vmem>>, vector<1x8x128xf32>
    %1075 = vector.shape_cast %1074 : vector<1x8x128xf32> to vector<8x128xf32>
    %1076 = arith.minimumf %1075, %1065 : vector<8x128xf32>
    %cst_751 = arith.constant 0.000000e+00 : f32
    %1077 = vector.broadcast %cst_751 : f32 to vector<8x128xf32>
    %1078 = arith.maximumf %1076, %1077 : vector<8x128xf32>
    %c67_752 = arith.constant 67 : index
    %c0_753 = arith.constant 0 : index
    %c0_754 = arith.constant 0 : index
    %1079 = vector.load %arg2[%c67_752, %c0_753, %c0_754] : memref<81x8x128xf32, #tpu.memory_space<vmem>>, vector<1x8x128xf32>
    %1080 = vector.shape_cast %1079 : vector<1x8x128xf32> to vector<8x128xf32>
    %1081 = vector.shape_cast %1078 : vector<8x128xf32> to vector<1x8x128xf32>
    tpu.vector_store %arg2[%c67_752, %c0_753, %c0_754], %1081 {strides = array<i32>} : memref<81x8x128xf32, #tpu.memory_space<vmem>>, vector<1x8x128xf32>,
    %c68_755 = arith.constant 68 : index
    %c0_756 = arith.constant 0 : index
    %c0_757 = arith.constant 0 : index
    %1082 = vector.load %arg1[%c68_755, %c0_756, %c0_757] : memref<81x8x128xf32, #tpu.memory_space<vmem>>, vector<1x8x128xf32>
    %1083 = vector.shape_cast %1082 : vector<1x8x128xf32> to vector<8x128xf32>
    %1084 = arith.minimumf %1083, %1065 : vector<8x128xf32>
    %cst_758 = arith.constant 0.000000e+00 : f32
    %1085 = vector.broadcast %cst_758 : f32 to vector<8x128xf32>
    %1086 = arith.maximumf %1084, %1085 : vector<8x128xf32>
    %c68_759 = arith.constant 68 : index
    %c0_760 = arith.constant 0 : index
    %c0_761 = arith.constant 0 : index
    %1087 = vector.load %arg2[%c68_759, %c0_760, %c0_761] : memref<81x8x128xf32, #tpu.memory_space<vmem>>, vector<1x8x128xf32>
    %1088 = vector.shape_cast %1087 : vector<1x8x128xf32> to vector<8x128xf32>
    %1089 = vector.shape_cast %1086 : vector<8x128xf32> to vector<1x8x128xf32>
    tpu.vector_store %arg2[%c68_759, %c0_760, %c0_761], %1089 {strides = array<i32>} : memref<81x8x128xf32, #tpu.memory_space<vmem>>, vector<1x8x128xf32>,
    %cst_762 = arith.constant 1.000000e+00 : f32
    %1090 = vector.broadcast %cst_762 : f32 to vector<8x128xf32>
    %1091 = arith.subf %1090, %923 : vector<8x128xf32>
    %1092 = arith.minimumf %942, %1091 : vector<8x128xf32>
    %cst_763 = arith.constant 1.000000e+00 : f32
    %1093 = vector.broadcast %cst_763 : f32 to vector<8x128xf32>
    %1094 = arith.subf %1093, %1092 : vector<8x128xf32>
    %c69_764 = arith.constant 69 : index
    %c0_765 = arith.constant 0 : index
    %c0_766 = arith.constant 0 : index
    %1095 = vector.load %arg1[%c69_764, %c0_765, %c0_766] : memref<81x8x128xf32, #tpu.memory_space<vmem>>, vector<1x8x128xf32>
    %1096 = vector.shape_cast %1095 : vector<1x8x128xf32> to vector<8x128xf32>
    %1097 = arith.minimumf %1096, %1094 : vector<8x128xf32>
    %cst_767 = arith.constant 0.000000e+00 : f32
    %1098 = vector.broadcast %cst_767 : f32 to vector<8x128xf32>
    %1099 = arith.maximumf %1097, %1098 : vector<8x128xf32>
    %c69_768 = arith.constant 69 : index
    %c0_769 = arith.constant 0 : index
    %c0_770 = arith.constant 0 : index
    %1100 = vector.load %arg2[%c69_768, %c0_769, %c0_770] : memref<81x8x128xf32, #tpu.memory_space<vmem>>, vector<1x8x128xf32>
    %1101 = vector.shape_cast %1100 : vector<1x8x128xf32> to vector<8x128xf32>
    %1102 = vector.shape_cast %1099 : vector<8x128xf32> to vector<1x8x128xf32>
    tpu.vector_store %arg2[%c69_768, %c0_769, %c0_770], %1102 {strides = array<i32>} : memref<81x8x128xf32, #tpu.memory_space<vmem>>, vector<1x8x128xf32>,
    %c70_771 = arith.constant 70 : index
    %c0_772 = arith.constant 0 : index
    %c0_773 = arith.constant 0 : index
    %1103 = vector.load %arg1[%c70_771, %c0_772, %c0_773] : memref<81x8x128xf32, #tpu.memory_space<vmem>>, vector<1x8x128xf32>
    %1104 = vector.shape_cast %1103 : vector<1x8x128xf32> to vector<8x128xf32>
    %1105 = arith.minimumf %1104, %1094 : vector<8x128xf32>
    %cst_774 = arith.constant 0.000000e+00 : f32
    %1106 = vector.broadcast %cst_774 : f32 to vector<8x128xf32>
    %1107 = arith.maximumf %1105, %1106 : vector<8x128xf32>
    %c70_775 = arith.constant 70 : index
    %c0_776 = arith.constant 0 : index
    %c0_777 = arith.constant 0 : index
    %1108 = vector.load %arg2[%c70_775, %c0_776, %c0_777] : memref<81x8x128xf32, #tpu.memory_space<vmem>>, vector<1x8x128xf32>
    %1109 = vector.shape_cast %1108 : vector<1x8x128xf32> to vector<8x128xf32>
    %1110 = vector.shape_cast %1107 : vector<8x128xf32> to vector<1x8x128xf32>
    tpu.vector_store %arg2[%c70_775, %c0_776, %c0_777], %1110 {strides = array<i32>} : memref<81x8x128xf32, #tpu.memory_space<vmem>>, vector<1x8x128xf32>,
    %c71_778 = arith.constant 71 : index
    %c0_779 = arith.constant 0 : index
    %c0_780 = arith.constant 0 : index
    %1111 = vector.load %arg1[%c71_778, %c0_779, %c0_780] : memref<81x8x128xf32, #tpu.memory_space<vmem>>, vector<1x8x128xf32>
    %1112 = vector.shape_cast %1111 : vector<1x8x128xf32> to vector<8x128xf32>
    %1113 = arith.minimumf %1112, %1094 : vector<8x128xf32>
    %cst_781 = arith.constant 0.000000e+00 : f32
    %1114 = vector.broadcast %cst_781 : f32 to vector<8x128xf32>
    %1115 = arith.maximumf %1113, %1114 : vector<8x128xf32>
    %c71_782 = arith.constant 71 : index
    %c0_783 = arith.constant 0 : index
    %c0_784 = arith.constant 0 : index
    %1116 = vector.load %arg2[%c71_782, %c0_783, %c0_784] : memref<81x8x128xf32, #tpu.memory_space<vmem>>, vector<1x8x128xf32>
    %1117 = vector.shape_cast %1116 : vector<1x8x128xf32> to vector<8x128xf32>
    %1118 = vector.shape_cast %1115 : vector<8x128xf32> to vector<1x8x128xf32>
    tpu.vector_store %arg2[%c71_782, %c0_783, %c0_784], %1118 {strides = array<i32>} : memref<81x8x128xf32, #tpu.memory_space<vmem>>, vector<1x8x128xf32>,
    %cst_785 = arith.constant 1.000000e+00 : f32
    %1119 = vector.broadcast %cst_785 : f32 to vector<8x128xf32>
    %1120 = arith.subf %1119, %928 : vector<8x128xf32>
    %1121 = arith.minimumf %944, %1120 : vector<8x128xf32>
    %cst_786 = arith.constant 1.000000e+00 : f32
    %1122 = vector.broadcast %cst_786 : f32 to vector<8x128xf32>
    %1123 = arith.subf %1122, %1121 : vector<8x128xf32>
    %c72_787 = arith.constant 72 : index
    %c0_788 = arith.constant 0 : index
    %c0_789 = arith.constant 0 : index
    %1124 = vector.load %arg1[%c72_787, %c0_788, %c0_789] : memref<81x8x128xf32, #tpu.memory_space<vmem>>, vector<1x8x128xf32>
    %1125 = vector.shape_cast %1124 : vector<1x8x128xf32> to vector<8x128xf32>
    %1126 = arith.minimumf %1125, %1123 : vector<8x128xf32>
    %cst_790 = arith.constant 0.000000e+00 : f32
    %1127 = vector.broadcast %cst_790 : f32 to vector<8x128xf32>
    %1128 = arith.maximumf %1126, %1127 : vector<8x128xf32>
    %c72_791 = arith.constant 72 : index
    %c0_792 = arith.constant 0 : index
    %c0_793 = arith.constant 0 : index
    %1129 = vector.load %arg2[%c72_791, %c0_792, %c0_793] : memref<81x8x128xf32, #tpu.memory_space<vmem>>, vector<1x8x128xf32>
    %1130 = vector.shape_cast %1129 : vector<1x8x128xf32> to vector<8x128xf32>
    %1131 = vector.shape_cast %1128 : vector<8x128xf32> to vector<1x8x128xf32>
    tpu.vector_store %arg2[%c72_791, %c0_792, %c0_793], %1131 {strides = array<i32>} : memref<81x8x128xf32, #tpu.memory_space<vmem>>, vector<1x8x128xf32>,
    %c73_794 = arith.constant 73 : index
    %c0_795 = arith.constant 0 : index
    %c0_796 = arith.constant 0 : index
    %1132 = vector.load %arg1[%c73_794, %c0_795, %c0_796] : memref<81x8x128xf32, #tpu.memory_space<vmem>>, vector<1x8x128xf32>
    %1133 = vector.shape_cast %1132 : vector<1x8x128xf32> to vector<8x128xf32>
    %1134 = arith.minimumf %1133, %1123 : vector<8x128xf32>
    %cst_797 = arith.constant 0.000000e+00 : f32
    %1135 = vector.broadcast %cst_797 : f32 to vector<8x128xf32>
    %1136 = arith.maximumf %1134, %1135 : vector<8x128xf32>
    %c73_798 = arith.constant 73 : index
    %c0_799 = arith.constant 0 : index
    %c0_800 = arith.constant 0 : index
    %1137 = vector.load %arg2[%c73_798, %c0_799, %c0_800] : memref<81x8x128xf32, #tpu.memory_space<vmem>>, vector<1x8x128xf32>
    %1138 = vector.shape_cast %1137 : vector<1x8x128xf32> to vector<8x128xf32>
    %1139 = vector.shape_cast %1136 : vector<8x128xf32> to vector<1x8x128xf32>
    tpu.vector_store %arg2[%c73_798, %c0_799, %c0_800], %1139 {strides = array<i32>} : memref<81x8x128xf32, #tpu.memory_space<vmem>>, vector<1x8x128xf32>,
    %c74_801 = arith.constant 74 : index
    %c0_802 = arith.constant 0 : index
    %c0_803 = arith.constant 0 : index
    %1140 = vector.load %arg1[%c74_801, %c0_802, %c0_803] : memref<81x8x128xf32, #tpu.memory_space<vmem>>, vector<1x8x128xf32>
    %1141 = vector.shape_cast %1140 : vector<1x8x128xf32> to vector<8x128xf32>
    %1142 = arith.minimumf %1141, %1123 : vector<8x128xf32>
    %cst_804 = arith.constant 0.000000e+00 : f32
    %1143 = vector.broadcast %cst_804 : f32 to vector<8x128xf32>
    %1144 = arith.maximumf %1142, %1143 : vector<8x128xf32>
    %c74_805 = arith.constant 74 : index
    %c0_806 = arith.constant 0 : index
    %c0_807 = arith.constant 0 : index
    %1145 = vector.load %arg2[%c74_805, %c0_806, %c0_807] : memref<81x8x128xf32, #tpu.memory_space<vmem>>, vector<1x8x128xf32>
    %1146 = vector.shape_cast %1145 : vector<1x8x128xf32> to vector<8x128xf32>
    %1147 = vector.shape_cast %1144 : vector<8x128xf32> to vector<1x8x128xf32>
    tpu.vector_store %arg2[%c74_805, %c0_806, %c0_807], %1147 {strides = array<i32>} : memref<81x8x128xf32, #tpu.memory_space<vmem>>, vector<1x8x128xf32>,
    %cst_808 = arith.constant 1.000000e+00 : f32
    %1148 = vector.broadcast %cst_808 : f32 to vector<8x128xf32>
    %1149 = arith.subf %1148, %933 : vector<8x128xf32>
    %1150 = arith.minimumf %944, %1149 : vector<8x128xf32>
    %cst_809 = arith.constant 1.000000e+00 : f32
    %1151 = vector.broadcast %cst_809 : f32 to vector<8x128xf32>
    %1152 = arith.subf %1151, %1150 : vector<8x128xf32>
    %c75_810 = arith.constant 75 : index
    %c0_811 = arith.constant 0 : index
    %c0_812 = arith.constant 0 : index
    %1153 = vector.load %arg1[%c75_810, %c0_811, %c0_812] : memref<81x8x128xf32, #tpu.memory_space<vmem>>, vector<1x8x128xf32>
    %1154 = vector.shape_cast %1153 : vector<1x8x128xf32> to vector<8x128xf32>
    %1155 = arith.minimumf %1154, %1152 : vector<8x128xf32>
    %cst_813 = arith.constant 0.000000e+00 : f32
    %1156 = vector.broadcast %cst_813 : f32 to vector<8x128xf32>
    %1157 = arith.maximumf %1155, %1156 : vector<8x128xf32>
    %c75_814 = arith.constant 75 : index
    %c0_815 = arith.constant 0 : index
    %c0_816 = arith.constant 0 : index
    %1158 = vector.load %arg2[%c75_814, %c0_815, %c0_816] : memref<81x8x128xf32, #tpu.memory_space<vmem>>, vector<1x8x128xf32>
    %1159 = vector.shape_cast %1158 : vector<1x8x128xf32> to vector<8x128xf32>
    %1160 = vector.shape_cast %1157 : vector<8x128xf32> to vector<1x8x128xf32>
    tpu.vector_store %arg2[%c75_814, %c0_815, %c0_816], %1160 {strides = array<i32>} : memref<81x8x128xf32, #tpu.memory_space<vmem>>, vector<1x8x128xf32>,
    %c76_817 = arith.constant 76 : index
    %c0_818 = arith.constant 0 : index
    %c0_819 = arith.constant 0 : index
    %1161 = vector.load %arg1[%c76_817, %c0_818, %c0_819] : memref<81x8x128xf32, #tpu.memory_space<vmem>>, vector<1x8x128xf32>
    %1162 = vector.shape_cast %1161 : vector<1x8x128xf32> to vector<8x128xf32>
    %1163 = arith.minimumf %1162, %1152 : vector<8x128xf32>
    %cst_820 = arith.constant 0.000000e+00 : f32
    %1164 = vector.broadcast %cst_820 : f32 to vector<8x128xf32>
    %1165 = arith.maximumf %1163, %1164 : vector<8x128xf32>
    %c76_821 = arith.constant 76 : index
    %c0_822 = arith.constant 0 : index
    %c0_823 = arith.constant 0 : index
    %1166 = vector.load %arg2[%c76_821, %c0_822, %c0_823] : memref<81x8x128xf32, #tpu.memory_space<vmem>>, vector<1x8x128xf32>
    %1167 = vector.shape_cast %1166 : vector<1x8x128xf32> to vector<8x128xf32>
    %1168 = vector.shape_cast %1165 : vector<8x128xf32> to vector<1x8x128xf32>
    tpu.vector_store %arg2[%c76_821, %c0_822, %c0_823], %1168 {strides = array<i32>} : memref<81x8x128xf32, #tpu.memory_space<vmem>>, vector<1x8x128xf32>,
    %c77_824 = arith.constant 77 : index
    %c0_825 = arith.constant 0 : index
    %c0_826 = arith.constant 0 : index
    %1169 = vector.load %arg1[%c77_824, %c0_825, %c0_826] : memref<81x8x128xf32, #tpu.memory_space<vmem>>, vector<1x8x128xf32>
    %1170 = vector.shape_cast %1169 : vector<1x8x128xf32> to vector<8x128xf32>
    %1171 = arith.minimumf %1170, %1152 : vector<8x128xf32>
    %cst_827 = arith.constant 0.000000e+00 : f32
    %1172 = vector.broadcast %cst_827 : f32 to vector<8x128xf32>
    %1173 = arith.maximumf %1171, %1172 : vector<8x128xf32>
    %c77_828 = arith.constant 77 : index
    %c0_829 = arith.constant 0 : index
    %c0_830 = arith.constant 0 : index
    %1174 = vector.load %arg2[%c77_828, %c0_829, %c0_830] : memref<81x8x128xf32, #tpu.memory_space<vmem>>, vector<1x8x128xf32>
    %1175 = vector.shape_cast %1174 : vector<1x8x128xf32> to vector<8x128xf32>
    %1176 = vector.shape_cast %1173 : vector<8x128xf32> to vector<1x8x128xf32>
    tpu.vector_store %arg2[%c77_828, %c0_829, %c0_830], %1176 {strides = array<i32>} : memref<81x8x128xf32, #tpu.memory_space<vmem>>, vector<1x8x128xf32>,
    %cst_831 = arith.constant 1.000000e+00 : f32
    %1177 = vector.broadcast %cst_831 : f32 to vector<8x128xf32>
    %1178 = arith.subf %1177, %938 : vector<8x128xf32>
    %1179 = arith.minimumf %944, %1178 : vector<8x128xf32>
    %cst_832 = arith.constant 1.000000e+00 : f32
    %1180 = vector.broadcast %cst_832 : f32 to vector<8x128xf32>
    %1181 = arith.subf %1180, %1179 : vector<8x128xf32>
    %c78_833 = arith.constant 78 : index
    %c0_834 = arith.constant 0 : index
    %c0_835 = arith.constant 0 : index
    %1182 = vector.load %arg1[%c78_833, %c0_834, %c0_835] : memref<81x8x128xf32, #tpu.memory_space<vmem>>, vector<1x8x128xf32>
    %1183 = vector.shape_cast %1182 : vector<1x8x128xf32> to vector<8x128xf32>
    %1184 = arith.minimumf %1183, %1181 : vector<8x128xf32>
    %cst_836 = arith.constant 0.000000e+00 : f32
    %1185 = vector.broadcast %cst_836 : f32 to vector<8x128xf32>
    %1186 = arith.maximumf %1184, %1185 : vector<8x128xf32>
    %c78_837 = arith.constant 78 : index
    %c0_838 = arith.constant 0 : index
    %c0_839 = arith.constant 0 : index
    %1187 = vector.load %arg2[%c78_837, %c0_838, %c0_839] : memref<81x8x128xf32, #tpu.memory_space<vmem>>, vector<1x8x128xf32>
    %1188 = vector.shape_cast %1187 : vector<1x8x128xf32> to vector<8x128xf32>
    %1189 = vector.shape_cast %1186 : vector<8x128xf32> to vector<1x8x128xf32>
    tpu.vector_store %arg2[%c78_837, %c0_838, %c0_839], %1189 {strides = array<i32>} : memref<81x8x128xf32, #tpu.memory_space<vmem>>, vector<1x8x128xf32>,
    %c79_840 = arith.constant 79 : index
    %c0_841 = arith.constant 0 : index
    %c0_842 = arith.constant 0 : index
    %1190 = vector.load %arg1[%c79_840, %c0_841, %c0_842] : memref<81x8x128xf32, #tpu.memory_space<vmem>>, vector<1x8x128xf32>
    %1191 = vector.shape_cast %1190 : vector<1x8x128xf32> to vector<8x128xf32>
    %1192 = arith.minimumf %1191, %1181 : vector<8x128xf32>
    %cst_843 = arith.constant 0.000000e+00 : f32
    %1193 = vector.broadcast %cst_843 : f32 to vector<8x128xf32>
    %1194 = arith.maximumf %1192, %1193 : vector<8x128xf32>
    %c79_844 = arith.constant 79 : index
    %c0_845 = arith.constant 0 : index
    %c0_846 = arith.constant 0 : index
    %1195 = vector.load %arg2[%c79_844, %c0_845, %c0_846] : memref<81x8x128xf32, #tpu.memory_space<vmem>>, vector<1x8x128xf32>
    %1196 = vector.shape_cast %1195 : vector<1x8x128xf32> to vector<8x128xf32>
    %1197 = vector.shape_cast %1194 : vector<8x128xf32> to vector<1x8x128xf32>
    tpu.vector_store %arg2[%c79_844, %c0_845, %c0_846], %1197 {strides = array<i32>} : memref<81x8x128xf32, #tpu.memory_space<vmem>>, vector<1x8x128xf32>,
    %c80_847 = arith.constant 80 : index
    %c0_848 = arith.constant 0 : index
    %c0_849 = arith.constant 0 : index
    %1198 = vector.load %arg1[%c80_847, %c0_848, %c0_849] : memref<81x8x128xf32, #tpu.memory_space<vmem>>, vector<1x8x128xf32>
    %1199 = vector.shape_cast %1198 : vector<1x8x128xf32> to vector<8x128xf32>
    %1200 = arith.minimumf %1199, %1181 : vector<8x128xf32>
    %cst_850 = arith.constant 0.000000e+00 : f32
    %1201 = vector.broadcast %cst_850 : f32 to vector<8x128xf32>
    %1202 = arith.maximumf %1200, %1201 : vector<8x128xf32>
    %c80_851 = arith.constant 80 : index
    %c0_852 = arith.constant 0 : index
    %c0_853 = arith.constant 0 : index
    %1203 = vector.load %arg2[%c80_851, %c0_852, %c0_853] : memref<81x8x128xf32, #tpu.memory_space<vmem>>, vector<1x8x128xf32>
    %1204 = vector.shape_cast %1203 : vector<1x8x128xf32> to vector<8x128xf32>
    %1205 = vector.shape_cast %1202 : vector<8x128xf32> to vector<1x8x128xf32>
    tpu.vector_store %arg2[%c80_851, %c0_852, %c0_853], %1205 {strides = array<i32>} : memref<81x8x128xf32, #tpu.memory_space<vmem>>, vector<1x8x128xf32>,
    return
  }
  func.func @transform_0(%arg0: i32) -> (i32, i32, i32) {
    %c0_i32 = arith.constant 0 : i32
    %c0_i32_0 = arith.constant 0 : i32
    %c0_i32_1 = arith.constant 0 : i32
    return %c0_i32, %arg0, %c0_i32_0 : i32, i32, i32
  }
  func.func @transform_1(%arg0: i32) -> (i32, i32, i32) {
    %c0_i32 = arith.constant 0 : i32
    %c0_i32_0 = arith.constant 0 : i32
    %c0_i32_1 = arith.constant 0 : i32
    return %c0_i32, %arg0, %c0_i32_0 : i32, i32, i32
  }
}

</mosaic_0001>

<llo_original>
// kernel: tpu_custom_call.1
$region0: #{tpu_custom_call.1}
  #allocation0 [shape = 'u32[]', space=smem, size = 0x4, offset = 0x4, fixed_abs, tag = 'smem constant byte address 0x4 - core index']
  #allocation1 [shape = 'u32[144,128]{1,0:T(1,128)}', space=vmem, size = 0x12000, scoped, tag = 'internal scratch']
  %s0 = inlined_call_operand.hbm [shape: f32[81,8,128], index: 0, kind: input, shape index: {}]
  %s1 = inlined_call_operand.hbm [shape: f32[81,8,128], index: 1, kind: output, shape index: {}]
  %s2 = sld [smem:[#allocation0]]
  $region18: #{tpu_custom_call.1} parent=0
    _
  %s4 = ssub.s32 1, %s2
  %s5 = scalar_select 0, %s4, %s2
  $region1: #{tpu_custom_call.1} parent=0
    #allocation2 [shape = 'u8[331776]{0}', space=vmem, size = 0x51000, scoped, tag = 'input window, operand 0, single buffered']
    #allocation3 [shape = 's32[1]{0}', space=sflag, size = 0x4, scoped, tag = 'scoped memory for tpu_custom_call.1']
    #allocation4 [shape = 's32[1]{0}', space=sflag, size = 0x4, scoped, tag = 'scoped memory for tpu_custom_call.1']
    #allocation5 [shape = 'u8[331776]{0}', space=vmem, size = 0x51000, scoped, tag = 'output window, operand 0, single buffered']
    %6 = vsyncpa [#allocation3], 0
    %7 = vsyncpa [#allocation4], 0
    // Predicated region
    $region2: #{tpu_custom_call.1} parent=1 // pred_check
      _
    $region3: #{tpu_custom_call.1} parent=1 // pred_check_branch
      %9 = sbr.rel (0) target = $region5
    $region4: #{tpu_custom_call.1} parent=1 // pred_region
      %s11 = ssub.s32 10368, 10368
      %12 = vsyncadd [#allocation3], %s11
      %s13 = sshll.u32 [#allocation2], 4
      %s14 = int_to_ptr.vmem [resolvable:$true] %s13
      %19 = dma.hbm_to_vmem [thread:$0]  %s0, 10368, %s14, [#allocation3], 128, 128, 8
    $region5: #{tpu_custom_call.1} parent=1 // pred_fallthru
      _
    // Predicated region
    $region6: #{tpu_custom_call.1} parent=1 // pred_check
      _
    $region7: #{tpu_custom_call.1} parent=1 // pred_check_branch
      %21 = sbr.rel (0) target = $region9
    $region8: #{tpu_custom_call.1} parent=1 // pred_region
      %22 = dma.done [#allocation3], 10368
    $region9: #{tpu_custom_call.1} parent=1 // pred_fallthru
      _
    %v23 = vld [vmem:[#allocation2] sm:$0xff]
    %s24 = scalar_lea.vmem [#allocation2], 8
    %v25 = vld [vmem:[%s24] sm:$0xff]
    %s26 = scalar_lea.vmem [#allocation2], 16
    %v27 = vld [vmem:[%s26] sm:$0xff]
    %v28 = vmax.f32 %v23, %v25
    %v29 = vmax.f32 %v28, %v27
    %s30 = scalar_lea.vmem [#allocation2], 24
    %v31 = vld [vmem:[%s30] sm:$0xff]
    %s32 = scalar_lea.vmem [#allocation2], 32
    %v33 = vld [vmem:[%s32] sm:$0xff]
    %s34 = scalar_lea.vmem [#allocation2], 40
    %v35 = vld [vmem:[%s34] sm:$0xff]
    %v36 = vmax.f32 %v31, %v33
    %v37 = vmax.f32 %v36, %v35
    %s38 = scalar_lea.vmem [#allocation2], 48
    %v39 = vld [vmem:[%s38] sm:$0xff]
    %s40 = scalar_lea.vmem [#allocation2], 56
    %v41 = vld [vmem:[%s40] sm:$0xff]
    %s42 = scalar_lea.vmem [#allocation2], 64
    %v43 = vld [vmem:[%s42] sm:$0xff]
    %v44 = vmax.f32 %v39, %v41
    %v45 = vmax.f32 %v44, %v43
    %s46 = scalar_lea.vmem [#allocation2], 72
    %v47 = vld [vmem:[%s46] sm:$0xff]
    %s48 = scalar_lea.vmem [#allocation2], 80
    %v49 = vld [vmem:[%s48] sm:$0xff]
    %s50 = scalar_lea.vmem [#allocation2], 88
    %v51 = vld [vmem:[%s50] sm:$0xff]
    %v52 = vmax.f32 %v47, %v49
    %v53 = vmax.f32 %v52, %v51
    %s54 = scalar_lea.vmem [#allocation2], 96
    %v55 = vld [vmem:[%s54] sm:$0xff]
    %s56 = scalar_lea.vmem [#allocation2], 104
    %v57 = vld [vmem:[%s56] sm:$0xff]
    %s58 = scalar_lea.vmem [#allocation2], 112
    %v59 = vld [vmem:[%s58] sm:$0xff]
    %v60 = vmax.f32 %v55, %v57
    %v61 = vmax.f32 %v60, %v59
    %s62 = scalar_lea.vmem [#allocation2], 120
    %v63 = vld [vmem:[%s62] sm:$0xff]
    %s64 = scalar_lea.vmem [#allocation2], 128
    %v65 = vld [vmem:[%s64] sm:$0xff]
    %s66 = scalar_lea.vmem [#allocation2], 136
    %v67 = vld [vmem:[%s66] sm:$0xff]
    %v68 = vmax.f32 %v63, %v65
    %v69 = vmax.f32 %v68, %v67
    %s70 = scalar_lea.vmem [#allocation2], 144
    %v71 = vld [vmem:[%s70] sm:$0xff]
    %s72 = scalar_lea.vmem [#allocation2], 152
    %v73 = vld [vmem:[%s72] sm:$0xff]
    %s74 = scalar_lea.vmem [#allocation2], 160
    %v75 = vld [vmem:[%s74] sm:$0xff]
    %v76 = vmax.f32 %v71, %v73
    %v77 = vmax.f32 %v76, %v75
    %s78 = scalar_lea.vmem [#allocation2], 168
    %v79 = vld [vmem:[%s78] sm:$0xff]
    %s80 = scalar_lea.vmem [#allocation2], 176
    %v81 = vld [vmem:[%s80] sm:$0xff]
    %s82 = scalar_lea.vmem [#allocation2], 184
    %v83 = vld [vmem:[%s82] sm:$0xff]
    %v84 = vmax.f32 %v79, %v81
    %v85 = vmax.f32 %v84, %v83
    %s86 = scalar_lea.vmem [#allocation2], 192
    %v87 = vld [vmem:[%s86] sm:$0xff]
    %s88 = scalar_lea.vmem [#allocation2], 200
    %v89 = vld [vmem:[%s88] sm:$0xff]
    %s90 = scalar_lea.vmem [#allocation2], 208
    %v91 = vld [vmem:[%s90] sm:$0xff]
    %v92 = vmax.f32 %v87, %v89
    %v93 = vmax.f32 %v92, %v91
    %v94 = vadd.f32 %v29, %v53
    %v95 = vadd.f32 %v94, %v77
    %v96 = vsub.f32 2.0, %v95
    %v97 = vmax.f32 %v96, 0.0
    %v98 = vadd.f32 %v37, %v61
    %v99 = vadd.f32 %v98, %v85
    %v100 = vsub.f32 2.0, %v99
    %v101 = vmax.f32 %v100, 0.0
    %v102 = vadd.f32 %v45, %v69
    %v103 = vadd.f32 %v102, %v93
    %v104 = vsub.f32 2.0, %v103
    %v105 = vmax.f32 %v104, 0.0
    %v106 = vmin.f32 %v29, %v97
    %v107 = vmax.f32 %v106, 0.0
    %v108 = vmin.f32 %v107, 1.0
    %v109 = vmin.f32 %v37, %v101
    %v110 = vmax.f32 %v109, 0.0
    %v111 = vmin.f32 %v110, 1.0
    %v112 = vmin.f32 %v45, %v105
    %v113 = vmax.f32 %v112, 0.0
    %v114 = vmin.f32 %v113, 1.0
    %v115 = vmin.f32 %v53, %v97
    %v116 = vmax.f32 %v115, 0.0
    %v117 = vmin.f32 %v116, 1.0
    %v118 = vmin.f32 %v61, %v101
    %v119 = vmax.f32 %v118, 0.0
    %v120 = vmin.f32 %v119, 1.0
    %v121 = vmin.f32 %v69, %v105
    %v122 = vmax.f32 %v121, 0.0
    %v123 = vmin.f32 %v122, 1.0
    %v124 = vmin.f32 %v77, %v97
    %v125 = vmax.f32 %v124, 0.0
    %v126 = vmin.f32 %v125, 1.0
    %v127 = vmin.f32 %v85, %v101
    %v128 = vmax.f32 %v127, 0.0
    %v129 = vmin.f32 %v128, 1.0
    %v130 = vmin.f32 %v93, %v105
    %v131 = vmax.f32 %v130, 0.0
    %v132 = vmin.f32 %v131, 1.0
    %v133 = vmax.f32 %v108, %v111
    %v134 = vmax.f32 %v133, %v114
    %v135 = vmax.f32 %v117, %v120
    %v136 = vmax.f32 %v135, %v123
    %v137 = vmax.f32 %v126, %v129
    %v138 = vmax.f32 %v137, %v132
    %v139 = vsub.f32 1.0, %v108
    %v140 = vmin.f32 %v134, %v139
    %v141 = vsub.f32 1.0, %v140
    %v142 = vmin.f32 %v23, %v141
    %v143 = vmax.f32 %v142, 0.0
    %144 = vst [vmem:[#allocation5] sm:$0xff] %v143
    %v145 = vld [vmem:[%s24] sm:$0xff]
    %v146 = vmin.f32 %v145, %v141
    %v147 = vmax.f32 %v146, 0.0
    %s148 = scalar_lea.vmem [#allocation5], 8
    %149 = vst [vmem:[%s148] sm:$0xff] %v147
    %v150 = vld [vmem:[%s26] sm:$0xff]
    %v151 = vmin.f32 %v150, %v141
    %v152 = vmax.f32 %v151, 0.0
    %s153 = scalar_lea.vmem [#allocation5], 16
    %154 = vst [vmem:[%s153] sm:$0xff] %v152
    %v155 = vsub.f32 1.0, %v111
    %v156 = vmin.f32 %v134, %v155
    %v157 = vsub.f32 1.0, %v156
    %v158 = vld [vmem:[%s30] sm:$0xff]
    %v159 = vmin.f32 %v158, %v157
    %v160 = vmax.f32 %v159, 0.0
    %s161 = scalar_lea.vmem [#allocation5], 24
    %162 = vst [vmem:[%s161] sm:$0xff] %v160
    %v163 = vld [vmem:[%s32] sm:$0xff]
    %v164 = vmin.f32 %v163, %v157
    %v165 = vmax.f32 %v164, 0.0
    %s166 = scalar_lea.vmem [#allocation5], 32
    %167 = vst [vmem:[%s166] sm:$0xff] %v165
    %v168 = vld [vmem:[%s34] sm:$0xff]
    %v169 = vmin.f32 %v168, %v157
    %v170 = vmax.f32 %v169, 0.0
    %s171 = scalar_lea.vmem [#allocation5], 40
    %172 = vst [vmem:[%s171] sm:$0xff] %v170
    %v173 = vsub.f32 1.0, %v114
    %v174 = vmin.f32 %v134, %v173
    %v175 = vsub.f32 1.0, %v174
    %v176 = vld [vmem:[%s38] sm:$0xff]
    %v177 = vmin.f32 %v176, %v175
    %v178 = vmax.f32 %v177, 0.0
    %s179 = scalar_lea.vmem [#allocation5], 48
    %180 = vst [vmem:[%s179] sm:$0xff] %v178
    %v181 = vld [vmem:[%s40] sm:$0xff]
    %v182 = vmin.f32 %v181, %v175
    %v183 = vmax.f32 %v182, 0.0
    %s184 = scalar_lea.vmem [#allocation5], 56
    %185 = vst [vmem:[%s184] sm:$0xff] %v183
    %v186 = vld [vmem:[%s42] sm:$0xff]
    %v187 = vmin.f32 %v186, %v175
    %v188 = vmax.f32 %v187, 0.0
    %s189 = scalar_lea.vmem [#allocation5], 64
    %190 = vst [vmem:[%s189] sm:$0xff] %v188
    %v191 = vsub.f32 1.0, %v117
    %v192 = vmin.f32 %v136, %v191
    %v193 = vsub.f32 1.0, %v192
    %v194 = vld [vmem:[%s46] sm:$0xff]
    %v195 = vmin.f32 %v194, %v193
    %v196 = vmax.f32 %v195, 0.0
    %s197 = scalar_lea.vmem [#allocation5], 72
    %198 = vst [vmem:[%s197] sm:$0xff] %v196
    %v199 = vld [vmem:[%s48] sm:$0xff]
    %v200 = vmin.f32 %v199, %v193
    %v201 = vmax.f32 %v200, 0.0
    %s202 = scalar_lea.vmem [#allocation5], 80
    %203 = vst [vmem:[%s202] sm:$0xff] %v201
    %v204 = vld [vmem:[%s50] sm:$0xff]
    %v205 = vmin.f32 %v204, %v193
    %v206 = vmax.f32 %v205, 0.0
    %s207 = scalar_lea.vmem [#allocation5], 88
    %208 = vst [vmem:[%s207] sm:$0xff] %v206
    %v209 = vsub.f32 1.0, %v120
    %v210 = vmin.f32 %v136, %v209
    %v211 = vsub.f32 1.0, %v210
    %v212 = vld [vmem:[%s54] sm:$0xff]
    %v213 = vmin.f32 %v212, %v211
    %v214 = vmax.f32 %v213, 0.0
    %s215 = scalar_lea.vmem [#allocation5], 96
    %216 = vst [vmem:[%s215] sm:$0xff] %v214
    %v217 = vld [vmem:[%s56] sm:$0xff]
    %v218 = vmin.f32 %v217, %v211
    %v219 = vmax.f32 %v218, 0.0
    %s220 = scalar_lea.vmem [#allocation5], 104
    %221 = vst [vmem:[%s220] sm:$0xff] %v219
    %v222 = vld [vmem:[%s58] sm:$0xff]
    %v223 = vmin.f32 %v222, %v211
    %v224 = vmax.f32 %v223, 0.0
    %s225 = scalar_lea.vmem [#allocation5], 112
    %226 = vst [vmem:[%s225] sm:$0xff] %v224
    %v227 = vsub.f32 1.0, %v123
    %v228 = vmin.f32 %v136, %v227
    %v229 = vsub.f32 1.0, %v228
    %v230 = vld [vmem:[%s62] sm:$0xff]
    %v231 = vmin.f32 %v230, %v229
    %v232 = vmax.f32 %v231, 0.0
    %s233 = scalar_lea.vmem [#allocation5], 120
    %234 = vst [vmem:[%s233] sm:$0xff] %v232
    %v235 = vld [vmem:[%s64] sm:$0xff]
    %v236 = vmin.f32 %v235, %v229
    %v237 = vmax.f32 %v236, 0.0
    %s238 = scalar_lea.vmem [#allocation5], 128
    %239 = vst [vmem:[%s238] sm:$0xff] %v237
    %v240 = vld [vmem:[%s66] sm:$0xff]
    %v241 = vmin.f32 %v240, %v229
    %v242 = vmax.f32 %v241, 0.0
    %s243 = scalar_lea.vmem [#allocation5], 136
    %244 = vst [vmem:[%s243] sm:$0xff] %v242
    %v245 = vsub.f32 1.0, %v126
    %v246 = vmin.f32 %v138, %v245
    %v247 = vsub.f32 1.0, %v246
    %v248 = vld [vmem:[%s70] sm:$0xff]
    %v249 = vmin.f32 %v248, %v247
    %v250 = vmax.f32 %v249, 0.0
    %s251 = scalar_lea.vmem [#allocation5], 144
    %252 = vst [vmem:[%s251] sm:$0xff] %v250
    %v253 = vld [vmem:[%s72] sm:$0xff]
    %v254 = vmin.f32 %v253, %v247
    %v255 = vmax.f32 %v254, 0.0
    %s256 = scalar_lea.vmem [#allocation5], 152
    %257 = vst [vmem:[%s256] sm:$0xff] %v255
    %v258 = vld [vmem:[%s74] sm:$0xff]
    %v259 = vmin.f32 %v258, %v247
    %v260 = vmax.f32 %v259, 0.0
    %s261 = scalar_lea.vmem [#allocation5], 160
    %262 = vst [vmem:[%s261] sm:$0xff] %v260
    %v263 = vsub.f32 1.0, %v129
    %v264 = vmin.f32 %v138, %v263
    %v265 = vsub.f32 1.0, %v264
    %v266 = vld [vmem:[%s78] sm:$0xff]
    %v267 = vmin.f32 %v266, %v265
    %v268 = vmax.f32 %v267, 0.0
    %s269 = scalar_lea.vmem [#allocation5], 168
    %270 = vst [vmem:[%s269] sm:$0xff] %v268
    %v271 = vld [vmem:[%s80] sm:$0xff]
    %v272 = vmin.f32 %v271, %v265
    %v273 = vmax.f32 %v272, 0.0
    %s274 = scalar_lea.vmem [#allocation5], 176
    %275 = vst [vmem:[%s274] sm:$0xff] %v273
    %v276 = vld [vmem:[%s82] sm:$0xff]
    %v277 = vmin.f32 %v276, %v265
    %v278 = vmax.f32 %v277, 0.0
    %s279 = scalar_lea.vmem [#allocation5], 184
    %280 = vst [vmem:[%s279] sm:$0xff] %v278
    %v281 = vsub.f32 1.0, %v132
    %v282 = vmin.f32 %v138, %v281
    %v283 = vsub.f32 1.0, %v282
    %v284 = vld [vmem:[%s86] sm:$0xff]
    %v285 = vmin.f32 %v284, %v283
    %v286 = vmax.f32 %v285, 0.0
    %s287 = scalar_lea.vmem [#allocation5], 192
    %288 = vst [vmem:[%s287] sm:$0xff] %v286
    %v289 = vld [vmem:[%s88] sm:$0xff]
    %v290 = vmin.f32 %v289, %v283
    %v291 = vmax.f32 %v290, 0.0
    %s292 = scalar_lea.vmem [#allocation5], 200
    %293 = vst [vmem:[%s292] sm:$0xff] %v291
    %v294 = vld [vmem:[%s90] sm:$0xff]
    %v295 = vmin.f32 %v294, %v283
    %v296 = vmax.f32 %v295, 0.0
    %s297 = scalar_lea.vmem [#allocation5], 208
    %298 = vst [vmem:[%s297] sm:$0xff] %v296
    %s299 = scalar_lea.vmem [#allocation2], 216
    %v300 = vld [vmem:[%s299] sm:$0xff]
    %s301 = scalar_lea.vmem [#allocation2], 224
    %v302 = vld [vmem:[%s301] sm:$0xff]
    %s303 = scalar_lea.vmem [#allocation2], 232
    %v304 = vld [vmem:[%s303] sm:$0xff]
    %v305 = vmax.f32 %v300, %v302
    %v306 = vmax.f32 %v305, %v304
    %s307 = scalar_lea.vmem [#allocation2], 240
    %v308 = vld [vmem:[%s307] sm:$0xff]
    %s309 = scalar_lea.vmem [#allocation2], 248
    %v310 = vld [vmem:[%s309] sm:$0xff]
    %s311 = scalar_lea.vmem [#allocation2], 256
    %v312 = vld [vmem:[%s311] sm:$0xff]
    %v313 = vmax.f32 %v308, %v310
    %v314 = vmax.f32 %v313, %v312
    %s315 = scalar_lea.vmem [#allocation2], 264
    %v316 = vld [vmem:[%s315] sm:$0xff]
    %s317 = scalar_lea.vmem [#allocation2], 272
    %v318 = vld [vmem:[%s317] sm:$0xff]
    %s319 = scalar_lea.vmem [#allocation2], 280
    %v320 = vld [vmem:[%s319] sm:$0xff]
    %v321 = vmax.f32 %v316, %v318
    %v322 = vmax.f32 %v321, %v320
    %s323 = scalar_lea.vmem [#allocation2], 288
    %v324 = vld [vmem:[%s323] sm:$0xff]
    %s325 = scalar_lea.vmem [#allocation2], 296
    %v326 = vld [vmem:[%s325] sm:$0xff]
    %s327 = scalar_lea.vmem [#allocation2], 304
    %v328 = vld [vmem:[%s327] sm:$0xff]
    %v329 = vmax.f32 %v324, %v326
    %v330 = vmax.f32 %v329, %v328
    %s331 = scalar_lea.vmem [#allocation2], 312
    %v332 = vld [vmem:[%s331] sm:$0xff]
    %s333 = scalar_lea.vmem [#allocation2], 320
    %v334 = vld [vmem:[%s333] sm:$0xff]
    %s335 = scalar_lea.vmem [#allocation2], 328
    %v336 = vld [vmem:[%s335] sm:$0xff]
    %v337 = vmax.f32 %v332, %v334
    %v338 = vmax.f32 %v337, %v336
    %s339 = scalar_lea.vmem [#allocation2], 336
    %v340 = vld [vmem:[%s339] sm:$0xff]
    %s341 = scalar_lea.vmem [#allocation2], 344
    %v342 = vld [vmem:[%s341] sm:$0xff]
    %s343 = scalar_lea.vmem [#allocation2], 352
    %v344 = vld [vmem:[%s343] sm:$0xff]
    %v345 = vmax.f32 %v340, %v342
    %v346 = vmax.f32 %v345, %v344
    %s347 = scalar_lea.vmem [#allocation2], 360
    %v348 = vld [vmem:[%s347] sm:$0xff]
    %s349 = scalar_lea.vmem [#allocation2], 368
    %v350 = vld [vmem:[%s349] sm:$0xff]
    %s351 = scalar_lea.vmem [#allocation2], 376
    %v352 = vld [vmem:[%s351] sm:$0xff]
    %v353 = vmax.f32 %v348, %v350
    %v354 = vmax.f32 %v353, %v352
    %s355 = scalar_lea.vmem [#allocation2], 384
    %v356 = vld [vmem:[%s355] sm:$0xff]
    %s357 = scalar_lea.vmem [#allocation2], 392
    %v358 = vld [vmem:[%s357] sm:$0xff]
    %s359 = scalar_lea.vmem [#allocation2], 400
    %v360 = vld [vmem:[%s359] sm:$0xff]
    %v361 = vmax.f32 %v356, %v358
    %v362 = vmax.f32 %v361, %v360
    %s363 = scalar_lea.vmem [#allocation2], 408
    %v364 = vld [vmem:[%s363] sm:$0xff]
    %s365 = scalar_lea.vmem [#allocation2], 416
    %v366 = vld [vmem:[%s365] sm:$0xff]
    %s367 = scalar_lea.vmem [#allocation2], 424
    %v368 = vld [vmem:[%s367] sm:$0xff]
    %v369 = vmax.f32 %v364, %v366
    %v370 = vmax.f32 %v369, %v368
    %v371 = vadd.f32 %v306, %v330
    %v372 = vadd.f32 %v371, %v354
    %v373 = vsub.f32 2.0, %v372
    %v374 = vmax.f32 %v373, 0.0
    %v375 = vadd.f32 %v314, %v338
    %v376 = vadd.f32 %v375, %v362
    %v377 = vsub.f32 2.0, %v376
    %v378 = vmax.f32 %v377, 0.0
    %v379 = vadd.f32 %v322, %v346
    %v380 = vadd.f32 %v379, %v370
    %v381 = vsub.f32 2.0, %v380
    %v382 = vmax.f32 %v381, 0.0
    %v383 = vmin.f32 %v306, %v374
    %v384 = vmax.f32 %v383, 0.0
    %v385 = vmin.f32 %v384, 1.0
    %v386 = vmin.f32 %v314, %v378
    %v387 = vmax.f32 %v386, 0.0
    %v388 = vmin.f32 %v387, 1.0
    %v389 = vmin.f32 %v322, %v382
    %v390 = vmax.f32 %v389, 0.0
    %v391 = vmin.f32 %v390, 1.0
    %v392 = vmin.f32 %v330, %v374
    %v393 = vmax.f32 %v392, 0.0
    %v394 = vmin.f32 %v393, 1.0
    %v395 = vmin.f32 %v338, %v378
    %v396 = vmax.f32 %v395, 0.0
    %v397 = vmin.f32 %v396, 1.0
    %v398 = vmin.f32 %v346, %v382
    %v399 = vmax.f32 %v398, 0.0
    %v400 = vmin.f32 %v399, 1.0
    %v401 = vmin.f32 %v354, %v374
    %v402 = vmax.f32 %v401, 0.0
    %v403 = vmin.f32 %v402, 1.0
    %v404 = vmin.f32 %v362, %v378
    %v405 = vmax.f32 %v404, 0.0
    %v406 = vmin.f32 %v405, 1.0
    %v407 = vmin.f32 %v370, %v382
    %v408 = vmax.f32 %v407, 0.0
    %v409 = vmin.f32 %v408, 1.0
    %v410 = vmax.f32 %v385, %v388
    %v411 = vmax.f32 %v410, %v391
    %v412 = vmax.f32 %v394, %v397
    %v413 = vmax.f32 %v412, %v400
    %v414 = vmax.f32 %v403, %v406
    %v415 = vmax.f32 %v414, %v409
    %v416 = vsub.f32 1.0, %v385
    %v417 = vmin.f32 %v411, %v416
    %v418 = vsub.f32 1.0, %v417
    %v419 = vmin.f32 %v300, %v418
    %v420 = vmax.f32 %v419, 0.0
    %s421 = scalar_lea.vmem [#allocation5], 216
    %422 = vst [vmem:[%s421] sm:$0xff] %v420
    %v423 = vld [vmem:[%s301] sm:$0xff]
    %v424 = vmin.f32 %v423, %v418
    %v425 = vmax.f32 %v424, 0.0
    %s426 = scalar_lea.vmem [#allocation5], 224
    %427 = vst [vmem:[%s426] sm:$0xff] %v425
    %v428 = vld [vmem:[%s303] sm:$0xff]
    %v429 = vmin.f32 %v428, %v418
    %v430 = vmax.f32 %v429, 0.0
    %s431 = scalar_lea.vmem [#allocation5], 232
    %432 = vst [vmem:[%s431] sm:$0xff] %v430
    %v433 = vsub.f32 1.0, %v388
    %v434 = vmin.f32 %v411, %v433
    %v435 = vsub.f32 1.0, %v434
    %v436 = vld [vmem:[%s307] sm:$0xff]
    %v437 = vmin.f32 %v436, %v435
    %v438 = vmax.f32 %v437, 0.0
    %s439 = scalar_lea.vmem [#allocation5], 240
    %440 = vst [vmem:[%s439] sm:$0xff] %v438
    %v441 = vld [vmem:[%s309] sm:$0xff]
    %v442 = vmin.f32 %v441, %v435
    %v443 = vmax.f32 %v442, 0.0
    %s444 = scalar_lea.vmem [#allocation5], 248
    %445 = vst [vmem:[%s444] sm:$0xff] %v443
    %v446 = vld [vmem:[%s311] sm:$0xff]
    %v447 = vmin.f32 %v446, %v435
    %v448 = vmax.f32 %v447, 0.0
    %s449 = scalar_lea.vmem [#allocation5], 256
    %450 = vst [vmem:[%s449] sm:$0xff] %v448
    %v451 = vsub.f32 1.0, %v391
    %v452 = vmin.f32 %v411, %v451
    %v453 = vsub.f32 1.0, %v452
    %v454 = vld [vmem:[%s315] sm:$0xff]
    %v455 = vmin.f32 %v454, %v453
    %v456 = vmax.f32 %v455, 0.0
    %s457 = scalar_lea.vmem [#allocation5], 264
    %458 = vst [vmem:[%s457] sm:$0xff] %v456
    %v459 = vld [vmem:[%s317] sm:$0xff]
    %v460 = vmin.f32 %v459, %v453
    %v461 = vmax.f32 %v460, 0.0
    %s462 = scalar_lea.vmem [#allocation5], 272
    %463 = vst [vmem:[%s462] sm:$0xff] %v461
    %v464 = vld [vmem:[%s319] sm:$0xff]
    %v465 = vmin.f32 %v464, %v453
    %v466 = vmax.f32 %v465, 0.0
    %s467 = scalar_lea.vmem [#allocation5], 280
    %468 = vst [vmem:[%s467] sm:$0xff] %v466
    %v469 = vsub.f32 1.0, %v394
    %v470 = vmin.f32 %v413, %v469
    %v471 = vsub.f32 1.0, %v470
    %v472 = vld [vmem:[%s323] sm:$0xff]
    %v473 = vmin.f32 %v472, %v471
    %v474 = vmax.f32 %v473, 0.0
    %s475 = scalar_lea.vmem [#allocation5], 288
    %476 = vst [vmem:[%s475] sm:$0xff] %v474
    %v477 = vld [vmem:[%s325] sm:$0xff]
    %v478 = vmin.f32 %v477, %v471
    %v479 = vmax.f32 %v478, 0.0
    %s480 = scalar_lea.vmem [#allocation5], 296
    %481 = vst [vmem:[%s480] sm:$0xff] %v479
    %v482 = vld [vmem:[%s327] sm:$0xff]
    %v483 = vmin.f32 %v482, %v471
    %v484 = vmax.f32 %v483, 0.0
    %s485 = scalar_lea.vmem [#allocation5], 304
    %486 = vst [vmem:[%s485] sm:$0xff] %v484
    %v487 = vsub.f32 1.0, %v397
    %v488 = vmin.f32 %v413, %v487
    %v489 = vsub.f32 1.0, %v488
    %v490 = vld [vmem:[%s331] sm:$0xff]
    %v491 = vmin.f32 %v490, %v489
    %v492 = vmax.f32 %v491, 0.0
    %s493 = scalar_lea.vmem [#allocation5], 312
    %494 = vst [vmem:[%s493] sm:$0xff] %v492
    %v495 = vld [vmem:[%s333] sm:$0xff]
    %v496 = vmin.f32 %v495, %v489
    %v497 = vmax.f32 %v496, 0.0
    %s498 = scalar_lea.vmem [#allocation5], 320
    %499 = vst [vmem:[%s498] sm:$0xff] %v497
    %v500 = vld [vmem:[%s335] sm:$0xff]
    %v501 = vmin.f32 %v500, %v489
    %v502 = vmax.f32 %v501, 0.0
    %s503 = scalar_lea.vmem [#allocation5], 328
    %504 = vst [vmem:[%s503] sm:$0xff] %v502
    %v505 = vsub.f32 1.0, %v400
    %v506 = vmin.f32 %v413, %v505
    %v507 = vsub.f32 1.0, %v506
    %v508 = vld [vmem:[%s339] sm:$0xff]
    %v509 = vmin.f32 %v508, %v507
    %v510 = vmax.f32 %v509, 0.0
    %s511 = scalar_lea.vmem [#allocation5], 336
    %512 = vst [vmem:[%s511] sm:$0xff] %v510
    %v513 = vld [vmem:[%s341] sm:$0xff]
    %v514 = vmin.f32 %v513, %v507
    %v515 = vmax.f32 %v514, 0.0
    %s516 = scalar_lea.vmem [#allocation5], 344
    %517 = vst [vmem:[%s516] sm:$0xff] %v515
    %v518 = vld [vmem:[%s343] sm:$0xff]
    %v519 = vmin.f32 %v518, %v507
    %v520 = vmax.f32 %v519, 0.0
    %s521 = scalar_lea.vmem [#allocation5], 352
    %522 = vst [vmem:[%s521] sm:$0xff] %v520
    %v523 = vsub.f32 1.0, %v403
    %v524 = vmin.f32 %v415, %v523
    %v525 = vsub.f32 1.0, %v524
    %v526 = vld [vmem:[%s347] sm:$0xff]
    %v527 = vmin.f32 %v526, %v525
    %v528 = vmax.f32 %v527, 0.0
    %s529 = scalar_lea.vmem [#allocation5], 360
    %530 = vst [vmem:[%s529] sm:$0xff] %v528
    %v531 = vld [vmem:[%s349] sm:$0xff]
    %v532 = vmin.f32 %v531, %v525
    %v533 = vmax.f32 %v532, 0.0
    %s534 = scalar_lea.vmem [#allocation5], 368
    %535 = vst [vmem:[%s534] sm:$0xff] %v533
    %v536 = vld [vmem:[%s351] sm:$0xff]
    %v537 = vmin.f32 %v536, %v525
    %v538 = vmax.f32 %v537, 0.0
    %s539 = scalar_lea.vmem [#allocation5], 376
    %540 = vst [vmem:[%s539] sm:$0xff] %v538
    %v541 = vsub.f32 1.0, %v406
    %v542 = vmin.f32 %v415, %v541
    %v543 = vsub.f32 1.0, %v542
    %v544 = vld [vmem:[%s355] sm:$0xff]
    %v545 = vmin.f32 %v544, %v543
    %v546 = vmax.f32 %v545, 0.0
    %s547 = scalar_lea.vmem [#allocation5], 384
    %548 = vst [vmem:[%s547] sm:$0xff] %v546
    %v549 = vld [vmem:[%s357] sm:$0xff]
    %v550 = vmin.f32 %v549, %v543
    %v551 = vmax.f32 %v550, 0.0
    %s552 = scalar_lea.vmem [#allocation5], 392
    %553 = vst [vmem:[%s552] sm:$0xff] %v551
    %v554 = vld [vmem:[%s359] sm:$0xff]
    %v555 = vmin.f32 %v554, %v543
    %v556 = vmax.f32 %v555, 0.0
    %s557 = scalar_lea.vmem [#allocation5], 400
    %558 = vst [vmem:[%s557] sm:$0xff] %v556
    %v559 = vsub.f32 1.0, %v409
    %v560 = vmin.f32 %v415, %v559
    %v561 = vsub.f32 1.0, %v560
    %v562 = vld [vmem:[%s363] sm:$0xff]
    %v563 = vmin.f32 %v562, %v561
    %v564 = vmax.f32 %v563, 0.0
    %s565 = scalar_lea.vmem [#allocation5], 408
    %566 = vst [vmem:[%s565] sm:$0xff] %v564
    %v567 = vld [vmem:[%s365] sm:$0xff]
    %v568 = vmin.f32 %v567, %v561
    %v569 = vmax.f32 %v568, 0.0
    %s570 = scalar_lea.vmem [#allocation5], 416
    %571 = vst [vmem:[%s570] sm:$0xff] %v569
    %v572 = vld [vmem:[%s367] sm:$0xff]
    %v573 = vmin.f32 %v572, %v561
    %v574 = vmax.f32 %v573, 0.0
    %s575 = scalar_lea.vmem [#allocation5], 424
    %576 = vst [vmem:[%s575] sm:$0xff] %v574
    %s577 = scalar_lea.vmem [#allocation2], 432
    %v578 = vld [vmem:[%s577] sm:$0xff]
    %s579 = scalar_lea.vmem [#allocation2], 440
    %v580 = vld [vmem:[%s579] sm:$0xff]
    %s581 = scalar_lea.vmem [#allocation2], 448
    %v582 = vld [vmem:[%s581] sm:$0xff]
    %v583 = vmax.f32 %v578, %v580
    %v584 = vmax.f32 %v583, %v582
    %s585 = scalar_lea.vmem [#allocation2], 456
    %v586 = vld [vmem:[%s585] sm:$0xff]
    %s587 = scalar_lea.vmem [#allocation2], 464
    %v588 = vld [vmem:[%s587] sm:$0xff]
    %s589 = scalar_lea.vmem [#allocation2], 472
    %v590 = vld [vmem:[%s589] sm:$0xff]
    %v591 = vmax.f32 %v586, %v588
    %v592 = vmax.f32 %v591, %v590
    %s593 = scalar_lea.vmem [#allocation2], 480
    %v594 = vld [vmem:[%s593] sm:$0xff]
    %s595 = scalar_lea.vmem [#allocation2], 488
    %v596 = vld [vmem:[%s595] sm:$0xff]
    %s597 = scalar_lea.vmem [#allocation2], 496
    %v598 = vld [vmem:[%s597] sm:$0xff]
    %v599 = vmax.f32 %v594, %v596
    %v600 = vmax.f32 %v599, %v598
    %s601 = scalar_lea.vmem [#allocation2], 504
    %v602 = vld [vmem:[%s601] sm:$0xff]
    %s603 = scalar_lea.vmem [#allocation2], 512
    %v604 = vld [vmem:[%s603] sm:$0xff]
    %s605 = scalar_lea.vmem [#allocation2], 520
    %v606 = vld [vmem:[%s605] sm:$0xff]
    %v607 = vmax.f32 %v602, %v604
    %v608 = vmax.f32 %v607, %v606
    %s609 = scalar_lea.vmem [#allocation2], 528
    %v610 = vld [vmem:[%s609] sm:$0xff]
    %s611 = scalar_lea.vmem [#allocation2], 536
    %v612 = vld [vmem:[%s611] sm:$0xff]
    %s613 = scalar_lea.vmem [#allocation2], 544
    %v614 = vld [vmem:[%s613] sm:$0xff]
    %v615 = vmax.f32 %v610, %v612
    %v616 = vmax.f32 %v615, %v614
    %s617 = scalar_lea.vmem [#allocation2], 552
    %v618 = vld [vmem:[%s617] sm:$0xff]
    %s619 = scalar_lea.vmem [#allocation2], 560
    %v620 = vld [vmem:[%s619] sm:$0xff]
    %s621 = scalar_lea.vmem [#allocation2], 568
    %v622 = vld [vmem:[%s621] sm:$0xff]
    %v623 = vmax.f32 %v618, %v620
    %v624 = vmax.f32 %v623, %v622
    %s625 = scalar_lea.vmem [#allocation2], 576
    %v626 = vld [vmem:[%s625] sm:$0xff]
    %s627 = scalar_lea.vmem [#allocation2], 584
    %v628 = vld [vmem:[%s627] sm:$0xff]
    %s629 = scalar_lea.vmem [#allocation2], 592
    %v630 = vld [vmem:[%s629] sm:$0xff]
    %v631 = vmax.f32 %v626, %v628
    %v632 = vmax.f32 %v631, %v630
    %s633 = scalar_lea.vmem [#allocation2], 600
    %v634 = vld [vmem:[%s633] sm:$0xff]
    %s635 = scalar_lea.vmem [#allocation2], 608
    %v636 = vld [vmem:[%s635] sm:$0xff]
    %s637 = scalar_lea.vmem [#allocation2], 616
    %v638 = vld [vmem:[%s637] sm:$0xff]
    %v639 = vmax.f32 %v634, %v636
    %v640 = vmax.f32 %v639, %v638
    %s641 = scalar_lea.vmem [#allocation2], 624
    %v642 = vld [vmem:[%s641] sm:$0xff]
    %s643 = scalar_lea.vmem [#allocation2], 632
    %v644 = vld [vmem:[%s643] sm:$0xff]
    %s645 = scalar_lea.vmem [#allocation2], 640
    %v646 = vld [vmem:[%s645] sm:$0xff]
    %v647 = vmax.f32 %v642, %v644
    %v648 = vmax.f32 %v647, %v646
    %v649 = vadd.f32 %v584, %v608
    %v650 = vadd.f32 %v649, %v632
    %v651 = vsub.f32 2.0, %v650
    %v652 = vmax.f32 %v651, 0.0
    %v653 = vadd.f32 %v592, %v616
    %v654 = vadd.f32 %v653, %v640
    %v655 = vsub.f32 2.0, %v654
    %v656 = vmax.f32 %v655, 0.0
    %v657 = vadd.f32 %v600, %v624
    %v658 = vadd.f32 %v657, %v648
    %v659 = vsub.f32 2.0, %v658
    %v660 = vmax.f32 %v659, 0.0
    %v661 = vmin.f32 %v584, %v652
    %v662 = vmax.f32 %v661, 0.0
    %v663 = vmin.f32 %v662, 1.0
    %v664 = vmin.f32 %v592, %v656
    %v665 = vmax.f32 %v664, 0.0
    %v666 = vmin.f32 %v665, 1.0
    %v667 = vmin.f32 %v600, %v660
    %v668 = vmax.f32 %v667, 0.0
    %v669 = vmin.f32 %v668, 1.0
    %v670 = vmin.f32 %v608, %v652
    %v671 = vmax.f32 %v670, 0.0
    %v672 = vmin.f32 %v671, 1.0
    %v673 = vmin.f32 %v616, %v656
    %v674 = vmax.f32 %v673, 0.0
    %v675 = vmin.f32 %v674, 1.0
    %v676 = vmin.f32 %v624, %v660
    %v677 = vmax.f32 %v676, 0.0
    %v678 = vmin.f32 %v677, 1.0
    %v679 = vmin.f32 %v632, %v652
    %v680 = vmax.f32 %v679, 0.0
    %v681 = vmin.f32 %v680, 1.0
    %v682 = vmin.f32 %v640, %v656
    %v683 = vmax.f32 %v682, 0.0
    %v684 = vmin.f32 %v683, 1.0
    %v685 = vmin.f32 %v648, %v660
    %v686 = vmax.f32 %v685, 0.0
    %v687 = vmin.f32 %v686, 1.0
    %v688 = vmax.f32 %v663, %v666
    %v689 = vmax.f32 %v688, %v669
    %v690 = vmax.f32 %v672, %v675
    %v691 = vmax.f32 %v690, %v678
    %v692 = vmax.f32 %v681, %v684
    %v693 = vmax.f32 %v692, %v687
    %v694 = vsub.f32 1.0, %v663
    %v695 = vmin.f32 %v689, %v694
    %v696 = vsub.f32 1.0, %v695
    %v697 = vmin.f32 %v578, %v696
    %v698 = vmax.f32 %v697, 0.0
    %s699 = scalar_lea.vmem [#allocation5], 432
    %700 = vst [vmem:[%s699] sm:$0xff] %v698
    %v701 = vld [vmem:[%s579] sm:$0xff]
    %v702 = vmin.f32 %v701, %v696
    %v703 = vmax.f32 %v702, 0.0
    %s704 = scalar_lea.vmem [#allocation5], 440
    %705 = vst [vmem:[%s704] sm:$0xff] %v703
    %v706 = vld [vmem:[%s581] sm:$0xff]
    %v707 = vmin.f32 %v706, %v696
    %v708 = vmax.f32 %v707, 0.0
    %s709 = scalar_lea.vmem [#allocation5], 448
    %710 = vst [vmem:[%s709] sm:$0xff] %v708
    %v711 = vsub.f32 1.0, %v666
    %v712 = vmin.f32 %v689, %v711
    %v713 = vsub.f32 1.0, %v712
    %v714 = vld [vmem:[%s585] sm:$0xff]
    %v715 = vmin.f32 %v714, %v713
    %v716 = vmax.f32 %v715, 0.0
    %s717 = scalar_lea.vmem [#allocation5], 456
    %718 = vst [vmem:[%s717] sm:$0xff] %v716
    %v719 = vld [vmem:[%s587] sm:$0xff]
    %v720 = vmin.f32 %v719, %v713
    %v721 = vmax.f32 %v720, 0.0
    %s722 = scalar_lea.vmem [#allocation5], 464
    %723 = vst [vmem:[%s722] sm:$0xff] %v721
    %v724 = vld [vmem:[%s589] sm:$0xff]
    %v725 = vmin.f32 %v724, %v713
    %v726 = vmax.f32 %v725, 0.0
    %s727 = scalar_lea.vmem [#allocation5], 472
    %728 = vst [vmem:[%s727] sm:$0xff] %v726
    %v729 = vsub.f32 1.0, %v669
    %v730 = vmin.f32 %v689, %v729
    %v731 = vsub.f32 1.0, %v730
    %v732 = vld [vmem:[%s593] sm:$0xff]
    %v733 = vmin.f32 %v732, %v731
    %v734 = vmax.f32 %v733, 0.0
    %s735 = scalar_lea.vmem [#allocation5], 480
    %736 = vst [vmem:[%s735] sm:$0xff] %v734
    %v737 = vld [vmem:[%s595] sm:$0xff]
    %v738 = vmin.f32 %v737, %v731
    %v739 = vmax.f32 %v738, 0.0
    %s740 = scalar_lea.vmem [#allocation5], 488
    %741 = vst [vmem:[%s740] sm:$0xff] %v739
    %v742 = vld [vmem:[%s597] sm:$0xff]
    %v743 = vmin.f32 %v742, %v731
    %v744 = vmax.f32 %v743, 0.0
    %s745 = scalar_lea.vmem [#allocation5], 496
    %746 = vst [vmem:[%s745] sm:$0xff] %v744
    %v747 = vsub.f32 1.0, %v672
    %v748 = vmin.f32 %v691, %v747
    %v749 = vsub.f32 1.0, %v748
    %v750 = vld [vmem:[%s601] sm:$0xff]
    %v751 = vmin.f32 %v750, %v749
    %v752 = vmax.f32 %v751, 0.0
    %s753 = scalar_lea.vmem [#allocation5], 504
    %754 = vst [vmem:[%s753] sm:$0xff] %v752
    %v755 = vld [vmem:[%s603] sm:$0xff]
    %v756 = vmin.f32 %v755, %v749
    %v757 = vmax.f32 %v756, 0.0
    %s758 = scalar_lea.vmem [#allocation5], 512
    %759 = vst [vmem:[%s758] sm:$0xff] %v757
    %v760 = vld [vmem:[%s605] sm:$0xff]
    %v761 = vmin.f32 %v760, %v749
    %v762 = vmax.f32 %v761, 0.0
    %s763 = scalar_lea.vmem [#allocation5], 520
    %764 = vst [vmem:[%s763] sm:$0xff] %v762
    %v765 = vsub.f32 1.0, %v675
    %v766 = vmin.f32 %v691, %v765
    %v767 = vsub.f32 1.0, %v766
    %v768 = vld [vmem:[%s609] sm:$0xff]
    %v769 = vmin.f32 %v768, %v767
    %v770 = vmax.f32 %v769, 0.0
    %s771 = scalar_lea.vmem [#allocation5], 528
    %772 = vst [vmem:[%s771] sm:$0xff] %v770
    %v773 = vld [vmem:[%s611] sm:$0xff]
    %v774 = vmin.f32 %v773, %v767
    %v775 = vmax.f32 %v774, 0.0
    %s776 = scalar_lea.vmem [#allocation5], 536
    %777 = vst [vmem:[%s776] sm:$0xff] %v775
    %v778 = vld [vmem:[%s613] sm:$0xff]
    %v779 = vmin.f32 %v778, %v767
    %v780 = vmax.f32 %v779, 0.0
    %s781 = scalar_lea.vmem [#allocation5], 544
    %782 = vst [vmem:[%s781] sm:$0xff] %v780
    %v783 = vsub.f32 1.0, %v678
    %v784 = vmin.f32 %v691, %v783
    %v785 = vsub.f32 1.0, %v784
    %v786 = vld [vmem:[%s617] sm:$0xff]
    %v787 = vmin.f32 %v786, %v785
    %v788 = vmax.f32 %v787, 0.0
    %s789 = scalar_lea.vmem [#allocation5], 552
    %790 = vst [vmem:[%s789] sm:$0xff] %v788
    %v791 = vld [vmem:[%s619] sm:$0xff]
    %v792 = vmin.f32 %v791, %v785
    %v793 = vmax.f32 %v792, 0.0
    %s794 = scalar_lea.vmem [#allocation5], 560
    %795 = vst [vmem:[%s794] sm:$0xff] %v793
    %v796 = vld [vmem:[%s621] sm:$0xff]
    %v797 = vmin.f32 %v796, %v785
    %v798 = vmax.f32 %v797, 0.0
    %s799 = scalar_lea.vmem [#allocation5], 568
    %800 = vst [vmem:[%s799] sm:$0xff] %v798
    %v801 = vsub.f32 1.0, %v681
    %v802 = vmin.f32 %v693, %v801
    %v803 = vsub.f32 1.0, %v802
    %v804 = vld [vmem:[%s625] sm:$0xff]
    %v805 = vmin.f32 %v804, %v803
    %v806 = vmax.f32 %v805, 0.0
    %s807 = scalar_lea.vmem [#allocation5], 576
    %808 = vst [vmem:[%s807] sm:$0xff] %v806
    %v809 = vld [vmem:[%s627] sm:$0xff]
    %v810 = vmin.f32 %v809, %v803
    %v811 = vmax.f32 %v810, 0.0
    %s812 = scalar_lea.vmem [#allocation5], 584
    %813 = vst [vmem:[%s812] sm:$0xff] %v811
    %v814 = vld [vmem:[%s629] sm:$0xff]
    %v815 = vmin.f32 %v814, %v803
    %v816 = vmax.f32 %v815, 0.0
    %s817 = scalar_lea.vmem [#allocation5], 592
    %818 = vst [vmem:[%s817] sm:$0xff] %v816
    %v819 = vsub.f32 1.0, %v684
    %v820 = vmin.f32 %v693, %v819
    %v821 = vsub.f32 1.0, %v820
    %v822 = vld [vmem:[%s633] sm:$0xff]
    %v823 = vmin.f32 %v822, %v821
    %v824 = vmax.f32 %v823, 0.0
    %s825 = scalar_lea.vmem [#allocation5], 600
    %826 = vst [vmem:[%s825] sm:$0xff] %v824
    %v827 = vld [vmem:[%s635] sm:$0xff]
    %v828 = vmin.f32 %v827, %v821
    %v829 = vmax.f32 %v828, 0.0
    %s830 = scalar_lea.vmem [#allocation5], 608
    %831 = vst [vmem:[%s830] sm:$0xff] %v829
    %v832 = vld [vmem:[%s637] sm:$0xff]
    %v833 = vmin.f32 %v832, %v821
    %v834 = vmax.f32 %v833, 0.0
    %s835 = scalar_lea.vmem [#allocation5], 616
    %836 = vst [vmem:[%s835] sm:$0xff] %v834
    %v837 = vsub.f32 1.0, %v687
    %v838 = vmin.f32 %v693, %v837
    %v839 = vsub.f32 1.0, %v838
    %v840 = vld [vmem:[%s641] sm:$0xff]
    %v841 = vmin.f32 %v840, %v839
    %v842 = vmax.f32 %v841, 0.0
    %s843 = scalar_lea.vmem [#allocation5], 624
    %844 = vst [vmem:[%s843] sm:$0xff] %v842
    %v845 = vld [vmem:[%s643] sm:$0xff]
    %v846 = vmin.f32 %v845, %v839
    %v847 = vmax.f32 %v846, 0.0
    %s848 = scalar_lea.vmem [#allocation5], 632
    %849 = vst [vmem:[%s848] sm:$0xff] %v847
    %v850 = vld [vmem:[%s645] sm:$0xff]
    %v851 = vmin.f32 %v850, %v839
    %v852 = vmax.f32 %v851, 0.0
    %s853 = scalar_lea.vmem [#allocation5], 640
    %854 = vst [vmem:[%s853] sm:$0xff] %v852
    // Predicated region
    $region10: #{tpu_custom_call.1} parent=1 // pred_check
      _
    $region11: #{tpu_custom_call.1} parent=1 // pred_check_branch
      %856 = sbr.rel (0) target = $region13
    $region12: #{tpu_custom_call.1} parent=1 // pred_region
      %s858 = ssub.s32 10368, 10368
      %859 = vsyncadd [#allocation4], %s858
      %s860 = sshll.u32 [#allocation5], 4
      %s861 = int_to_ptr.vmem [resolvable:$true] %s860
      %866 = dma.vmem_to_hbm [thread:$0]  %s861, 10368, %s1, [#allocation4], 128, 128, 8
    $region13: #{tpu_custom_call.1} parent=1 // pred_fallthru
      _
    // Predicated region
    $region14: #{tpu_custom_call.1} parent=1 // pred_check
      _
    $region15: #{tpu_custom_call.1} parent=1 // pred_check_branch
      %868 = sbr.rel (0) target = $region17
    $region16: #{tpu_custom_call.1} parent=1 // pred_region
      %869 = dma.done [#allocation4], 10368
    $region17: #{tpu_custom_call.1} parent=1 // pred_fallthru
      _
    %870 = vsyncpa [#allocation3], 1
    %871 = vsyncpa [#allocation4], 1

</llo_original>
